<compile_context>
chip_gen: v7x
topology: tpu7x:2x2x1
jax: 0.10.0
libtpu: 0.0.40
codegen_flags: <defaults>
</compile_context>

<pallas_src>
import functools

import jax
import jax.numpy as jnp
import numpy as np
from jax.experimental import pallas as pl
from jax.experimental.pallas import tpu as pltpu


def _dw_conv(v, w, b, tpos):
    """Depthwise 'same' conv along the lane (T) axis.

    v: (C', T) activations, w: (C', K) per-channel taps (K odd), b: (C', 1),
    tpos: (1, T) int32 lane-position iota (hoisted by the caller).
    out[c, t] = b[c] + sum_j w[c, j] * v[c, t + j - K//2]   (zero padding)

    Each tap is one static lane-roll (pltpu.roll, np.roll semantics:
    out[i] = in[(i - shift) mod T]) plus a masked multiply-accumulate, so the
    work lands on the XLU/VPU slots instead of building O(T^2) shift matrices
    for the MXU.
    """
    T = v.shape[1]
    K = w.shape[1]
    pad = K // 2
    acc = jnp.zeros(v.shape, jnp.float32)
    for j in range(K):
        d = j - pad                                    # read offset: v[t + d]
        tap = w[:, j:j + 1]                            # (C', 1)
        if d == 0:
            acc = acc + v * tap
        else:
            rolled = pltpu.roll(v, (-d) % T, 1)        # rolled[t] = v[(t+d) % T]
            valid = ((tpos >= -d) & (tpos < T - d)).astype(jnp.float32)
            acc = acc + rolled * valid * tap           # zero out-of-bounds taps
    return acc + b


def dyne_kernel(
    x_ref, m_ref,
    ln_g_ref, ln_b_ref,
    fc_w_ref, fc_b_ref, gfc_w_ref, gfc_b_ref,
    qkv_w_ref, qkv_b_ref, mix_w_ref, mix_b_ref,
    a1_w_ref, a1_b_ref, a2_w_ref, a2_b_ref,
    mw_res_ref, mw_fc_ref, merge_b_ref,
    gn_p_ref, gn_g_ref, gn_b_ref,
    mlp_w1_ref, mlp_b1_ref, mlp_dww_ref, mlp_dwb_ref, mlp_w2_ref, mlp_b2_ref,
    out_ref,
    *, dim_head, num_heads, matmul_dtype,
):
    f32 = jnp.float32
    x = x_ref[0].astype(f32)            # (C, T)
    m = m_ref[0].astype(f32)            # (1, T)
    C, T = x.shape
    dh = dim_head
    hc = num_heads * dh                 # == C for this module
    scalor = float(dh) ** -0.5

    def mm(a, b):                       # MXU matmul, f32 accumulation
        return jnp.dot(a.astype(matmul_dtype), b.astype(matmul_dtype),
                       preferred_element_type=f32)

    tpos = jax.lax.broadcasted_iota(jnp.int32, (1, T), 1)   # hoisted conv iota

    # ---- LayerNorm over the channel axis (per time step) --------------------
    mu = jnp.mean(x, axis=0, keepdims=True)
    xc = x - mu
    var = jnp.mean(xc * xc, axis=0, keepdims=True)
    ln = xc * jax.lax.rsqrt(var + 1e-5) * ln_g_ref[...] + ln_b_ref[...]

    # ---- depthwise 1x1 gates: fc(ln) and relu(global_fc(mean_T(ln))) --------
    fc = ln * fc_w_ref[...] + fc_b_ref[...]
    phi = jnp.maximum(
        jnp.mean(ln, axis=1, keepdims=True) * gfc_w_ref[...] + gfc_b_ref[...], 0.0)
    fcphi = fc * phi                                                     # (C, T)

    # ---- high-frequency attention, all heads fused ---------------------------
    # qkv weights / mixer taps are stacked and row-permuted host-side so the
    # matmul output rows are already grouped as [q_0..q_h | k_0..k_h | v_0..v_h].
    qkv = mm(qkv_w_ref[...], x) + qkv_b_ref[...]                 # (3*hc, T)
    qkv = _dw_conv(qkv, mix_w_ref[...], mix_b_ref[...], tpos)    # mixer dw conv
    q = qkv[0:hc, :]
    k = qkv[hc:2 * hc, :]
    v = qkv[2 * hc:3 * hc, :]
    a = mm(a1_w_ref[...], q * k) + a1_b_ref[...]     # AttnMap conv1 (block-diag)
    a = a * jax.nn.sigmoid(a)                        # MemoryEfficientSwish
    a = mm(a2_w_ref[...], a) + a2_b_ref[...]         # AttnMap conv2 (block-diag)
    res = jnp.tanh(a * scalor) * v                   # attn_drop p=0

    # ---- merge_fc over cat([hfa_0, hfa_1, fc*phi]) + residual ----------------
    merged = mm(mw_res_ref[...], res) + mm(mw_fc_ref[...], fcphi) + merge_b_ref[...]
    out1 = x * m + (merged + ln)                     # drop_path / downsample = Id

    # ---- GroupNorm(num_groups) via host-built group-average projector -------
    gmean = jnp.mean(jnp.dot(gn_p_ref[...], out1, preferred_element_type=f32),
                     axis=1, keepdims=True)                          # (C, 1)
    diff = out1 - gmean
    gvar = jnp.mean(jnp.dot(gn_p_ref[...], diff * diff, preferred_element_type=f32),
                    axis=1, keepdims=True)
    gn = diff * jax.lax.rsqrt(gvar + 1e-5) * gn_g_ref[...] + gn_b_ref[...]

    # ---- ConvFFN: 1x1 -> GELU -> depthwise conv -> 1x1 -----------------------
    h = mm(mlp_w1_ref[...], gn) + mlp_b1_ref[...]
    h = jax.nn.gelu(h, approximate=True)  # TODO(synk): exact erf-GELU unavailable
    h = _dw_conv(h, mlp_dww_ref[...], mlp_dwb_ref[...], tpos)
    h = mm(mlp_w2_ref[...], h) + mlp_b2_ref[...]

    out_ref[0] = (out1 + h).astype(out_ref.dtype)


def _prepare_params(p, *, n_embd, kernel_sizes, num_groups):
    """Host-side fusion of PyTorch-shaped parameters into kernel operands."""
    C = n_embd
    nh = len(kernel_sizes)
    dh = C // nh
    k_max = max(kernel_sizes)
    assert C % nh == 0 and C % num_groups == 0

    # Stack qkv / mixer params over heads (naive order: head0 [q,k,v], head1 ...).
    qkv_w = jnp.concatenate([p[f"qkv{i}_w"] for i in range(nh)], axis=0)  # (3*nh*dh, C)
    qkv_b = jnp.concatenate([p[f"qkv{i}_b"] for i in range(nh)], axis=0)
    mix_w_list, mix_b_list = [], []
    for i, ks in enumerate(kernel_sizes):
        assert (k_max - ks) % 2 == 0, "kernel sizes must share parity"
        lpad = (k_max - ks) // 2
        # zero-padding the taps symmetrically preserves the 'same' conv exactly
        mix_w_list.append(jnp.pad(p[f"mix{i}_w"], ((0, 0), (lpad, k_max - ks - lpad))))
        mix_b_list.append(p[f"mix{i}_b"])
    mix_w = jnp.concatenate(mix_w_list, axis=0)
    mix_b = jnp.concatenate(mix_b_list, axis=0)

    # Row-permute so the fused qkv matmul emits [q_0..q_h | k_0..k_h | v_0..v_h]
    # (removes all in-kernel concatenation).
    perm = np.concatenate(
        [np.arange(h * 3 * dh + c * dh, h * 3 * dh + (c + 1) * dh)
         for c in range(3) for h in range(nh)])
    qkv_w, qkv_b = qkv_w[perm], qkv_b[perm]
    mix_w, mix_b = mix_w[perm], mix_b[perm]

    def block_diag(mats):
        n = sum(m.shape[0] for m in mats)
        out = jnp.zeros((n, n), jnp.float32)
        off = 0
        for mat in mats:
            out = out.at[off:off + mat.shape[0], off:off + mat.shape[1]].set(mat)
            off += mat.shape[0]
        return out

    a1_w = block_diag([p[f"attn{i}_w1"] for i in range(nh)])
    a2_w = block_diag([p[f"attn{i}_w2"] for i in range(nh)])
    a1_b = jnp.concatenate([p[f"attn{i}_b1"] for i in range(nh)], axis=0)
    a2_b = jnp.concatenate([p[f"attn{i}_b2"] for i in range(nh)], axis=0)

    mw = p["merge_w"]                                # (C, 2C): [hfa_cat | fc*phi]
    mw_res, mw_fc = mw[:, :nh * dh], mw[:, nh * dh:]

    # Group-average projector: P[c, c'] = 1/cpg if same group else 0.
    cpg = C // num_groups
    g = np.arange(C) // cpg
    gn_proj = jnp.asarray((g[:, None] == g[None, :]).astype(np.float32) / cpg)

    return (
        p["ln_g"], p["ln_b"],
        p["fc_w"], p["fc_b"], p["gfc_w"], p["gfc_b"],
        qkv_w, qkv_b, mix_w, mix_b,
        a1_w, a1_b, a2_w, a2_b,
        mw_res, mw_fc, p["merge_b"],
        gn_proj, p["gn_g"], p["gn_b"],
        p["mlp_w1"], p["mlp_b1"], p["mlp_dw_w"], p["mlp_dw_b"],
        p["mlp_w2"], p["mlp_b2"],
    )


def dyne_layer_v7(x, mask, params, *, kernel_sizes=(7, 5), num_groups=16,
                  matmul_dtype=jnp.float32):
    """x: (B, C, T) float32, mask: (B, 1, T) bool.  Returns (out, out_mask_bool)."""
    B, C, T = x.shape
    nh = len(kernel_sizes)
    dh = C // nh
    mask_f = mask.astype(x.dtype)

    weights = _prepare_params(params, n_embd=C, kernel_sizes=kernel_sizes,
                              num_groups=num_groups)

    arrays = [x, mask_f] + list(weights)
    in_specs = [
        pl.BlockSpec((1, C, T), lambda b: (b, 0, 0)),
        pl.BlockSpec((1, 1, T), lambda b: (b, 0, 0)),
    ]
    for w in weights:                                   # constant index map: one DMA
        in_specs.append(pl.BlockSpec(w.shape, lambda b: (0, 0)))

    kernel = functools.partial(dyne_kernel, dim_head=dh, num_heads=nh,
                               matmul_dtype=matmul_dtype)
    out = pl.pallas_call(
        kernel,
        out_shape=jax.ShapeDtypeStruct((B, C, T), x.dtype),
        grid=(B,),
        in_specs=in_specs,
        out_specs=pl.BlockSpec((1, C, T), lambda b: (b, 0, 0)),
        compiler_params=pltpu.CompilerParams(
            dimension_semantics=("parallel",),          # independent batches
            vmem_limit_bytes=64 * 1024 * 1024),
    )(*arrays)

    # n_ds_stride == 1 -> nearest interpolation of the mask is the mask itself.
    return out, mask.astype(bool)


def init_params(key, n_embd, kernel_sizes, init_conv_vars=0.1):
    """Deterministic synthetic parameters in PyTorch-module shapes."""
    C = n_embd
    nh = len(kernel_sizes)
    dh = C // nh
    k_mlp = kernel_sizes[-1]   # value the loop variable holds after __init__'s loop
    keys = iter(jax.random.split(key, 64))

    def nrm(shape, std=0.05):
        return std * jax.random.normal(next(keys), shape, jnp.float32)

    p = {
        "ln_g": jnp.ones((C, 1), jnp.float32), "ln_b": jnp.zeros((C, 1), jnp.float32),
        # reset_params: fc / global_fc weights ~ N(0, init_conv_vars), zero bias
        "fc_w": nrm((C, 1), init_conv_vars), "fc_b": jnp.zeros((C, 1), jnp.float32),
        "gfc_w": nrm((C, 1), init_conv_vars), "gfc_b": jnp.zeros((C, 1), jnp.float32),
        "merge_w": nrm((C, 2 * C)), "merge_b": nrm((C, 1)),
        "gn_g": jnp.ones((C, 1), jnp.float32), "gn_b": jnp.zeros((C, 1), jnp.float32),
        "mlp_w1": nrm((4 * C, C)), "mlp_b1": nrm((4 * C, 1)),
        "mlp_dw_w": nrm((4 * C, k_mlp)), "mlp_dw_b": nrm((4 * C, 1)),
        "mlp_w2": nrm((C, 4 * C)), "mlp_b2": nrm((C, 1)),
    }
    for i, ks in enumerate(kernel_sizes):
        p[f"qkv{i}_w"] = nrm((3 * dh, C)); p[f"qkv{i}_b"] = nrm((3 * dh, 1))
        p[f"mix{i}_w"] = nrm((3 * dh, ks)); p[f"mix{i}_b"] = nrm((3 * dh, 1))
        p[f"attn{i}_w1"] = nrm((dh, dh)); p[f"attn{i}_b1"] = nrm((dh, 1))
        p[f"attn{i}_w2"] = nrm((dh, dh)); p[f"attn{i}_b2"] = nrm((dh, 1))
    return p


if __name__ == "__main__":
    # n_embd=32 (divisible by 16 for GroupNorm); T=128 keeps the lane axis dense.
    B, C, T = 2, 32, 128
    kernel_sizes = (7, 5)

    key = jax.random.PRNGKey(0)
    k_x, k_p = jax.random.split(key, 2)
    x = jax.random.normal(k_x, (B, C, T), jnp.float32)
    # mask: batch 0 fully valid, batch 1 valid on the first 80 steps
    t_idx = jnp.arange(T)[None, None, :]
    lengths = jnp.array([T, 80], jnp.int32)[:, None, None]
    mask = t_idx < lengths            # (B, 1, T) bool

    params = init_params(k_p, C, kernel_sizes, init_conv_vars=0.1)

    out, out_mask = dyne_layer_v7(x, mask, params, kernel_sizes=kernel_sizes,
                                  num_groups=16)
    jax.block_until_ready(out)
    assert out.shape == (B, C, T) and out.dtype == jnp.float32
    assert out_mask.shape == (B, 1, T) and out_mask.dtype == jnp.bool_
    print("KERNEL_OK")
</pallas_src>

<mosaic_0001>
module attributes {stable_mosaic.version = 11 : i64} {
  func.func @dyne_kernel(%arg0: i32, %arg1: memref<1x32x128xf32, #tpu.memory_space<vmem>>, %arg2: memref<1x1x128xf32, #tpu.memory_space<vmem>>, %arg3: memref<32x1xf32, #tpu.memory_space<vmem>>, %arg4: memref<32x1xf32, #tpu.memory_space<vmem>>, %arg5: memref<32x1xf32, #tpu.memory_space<vmem>>, %arg6: memref<32x1xf32, #tpu.memory_space<vmem>>, %arg7: memref<32x1xf32, #tpu.memory_space<vmem>>, %arg8: memref<32x1xf32, #tpu.memory_space<vmem>>, %arg9: memref<96x32xf32, #tpu.memory_space<vmem>>, %arg10: memref<96x1xf32, #tpu.memory_space<vmem>>, %arg11: memref<96x7xf32, #tpu.memory_space<vmem>>, %arg12: memref<96x1xf32, #tpu.memory_space<vmem>>, %arg13: memref<32x32xf32, #tpu.memory_space<vmem>>, %arg14: memref<32x1xf32, #tpu.memory_space<vmem>>, %arg15: memref<32x32xf32, #tpu.memory_space<vmem>>, %arg16: memref<32x1xf32, #tpu.memory_space<vmem>>, %arg17: memref<32x32xf32, #tpu.memory_space<vmem>>, %arg18: memref<32x32xf32, #tpu.memory_space<vmem>>, %arg19: memref<32x1xf32, #tpu.memory_space<vmem>>, %arg20: memref<32x32xf32, #tpu.memory_space<vmem>>, %arg21: memref<32x1xf32, #tpu.memory_space<vmem>>, %arg22: memref<32x1xf32, #tpu.memory_space<vmem>>, %arg23: memref<128x32xf32, #tpu.memory_space<vmem>>, %arg24: memref<128x1xf32, #tpu.memory_space<vmem>>, %arg25: memref<128x5xf32, #tpu.memory_space<vmem>>, %arg26: memref<128x1xf32, #tpu.memory_space<vmem>>, %arg27: memref<32x128xf32, #tpu.memory_space<vmem>>, %arg28: memref<32x1xf32, #tpu.memory_space<vmem>>, %arg29: memref<1x32x128xf32, #tpu.memory_space<vmem>>) attributes {dimension_semantics = [#tpu.dimension_semantics<parallel>], iteration_bounds = array<i64: 2>, scalar_prefetch = 0 : i64, scratch_operands = 0 : i64, tpu.core_type = #tpu.core_type<tc>, window_params = [{transform_indices = @transform_0, window_bounds = array<i64: 1, 32, 128>}, {transform_indices = @transform_1, window_bounds = array<i64: 1, 1, 128>}, {pipeline_mode = #tpu.pipeline_mode<synchronous>, transform_indices = @transform_2, window_bounds = array<i64: 32, 1>}, {pipeline_mode = #tpu.pipeline_mode<synchronous>, transform_indices = @transform_3, window_bounds = array<i64: 32, 1>}, {pipeline_mode = #tpu.pipeline_mode<synchronous>, transform_indices = @transform_4, window_bounds = array<i64: 32, 1>}, {pipeline_mode = #tpu.pipeline_mode<synchronous>, transform_indices = @transform_5, window_bounds = array<i64: 32, 1>}, {pipeline_mode = #tpu.pipeline_mode<synchronous>, transform_indices = @transform_6, window_bounds = array<i64: 32, 1>}, {pipeline_mode = #tpu.pipeline_mode<synchronous>, transform_indices = @transform_7, window_bounds = array<i64: 32, 1>}, {pipeline_mode = #tpu.pipeline_mode<synchronous>, transform_indices = @transform_8, window_bounds = array<i64: 96, 32>}, {pipeline_mode = #tpu.pipeline_mode<synchronous>, transform_indices = @transform_9, window_bounds = array<i64: 96, 1>}, {pipeline_mode = #tpu.pipeline_mode<synchronous>, transform_indices = @transform_10, window_bounds = array<i64: 96, 7>}, {pipeline_mode = #tpu.pipeline_mode<synchronous>, transform_indices = @transform_11, window_bounds = array<i64: 96, 1>}, {pipeline_mode = #tpu.pipeline_mode<synchronous>, transform_indices = @transform_12, window_bounds = array<i64: 32, 32>}, {pipeline_mode = #tpu.pipeline_mode<synchronous>, transform_indices = @transform_13, window_bounds = array<i64: 32, 1>}, {pipeline_mode = #tpu.pipeline_mode<synchronous>, transform_indices = @transform_14, window_bounds = array<i64: 32, 32>}, {pipeline_mode = #tpu.pipeline_mode<synchronous>, transform_indices = @transform_15, window_bounds = array<i64: 32, 1>}, {pipeline_mode = #tpu.pipeline_mode<synchronous>, transform_indices = @transform_16, window_bounds = array<i64: 32, 32>}, {pipeline_mode = #tpu.pipeline_mode<synchronous>, transform_indices = @transform_17, window_bounds = array<i64: 32, 32>}, {pipeline_mode = #tpu.pipeline_mode<synchronous>, transform_indices = @transform_18, window_bounds = array<i64: 32, 1>}, {pipeline_mode = #tpu.pipeline_mode<synchronous>, transform_indices = @transform_19, window_bounds = array<i64: 32, 32>}, {pipeline_mode = #tpu.pipeline_mode<synchronous>, transform_indices = @transform_20, window_bounds = array<i64: 32, 1>}, {pipeline_mode = #tpu.pipeline_mode<synchronous>, transform_indices = @transform_21, window_bounds = array<i64: 32, 1>}, {pipeline_mode = #tpu.pipeline_mode<synchronous>, transform_indices = @transform_22, window_bounds = array<i64: 128, 32>}, {pipeline_mode = #tpu.pipeline_mode<synchronous>, transform_indices = @transform_23, window_bounds = array<i64: 128, 1>}, {pipeline_mode = #tpu.pipeline_mode<synchronous>, transform_indices = @transform_24, window_bounds = array<i64: 128, 5>}, {pipeline_mode = #tpu.pipeline_mode<synchronous>, transform_indices = @transform_25, window_bounds = array<i64: 128, 1>}, {pipeline_mode = #tpu.pipeline_mode<synchronous>, transform_indices = @transform_26, window_bounds = array<i64: 32, 128>}, {pipeline_mode = #tpu.pipeline_mode<synchronous>, transform_indices = @transform_27, window_bounds = array<i64: 32, 1>}, {transform_indices = @transform_28, window_bounds = array<i64: 1, 32, 128>}]} {
    %c0 = arith.constant 0 : index
    %c0_0 = arith.constant 0 : index
    %c0_1 = arith.constant 0 : index
    %0 = vector.load %arg1[%c0, %c0_0, %c0_1] : memref<1x32x128xf32, #tpu.memory_space<vmem>>, vector<1x32x128xf32>
    %1 = vector.shape_cast %0 : vector<1x32x128xf32> to vector<32x128xf32>
    %c0_2 = arith.constant 0 : index
    %c0_3 = arith.constant 0 : index
    %c0_4 = arith.constant 0 : index
    %2 = vector.load %arg2[%c0_2, %c0_3, %c0_4] : memref<1x1x128xf32, #tpu.memory_space<vmem>>, vector<1x1x128xf32>
    %3 = vector.shape_cast %2 : vector<1x1x128xf32> to vector<1x128xf32>
    %4 = tpu.iota {dimensions = array<i32: 1>} : vector<1x128xi32>
    %cst = arith.constant dense<0.000000e+00> : vector<128xf32>
    %5 = vector.multi_reduction <add>, %1, %cst [0] : vector<32x128xf32> to vector<128xf32>
    %6 = vector.shape_cast %5 : vector<128xf32> to vector<1x128xf32>
    %cst_5 = arith.constant 3.200000e+01 : f32
    %7 = vector.broadcast %cst_5 : f32 to vector<1x128xf32>
    %8 = arith.divf %6, %7 : vector<1x128xf32>
    %9 = vector.broadcast %8 : vector<1x128xf32> to vector<32x128xf32>
    %10 = arith.subf %1, %9 : vector<32x128xf32>
    %11 = arith.mulf %10, %10 : vector<32x128xf32>
    %cst_6 = arith.constant dense<0.000000e+00> : vector<128xf32>
    %12 = vector.multi_reduction <add>, %11, %cst_6 [0] : vector<32x128xf32> to vector<128xf32>
    %13 = vector.shape_cast %12 : vector<128xf32> to vector<1x128xf32>
    %cst_7 = arith.constant 3.200000e+01 : f32
    %14 = vector.broadcast %cst_7 : f32 to vector<1x128xf32>
    %15 = arith.divf %13, %14 : vector<1x128xf32>
    %cst_8 = arith.constant 9.99999974E-6 : f32
    %16 = vector.broadcast %cst_8 : f32 to vector<1x128xf32>
    %17 = arith.addf %15, %16 : vector<1x128xf32>
    %18 = math.rsqrt %17 : vector<1x128xf32>
    %19 = vector.broadcast %18 : vector<1x128xf32> to vector<32x128xf32>
    %20 = arith.mulf %10, %19 : vector<32x128xf32>
    %c0_9 = arith.constant 0 : index
    %c0_10 = arith.constant 0 : index
    %21 = vector.load %arg3[%c0_9, %c0_10] : memref<32x1xf32, #tpu.memory_space<vmem>>, vector<32x1xf32>
    %22 = vector.broadcast %21 : vector<32x1xf32> to vector<32x128xf32>
    %23 = arith.mulf %20, %22 : vector<32x128xf32>
    %c0_11 = arith.constant 0 : index
    %c0_12 = arith.constant 0 : index
    %24 = vector.load %arg4[%c0_11, %c0_12] : memref<32x1xf32, #tpu.memory_space<vmem>>, vector<32x1xf32>
    %25 = vector.broadcast %24 : vector<32x1xf32> to vector<32x128xf32>
    %26 = arith.addf %23, %25 : vector<32x128xf32>
    %c0_13 = arith.constant 0 : index
    %c0_14 = arith.constant 0 : index
    %27 = vector.load %arg5[%c0_13, %c0_14] : memref<32x1xf32, #tpu.memory_space<vmem>>, vector<32x1xf32>
    %28 = vector.broadcast %27 : vector<32x1xf32> to vector<32x128xf32>
    %29 = arith.mulf %26, %28 : vector<32x128xf32>
    %c0_15 = arith.constant 0 : index
    %c0_16 = arith.constant 0 : index
    %30 = vector.load %arg6[%c0_15, %c0_16] : memref<32x1xf32, #tpu.memory_space<vmem>>, vector<32x1xf32>
    %31 = vector.broadcast %30 : vector<32x1xf32> to vector<32x128xf32>
    %32 = arith.addf %29, %31 : vector<32x128xf32>
    %cst_17 = arith.constant dense<0.000000e+00> : vector<32xf32>
    %33 = vector.multi_reduction <add>, %26, %cst_17 [1] : vector<32x128xf32> to vector<32xf32>
    %34 = vector.shape_cast %33 : vector<32xf32> to vector<32x1xf32>
    %cst_18 = arith.constant 1.280000e+02 : f32
    %35 = vector.broadcast %cst_18 : f32 to vector<32x1xf32>
    %36 = arith.divf %34, %35 : vector<32x1xf32>
    %c0_19 = arith.constant 0 : index
    %c0_20 = arith.constant 0 : index
    %37 = vector.load %arg7[%c0_19, %c0_20] : memref<32x1xf32, #tpu.memory_space<vmem>>, vector<32x1xf32>
    %38 = arith.mulf %36, %37 : vector<32x1xf32>
    %c0_21 = arith.constant 0 : index
    %c0_22 = arith.constant 0 : index
    %39 = vector.load %arg8[%c0_21, %c0_22] : memref<32x1xf32, #tpu.memory_space<vmem>>, vector<32x1xf32>
    %40 = arith.addf %38, %39 : vector<32x1xf32>
    %cst_23 = arith.constant 0.000000e+00 : f32
    %41 = vector.broadcast %cst_23 : f32 to vector<32x1xf32>
    %42 = arith.maximumf %40, %41 : vector<32x1xf32>
    %43 = vector.broadcast %42 : vector<32x1xf32> to vector<32x128xf32>
    %44 = arith.mulf %32, %43 : vector<32x128xf32>
    %c0_24 = arith.constant 0 : index
    %c0_25 = arith.constant 0 : index
    %45 = vector.load %arg9[%c0_24, %c0_25] : memref<96x32xf32, #tpu.memory_space<vmem>>, vector<96x32xf32>
    %cst_26 = arith.constant dense<0.000000e+00> : vector<96x128xf32>
    %46 = tpu.matmul %45, %1, %cst_26 {dimension_numbers = #tpu.dot_dimension_numbers<[1], [0], [0], [1], [0, 0, 1, 1], [], []>} : vector<96x32xf32>, vector<32x128xf32>, vector<96x128xf32> -> vector<96x128xf32>
    %c0_27 = arith.constant 0 : index
    %c0_28 = arith.constant 0 : index
    %47 = vector.load %arg10[%c0_27, %c0_28] : memref<96x1xf32, #tpu.memory_space<vmem>>, vector<96x1xf32>
    %48 = vector.broadcast %47 : vector<96x1xf32> to vector<96x128xf32>
    %49 = arith.addf %46, %48 : vector<96x128xf32>
    %c0_29 = arith.constant 0 : index
    %c0_30 = arith.constant 0 : index
    %50 = vector.load %arg11[%c0_29, %c0_30] : memref<96x7xf32, #tpu.memory_space<vmem>>, vector<96x7xf32>
    %c0_31 = arith.constant 0 : index
    %c0_32 = arith.constant 0 : index
    %51 = vector.load %arg12[%c0_31, %c0_32] : memref<96x1xf32, #tpu.memory_space<vmem>>, vector<96x1xf32>
    %cst_33 = arith.constant 0.000000e+00 : f32
    %52 = vector.broadcast %cst_33 : f32 to vector<96x128xf32>
    %53 = vector.extract_strided_slice %50 {offsets = [0, 0], sizes = [96, 1], strides = [1, 1]} : vector<96x7xf32> to vector<96x1xf32>
    %c3_i32 = arith.constant 3 : i32
    %54 = tpu.dynamic_rotate %49 by %c3_i32 dim 1 : vector<96x128xf32>, i32 -> vector<96x128xf32>
    %c3_i32_34 = arith.constant 3 : i32
    %55 = vector.broadcast %c3_i32_34 : i32 to vector<1x128xi32>
    %56 = arith.cmpi sge, %4, %55 : vector<1x128xi32>
    %c131_i32 = arith.constant 131 : i32
    %57 = vector.broadcast %c131_i32 : i32 to vector<1x128xi32>
    %58 = arith.cmpi slt, %4, %57 : vector<1x128xi32>
    %59 = arith.andi %56, %58 : vector<1x128xi1>
    %60 = arith.extui %59 : vector<1x128xi1> to vector<1x128xi32>
    %61 = arith.sitofp %60 : vector<1x128xi32> to vector<1x128xf32>
    %62 = vector.broadcast %61 : vector<1x128xf32> to vector<96x128xf32>
    %63 = arith.mulf %54, %62 : vector<96x128xf32>
    %64 = vector.broadcast %53 : vector<96x1xf32> to vector<96x128xf32>
    %65 = arith.mulf %63, %64 : vector<96x128xf32>
    %66 = arith.addf %52, %65 : vector<96x128xf32>
    %67 = vector.extract_strided_slice %50 {offsets = [0, 1], sizes = [96, 1], strides = [1, 1]} : vector<96x7xf32> to vector<96x1xf32>
    %c2_i32 = arith.constant 2 : i32
    %68 = tpu.dynamic_rotate %49 by %c2_i32 dim 1 : vector<96x128xf32>, i32 -> vector<96x128xf32>
    %c2_i32_35 = arith.constant 2 : i32
    %69 = vector.broadcast %c2_i32_35 : i32 to vector<1x128xi32>
    %70 = arith.cmpi sge, %4, %69 : vector<1x128xi32>
    %c130_i32 = arith.constant 130 : i32
    %71 = vector.broadcast %c130_i32 : i32 to vector<1x128xi32>
    %72 = arith.cmpi slt, %4, %71 : vector<1x128xi32>
    %73 = arith.andi %70, %72 : vector<1x128xi1>
    %74 = arith.extui %73 : vector<1x128xi1> to vector<1x128xi32>
    %75 = arith.sitofp %74 : vector<1x128xi32> to vector<1x128xf32>
    %76 = vector.broadcast %75 : vector<1x128xf32> to vector<96x128xf32>
    %77 = arith.mulf %68, %76 : vector<96x128xf32>
    %78 = vector.broadcast %67 : vector<96x1xf32> to vector<96x128xf32>
    %79 = arith.mulf %77, %78 : vector<96x128xf32>
    %80 = arith.addf %66, %79 : vector<96x128xf32>
    %81 = vector.extract_strided_slice %50 {offsets = [0, 2], sizes = [96, 1], strides = [1, 1]} : vector<96x7xf32> to vector<96x1xf32>
    %c1_i32 = arith.constant 1 : i32
    %82 = tpu.dynamic_rotate %49 by %c1_i32 dim 1 : vector<96x128xf32>, i32 -> vector<96x128xf32>
    %c1_i32_36 = arith.constant 1 : i32
    %83 = vector.broadcast %c1_i32_36 : i32 to vector<1x128xi32>
    %84 = arith.cmpi sge, %4, %83 : vector<1x128xi32>
    %c129_i32 = arith.constant 129 : i32
    %85 = vector.broadcast %c129_i32 : i32 to vector<1x128xi32>
    %86 = arith.cmpi slt, %4, %85 : vector<1x128xi32>
    %87 = arith.andi %84, %86 : vector<1x128xi1>
    %88 = arith.extui %87 : vector<1x128xi1> to vector<1x128xi32>
    %89 = arith.sitofp %88 : vector<1x128xi32> to vector<1x128xf32>
    %90 = vector.broadcast %89 : vector<1x128xf32> to vector<96x128xf32>
    %91 = arith.mulf %82, %90 : vector<96x128xf32>
    %92 = vector.broadcast %81 : vector<96x1xf32> to vector<96x128xf32>
    %93 = arith.mulf %91, %92 : vector<96x128xf32>
    %94 = arith.addf %80, %93 : vector<96x128xf32>
    %95 = vector.extract_strided_slice %50 {offsets = [0, 3], sizes = [96, 1], strides = [1, 1]} : vector<96x7xf32> to vector<96x1xf32>
    %96 = vector.broadcast %95 : vector<96x1xf32> to vector<96x128xf32>
    %97 = arith.mulf %49, %96 : vector<96x128xf32>
    %98 = arith.addf %94, %97 : vector<96x128xf32>
    %99 = vector.extract_strided_slice %50 {offsets = [0, 4], sizes = [96, 1], strides = [1, 1]} : vector<96x7xf32> to vector<96x1xf32>
    %c127_i32 = arith.constant 127 : i32
    %100 = tpu.dynamic_rotate %49 by %c127_i32 dim 1 : vector<96x128xf32>, i32 -> vector<96x128xf32>
    %c-1_i32 = arith.constant -1 : i32
    %101 = vector.broadcast %c-1_i32 : i32 to vector<1x128xi32>
    %102 = arith.cmpi sge, %4, %101 : vector<1x128xi32>
    %c127_i32_37 = arith.constant 127 : i32
    %103 = vector.broadcast %c127_i32_37 : i32 to vector<1x128xi32>
    %104 = arith.cmpi slt, %4, %103 : vector<1x128xi32>
    %105 = arith.andi %102, %104 : vector<1x128xi1>
    %106 = arith.extui %105 : vector<1x128xi1> to vector<1x128xi32>
    %107 = arith.sitofp %106 : vector<1x128xi32> to vector<1x128xf32>
    %108 = vector.broadcast %107 : vector<1x128xf32> to vector<96x128xf32>
    %109 = arith.mulf %100, %108 : vector<96x128xf32>
    %110 = vector.broadcast %99 : vector<96x1xf32> to vector<96x128xf32>
    %111 = arith.mulf %109, %110 : vector<96x128xf32>
    %112 = arith.addf %98, %111 : vector<96x128xf32>
    %113 = vector.extract_strided_slice %50 {offsets = [0, 5], sizes = [96, 1], strides = [1, 1]} : vector<96x7xf32> to vector<96x1xf32>
    %c126_i32 = arith.constant 126 : i32
    %114 = tpu.dynamic_rotate %49 by %c126_i32 dim 1 : vector<96x128xf32>, i32 -> vector<96x128xf32>
    %c-2_i32 = arith.constant -2 : i32
    %115 = vector.broadcast %c-2_i32 : i32 to vector<1x128xi32>
    %116 = arith.cmpi sge, %4, %115 : vector<1x128xi32>
    %c126_i32_38 = arith.constant 126 : i32
    %117 = vector.broadcast %c126_i32_38 : i32 to vector<1x128xi32>
    %118 = arith.cmpi slt, %4, %117 : vector<1x128xi32>
    %119 = arith.andi %116, %118 : vector<1x128xi1>
    %120 = arith.extui %119 : vector<1x128xi1> to vector<1x128xi32>
    %121 = arith.sitofp %120 : vector<1x128xi32> to vector<1x128xf32>
    %122 = vector.broadcast %121 : vector<1x128xf32> to vector<96x128xf32>
    %123 = arith.mulf %114, %122 : vector<96x128xf32>
    %124 = vector.broadcast %113 : vector<96x1xf32> to vector<96x128xf32>
    %125 = arith.mulf %123, %124 : vector<96x128xf32>
    %126 = arith.addf %112, %125 : vector<96x128xf32>
    %127 = vector.extract_strided_slice %50 {offsets = [0, 6], sizes = [96, 1], strides = [1, 1]} : vector<96x7xf32> to vector<96x1xf32>
    %c125_i32 = arith.constant 125 : i32
    %128 = tpu.dynamic_rotate %49 by %c125_i32 dim 1 : vector<96x128xf32>, i32 -> vector<96x128xf32>
    %c-3_i32 = arith.constant -3 : i32
    %129 = vector.broadcast %c-3_i32 : i32 to vector<1x128xi32>
    %130 = arith.cmpi sge, %4, %129 : vector<1x128xi32>
    %c125_i32_39 = arith.constant 125 : i32
    %131 = vector.broadcast %c125_i32_39 : i32 to vector<1x128xi32>
    %132 = arith.cmpi slt, %4, %131 : vector<1x128xi32>
    %133 = arith.andi %130, %132 : vector<1x128xi1>
    %134 = arith.extui %133 : vector<1x128xi1> to vector<1x128xi32>
    %135 = arith.sitofp %134 : vector<1x128xi32> to vector<1x128xf32>
    %136 = vector.broadcast %135 : vector<1x128xf32> to vector<96x128xf32>
    %137 = arith.mulf %128, %136 : vector<96x128xf32>
    %138 = vector.broadcast %127 : vector<96x1xf32> to vector<96x128xf32>
    %139 = arith.mulf %137, %138 : vector<96x128xf32>
    %140 = arith.addf %126, %139 : vector<96x128xf32>
    %141 = vector.broadcast %51 : vector<96x1xf32> to vector<96x128xf32>
    %142 = arith.addf %140, %141 : vector<96x128xf32>
    %143 = vector.extract_strided_slice %142 {offsets = [0, 0], sizes = [32, 128], strides = [1, 1]} : vector<96x128xf32> to vector<32x128xf32>
    %144 = vector.extract_strided_slice %142 {offsets = [32, 0], sizes = [32, 128], strides = [1, 1]} : vector<96x128xf32> to vector<32x128xf32>
    %145 = vector.extract_strided_slice %142 {offsets = [64, 0], sizes = [32, 128], strides = [1, 1]} : vector<96x128xf32> to vector<32x128xf32>
    %c0_40 = arith.constant 0 : index
    %c0_41 = arith.constant 0 : index
    %146 = vector.load %arg13[%c0_40, %c0_41] : memref<32x32xf32, #tpu.memory_space<vmem>>, vector<32x32xf32>
    %147 = arith.mulf %143, %144 : vector<32x128xf32>
    %cst_42 = arith.constant dense<0.000000e+00> : vector<32x128xf32>
    %148 = tpu.matmul %146, %147, %cst_42 {dimension_numbers = #tpu.dot_dimension_numbers<[1], [0], [0], [1], [0, 0, 1, 1], [], []>} : vector<32x32xf32>, vector<32x128xf32>, vector<32x128xf32> -> vector<32x128xf32>
    %c0_43 = arith.constant 0 : index
    %c0_44 = arith.constant 0 : index
    %149 = vector.load %arg14[%c0_43, %c0_44] : memref<32x1xf32, #tpu.memory_space<vmem>>, vector<32x1xf32>
    %150 = vector.broadcast %149 : vector<32x1xf32> to vector<32x128xf32>
    %151 = arith.addf %148, %150 : vector<32x128xf32>
    %152 = arith.negf %151 : vector<32x128xf32>
    %153 = math.exp %152 : vector<32x128xf32>
    %cst_45 = arith.constant 1.000000e+00 : f32
    %154 = vector.broadcast %cst_45 : f32 to vector<32x128xf32>
    %155 = arith.addf %154, %153 : vector<32x128xf32>
    %156 = arith.divf %154, %155 : vector<32x128xf32>
    %157 = arith.mulf %151, %156 : vector<32x128xf32>
    %c0_46 = arith.constant 0 : index
    %c0_47 = arith.constant 0 : index
    %158 = vector.load %arg15[%c0_46, %c0_47] : memref<32x32xf32, #tpu.memory_space<vmem>>, vector<32x32xf32>
    %cst_48 = arith.constant dense<0.000000e+00> : vector<32x128xf32>
    %159 = tpu.matmul %158, %157, %cst_48 {dimension_numbers = #tpu.dot_dimension_numbers<[1], [0], [0], [1], [0, 0, 1, 1], [], []>} : vector<32x32xf32>, vector<32x128xf32>, vector<32x128xf32> -> vector<32x128xf32>
    %c0_49 = arith.constant 0 : index
    %c0_50 = arith.constant 0 : index
    %160 = vector.load %arg16[%c0_49, %c0_50] : memref<32x1xf32, #tpu.memory_space<vmem>>, vector<32x1xf32>
    %161 = vector.broadcast %160 : vector<32x1xf32> to vector<32x128xf32>
    %162 = arith.addf %159, %161 : vector<32x128xf32>
    %cst_51 = arith.constant 2.500000e-01 : f32
    %163 = vector.broadcast %cst_51 : f32 to vector<32x128xf32>
    %164 = arith.mulf %162, %163 : vector<32x128xf32>
    %165 = math.tanh %164 : vector<32x128xf32>
    %166 = arith.mulf %165, %145 : vector<32x128xf32>
    %c0_52 = arith.constant 0 : index
    %c0_53 = arith.constant 0 : index
    %167 = vector.load %arg17[%c0_52, %c0_53] : memref<32x32xf32, #tpu.memory_space<vmem>>, vector<32x32xf32>
    %cst_54 = arith.constant dense<0.000000e+00> : vector<32x128xf32>
    %168 = tpu.matmul %167, %166, %cst_54 {dimension_numbers = #tpu.dot_dimension_numbers<[1], [0], [0], [1], [0, 0, 1, 1], [], []>} : vector<32x32xf32>, vector<32x128xf32>, vector<32x128xf32> -> vector<32x128xf32>
    %c0_55 = arith.constant 0 : index
    %c0_56 = arith.constant 0 : index
    %169 = vector.load %arg18[%c0_55, %c0_56] : memref<32x32xf32, #tpu.memory_space<vmem>>, vector<32x32xf32>
    %cst_57 = arith.constant dense<0.000000e+00> : vector<32x128xf32>
    %170 = tpu.matmul %169, %44, %cst_57 {dimension_numbers = #tpu.dot_dimension_numbers<[1], [0], [0], [1], [0, 0, 1, 1], [], []>} : vector<32x32xf32>, vector<32x128xf32>, vector<32x128xf32> -> vector<32x128xf32>
    %171 = arith.addf %168, %170 : vector<32x128xf32>
    %c0_58 = arith.constant 0 : index
    %c0_59 = arith.constant 0 : index
    %172 = vector.load %arg19[%c0_58, %c0_59] : memref<32x1xf32, #tpu.memory_space<vmem>>, vector<32x1xf32>
    %173 = vector.broadcast %172 : vector<32x1xf32> to vector<32x128xf32>
    %174 = arith.addf %171, %173 : vector<32x128xf32>
    %175 = vector.broadcast %3 : vector<1x128xf32> to vector<32x128xf32>
    %176 = arith.mulf %1, %175 : vector<32x128xf32>
    %177 = arith.addf %174, %26 : vector<32x128xf32>
    %178 = arith.addf %176, %177 : vector<32x128xf32>
    %c0_60 = arith.constant 0 : index
    %c0_61 = arith.constant 0 : index
    %179 = vector.load %arg20[%c0_60, %c0_61] : memref<32x32xf32, #tpu.memory_space<vmem>>, vector<32x32xf32>
    %cst_62 = arith.constant dense<0.000000e+00> : vector<32x128xf32>
    %180 = tpu.matmul %179, %178, %cst_62 {dimension_numbers = #tpu.dot_dimension_numbers<[1], [0], [0], [1], [0, 0, 1, 1], [], []>} : vector<32x32xf32>, vector<32x128xf32>, vector<32x128xf32> -> vector<32x128xf32>
    %cst_63 = arith.constant dense<0.000000e+00> : vector<32xf32>
    %181 = vector.multi_reduction <add>, %180, %cst_63 [1] : vector<32x128xf32> to vector<32xf32>
    %182 = vector.shape_cast %181 : vector<32xf32> to vector<32x1xf32>
    %cst_64 = arith.constant 1.280000e+02 : f32
    %183 = vector.broadcast %cst_64 : f32 to vector<32x1xf32>
    %184 = arith.divf %182, %183 : vector<32x1xf32>
    %185 = vector.broadcast %184 : vector<32x1xf32> to vector<32x128xf32>
    %186 = arith.subf %178, %185 : vector<32x128xf32>
    %c0_65 = arith.constant 0 : index
    %c0_66 = arith.constant 0 : index
    %187 = vector.load %arg20[%c0_65, %c0_66] : memref<32x32xf32, #tpu.memory_space<vmem>>, vector<32x32xf32>
    %188 = arith.mulf %186, %186 : vector<32x128xf32>
    %cst_67 = arith.constant dense<0.000000e+00> : vector<32x128xf32>
    %189 = tpu.matmul %187, %188, %cst_67 {dimension_numbers = #tpu.dot_dimension_numbers<[1], [0], [0], [1], [0, 0, 1, 1], [], []>} : vector<32x32xf32>, vector<32x128xf32>, vector<32x128xf32> -> vector<32x128xf32>
    %cst_68 = arith.constant dense<0.000000e+00> : vector<32xf32>
    %190 = vector.multi_reduction <add>, %189, %cst_68 [1] : vector<32x128xf32> to vector<32xf32>
    %191 = vector.shape_cast %190 : vector<32xf32> to vector<32x1xf32>
    %cst_69 = arith.constant 1.280000e+02 : f32
    %192 = vector.broadcast %cst_69 : f32 to vector<32x1xf32>
    %193 = arith.divf %191, %192 : vector<32x1xf32>
    %cst_70 = arith.constant 9.99999974E-6 : f32
    %194 = vector.broadcast %cst_70 : f32 to vector<32x1xf32>
    %195 = arith.addf %193, %194 : vector<32x1xf32>
    %196 = math.rsqrt %195 : vector<32x1xf32>
    %197 = vector.broadcast %196 : vector<32x1xf32> to vector<32x128xf32>
    %198 = arith.mulf %186, %197 : vector<32x128xf32>
    %c0_71 = arith.constant 0 : index
    %c0_72 = arith.constant 0 : index
    %199 = vector.load %arg21[%c0_71, %c0_72] : memref<32x1xf32, #tpu.memory_space<vmem>>, vector<32x1xf32>
    %200 = vector.broadcast %199 : vector<32x1xf32> to vector<32x128xf32>
    %201 = arith.mulf %198, %200 : vector<32x128xf32>
    %c0_73 = arith.constant 0 : index
    %c0_74 = arith.constant 0 : index
    %202 = vector.load %arg22[%c0_73, %c0_74] : memref<32x1xf32, #tpu.memory_space<vmem>>, vector<32x1xf32>
    %203 = vector.broadcast %202 : vector<32x1xf32> to vector<32x128xf32>
    %204 = arith.addf %201, %203 : vector<32x128xf32>
    %c0_75 = arith.constant 0 : index
    %c0_76 = arith.constant 0 : index
    %205 = vector.load %arg23[%c0_75, %c0_76] : memref<128x32xf32, #tpu.memory_space<vmem>>, vector<128x32xf32>
    %cst_77 = arith.constant dense<0.000000e+00> : vector<128x128xf32>
    %206 = tpu.matmul %205, %204, %cst_77 {dimension_numbers = #tpu.dot_dimension_numbers<[1], [0], [0], [1], [0, 0, 1, 1], [], []>} : vector<128x32xf32>, vector<32x128xf32>, vector<128x128xf32> -> vector<128x128xf32>
    %c0_78 = arith.constant 0 : index
    %c0_79 = arith.constant 0 : index
    %207 = vector.load %arg24[%c0_78, %c0_79] : memref<128x1xf32, #tpu.memory_space<vmem>>, vector<128x1xf32>
    %208 = vector.broadcast %207 : vector<128x1xf32> to vector<128x128xf32>
    %209 = arith.addf %206, %208 : vector<128x128xf32>
    %210 = arith.mulf %209, %209 : vector<128x128xf32>
    %211 = arith.mulf %209, %210 : vector<128x128xf32>
    %cst_80 = arith.constant 4.471500e-02 : f32
    %212 = vector.broadcast %cst_80 : f32 to vector<128x128xf32>
    %213 = arith.mulf %212, %211 : vector<128x128xf32>
    %214 = arith.addf %209, %213 : vector<128x128xf32>
    %cst_81 = arith.constant 0.797884583 : f32
    %215 = vector.broadcast %cst_81 : f32 to vector<128x128xf32>
    %216 = arith.mulf %215, %214 : vector<128x128xf32>
    %217 = math.tanh %216 : vector<128x128xf32>
    %cst_82 = arith.constant 1.000000e+00 : f32
    %218 = vector.broadcast %cst_82 : f32 to vector<128x128xf32>
    %219 = arith.addf %218, %217 : vector<128x128xf32>
    %cst_83 = arith.constant 5.000000e-01 : f32
    %220 = vector.broadcast %cst_83 : f32 to vector<128x128xf32>
    %221 = arith.mulf %220, %219 : vector<128x128xf32>
    %222 = arith.mulf %209, %221 : vector<128x128xf32>
    %c0_84 = arith.constant 0 : index
    %c0_85 = arith.constant 0 : index
    %223 = vector.load %arg25[%c0_84, %c0_85] : memref<128x5xf32, #tpu.memory_space<vmem>>, vector<128x5xf32>
    %c0_86 = arith.constant 0 : index
    %c0_87 = arith.constant 0 : index
    %224 = vector.load %arg26[%c0_86, %c0_87] : memref<128x1xf32, #tpu.memory_space<vmem>>, vector<128x1xf32>
    %cst_88 = arith.constant 0.000000e+00 : f32
    %225 = vector.broadcast %cst_88 : f32 to vector<128x128xf32>
    %226 = vector.extract_strided_slice %223 {offsets = [0, 0], sizes = [128, 1], strides = [1, 1]} : vector<128x5xf32> to vector<128x1xf32>
    %c2_i32_89 = arith.constant 2 : i32
    %227 = tpu.dynamic_rotate %222 by %c2_i32_89 dim 1 : vector<128x128xf32>, i32 -> vector<128x128xf32>
    %c2_i32_90 = arith.constant 2 : i32
    %228 = vector.broadcast %c2_i32_90 : i32 to vector<1x128xi32>
    %229 = arith.cmpi sge, %4, %228 : vector<1x128xi32>
    %c130_i32_91 = arith.constant 130 : i32
    %230 = vector.broadcast %c130_i32_91 : i32 to vector<1x128xi32>
    %231 = arith.cmpi slt, %4, %230 : vector<1x128xi32>
    %232 = arith.andi %229, %231 : vector<1x128xi1>
    %233 = arith.extui %232 : vector<1x128xi1> to vector<1x128xi32>
    %234 = arith.sitofp %233 : vector<1x128xi32> to vector<1x128xf32>
    %235 = vector.broadcast %234 : vector<1x128xf32> to vector<128x128xf32>
    %236 = arith.mulf %227, %235 : vector<128x128xf32>
    %237 = vector.broadcast %226 : vector<128x1xf32> to vector<128x128xf32>
    %238 = arith.mulf %236, %237 : vector<128x128xf32>
    %239 = arith.addf %225, %238 : vector<128x128xf32>
    %240 = vector.extract_strided_slice %223 {offsets = [0, 1], sizes = [128, 1], strides = [1, 1]} : vector<128x5xf32> to vector<128x1xf32>
    %c1_i32_92 = arith.constant 1 : i32
    %241 = tpu.dynamic_rotate %222 by %c1_i32_92 dim 1 : vector<128x128xf32>, i32 -> vector<128x128xf32>
    %c1_i32_93 = arith.constant 1 : i32
    %242 = vector.broadcast %c1_i32_93 : i32 to vector<1x128xi32>
    %243 = arith.cmpi sge, %4, %242 : vector<1x128xi32>
    %c129_i32_94 = arith.constant 129 : i32
    %244 = vector.broadcast %c129_i32_94 : i32 to vector<1x128xi32>
    %245 = arith.cmpi slt, %4, %244 : vector<1x128xi32>
    %246 = arith.andi %243, %245 : vector<1x128xi1>
    %247 = arith.extui %246 : vector<1x128xi1> to vector<1x128xi32>
    %248 = arith.sitofp %247 : vector<1x128xi32> to vector<1x128xf32>
    %249 = vector.broadcast %248 : vector<1x128xf32> to vector<128x128xf32>
    %250 = arith.mulf %241, %249 : vector<128x128xf32>
    %251 = vector.broadcast %240 : vector<128x1xf32> to vector<128x128xf32>
    %252 = arith.mulf %250, %251 : vector<128x128xf32>
    %253 = arith.addf %239, %252 : vector<128x128xf32>
    %254 = vector.extract_strided_slice %223 {offsets = [0, 2], sizes = [128, 1], strides = [1, 1]} : vector<128x5xf32> to vector<128x1xf32>
    %255 = vector.broadcast %254 : vector<128x1xf32> to vector<128x128xf32>
    %256 = arith.mulf %222, %255 : vector<128x128xf32>
    %257 = arith.addf %253, %256 : vector<128x128xf32>
    %258 = vector.extract_strided_slice %223 {offsets = [0, 3], sizes = [128, 1], strides = [1, 1]} : vector<128x5xf32> to vector<128x1xf32>
    %c127_i32_95 = arith.constant 127 : i32
    %259 = tpu.dynamic_rotate %222 by %c127_i32_95 dim 1 : vector<128x128xf32>, i32 -> vector<128x128xf32>
    %c-1_i32_96 = arith.constant -1 : i32
    %260 = vector.broadcast %c-1_i32_96 : i32 to vector<1x128xi32>
    %261 = arith.cmpi sge, %4, %260 : vector<1x128xi32>
    %c127_i32_97 = arith.constant 127 : i32
    %262 = vector.broadcast %c127_i32_97 : i32 to vector<1x128xi32>
    %263 = arith.cmpi slt, %4, %262 : vector<1x128xi32>
    %264 = arith.andi %261, %263 : vector<1x128xi1>
    %265 = arith.extui %264 : vector<1x128xi1> to vector<1x128xi32>
    %266 = arith.sitofp %265 : vector<1x128xi32> to vector<1x128xf32>
    %267 = vector.broadcast %266 : vector<1x128xf32> to vector<128x128xf32>
    %268 = arith.mulf %259, %267 : vector<128x128xf32>
    %269 = vector.broadcast %258 : vector<128x1xf32> to vector<128x128xf32>
    %270 = arith.mulf %268, %269 : vector<128x128xf32>
    %271 = arith.addf %257, %270 : vector<128x128xf32>
    %272 = vector.extract_strided_slice %223 {offsets = [0, 4], sizes = [128, 1], strides = [1, 1]} : vector<128x5xf32> to vector<128x1xf32>
    %c126_i32_98 = arith.constant 126 : i32
    %273 = tpu.dynamic_rotate %222 by %c126_i32_98 dim 1 : vector<128x128xf32>, i32 -> vector<128x128xf32>
    %c-2_i32_99 = arith.constant -2 : i32
    %274 = vector.broadcast %c-2_i32_99 : i32 to vector<1x128xi32>
    %275 = arith.cmpi sge, %4, %274 : vector<1x128xi32>
    %c126_i32_100 = arith.constant 126 : i32
    %276 = vector.broadcast %c126_i32_100 : i32 to vector<1x128xi32>
    %277 = arith.cmpi slt, %4, %276 : vector<1x128xi32>
    %278 = arith.andi %275, %277 : vector<1x128xi1>
    %279 = arith.extui %278 : vector<1x128xi1> to vector<1x128xi32>
    %280 = arith.sitofp %279 : vector<1x128xi32> to vector<1x128xf32>
    %281 = vector.broadcast %280 : vector<1x128xf32> to vector<128x128xf32>
    %282 = arith.mulf %273, %281 : vector<128x128xf32>
    %283 = vector.broadcast %272 : vector<128x1xf32> to vector<128x128xf32>
    %284 = arith.mulf %282, %283 : vector<128x128xf32>
    %285 = arith.addf %271, %284 : vector<128x128xf32>
    %286 = vector.broadcast %224 : vector<128x1xf32> to vector<128x128xf32>
    %287 = arith.addf %285, %286 : vector<128x128xf32>
    %c0_101 = arith.constant 0 : index
    %c0_102 = arith.constant 0 : index
    %288 = vector.load %arg27[%c0_101, %c0_102] : memref<32x128xf32, #tpu.memory_space<vmem>>, vector<32x128xf32>
    %cst_103 = arith.constant dense<0.000000e+00> : vector<32x128xf32>
    %289 = tpu.matmul %288, %287, %cst_103 {dimension_numbers = #tpu.dot_dimension_numbers<[1], [0], [0], [1], [0, 0, 1, 1], [], []>} : vector<32x128xf32>, vector<128x128xf32>, vector<32x128xf32> -> vector<32x128xf32>
    %c0_104 = arith.constant 0 : index
    %c0_105 = arith.constant 0 : index
    %290 = vector.load %arg28[%c0_104, %c0_105] : memref<32x1xf32, #tpu.memory_space<vmem>>, vector<32x1xf32>
    %291 = vector.broadcast %290 : vector<32x1xf32> to vector<32x128xf32>
    %292 = arith.addf %289, %291 : vector<32x128xf32>
    %293 = arith.addf %178, %292 : vector<32x128xf32>
    %c0_106 = arith.constant 0 : index
    %c0_107 = arith.constant 0 : index
    %c0_108 = arith.constant 0 : index
    %294 = vector.load %arg29[%c0_106, %c0_107, %c0_108] : memref<1x32x128xf32, #tpu.memory_space<vmem>>, vector<1x32x128xf32>
    %295 = vector.shape_cast %294 : vector<1x32x128xf32> to vector<32x128xf32>
    %296 = vector.shape_cast %293 : vector<32x128xf32> to vector<1x32x128xf32>
    tpu.vector_store %arg29[%c0_106, %c0_107, %c0_108], %296 {strides = array<i32>} : memref<1x32x128xf32, #tpu.memory_space<vmem>>, vector<1x32x128xf32>,
    return
  }
  func.func @transform_0(%arg0: i32) -> (i32, i32, i32) {
    %c0_i32 = arith.constant 0 : i32
    %c0_i32_0 = arith.constant 0 : i32
    %c0_i32_1 = arith.constant 0 : i32
    return %arg0, %c0_i32, %c0_i32_0 : i32, i32, i32
  }
  func.func @transform_1(%arg0: i32) -> (i32, i32, i32) {
    %c0_i32 = arith.constant 0 : i32
    %c0_i32_0 = arith.constant 0 : i32
    %c0_i32_1 = arith.constant 0 : i32
    return %arg0, %c0_i32, %c0_i32_0 : i32, i32, i32
  }
  func.func @transform_2(%arg0: i32) -> (i32, i32) {
    %c0_i32 = arith.constant 0 : i32
    %c0_i32_0 = arith.constant 0 : i32
    %c0_i32_1 = arith.constant 0 : i32
    return %c0_i32, %c0_i32_0 : i32, i32
  }
  func.func @transform_3(%arg0: i32) -> (i32, i32) {
    %c0_i32 = arith.constant 0 : i32
    %c0_i32_0 = arith.constant 0 : i32
    %c0_i32_1 = arith.constant 0 : i32
    return %c0_i32, %c0_i32_0 : i32, i32
  }
  func.func @transform_4(%arg0: i32) -> (i32, i32) {
    %c0_i32 = arith.constant 0 : i32
    %c0_i32_0 = arith.constant 0 : i32
    %c0_i32_1 = arith.constant 0 : i32
    return %c0_i32, %c0_i32_0 : i32, i32
  }
  func.func @transform_5(%arg0: i32) -> (i32, i32) {
    %c0_i32 = arith.constant 0 : i32
    %c0_i32_0 = arith.constant 0 : i32
    %c0_i32_1 = arith.constant 0 : i32
    return %c0_i32, %c0_i32_0 : i32, i32
  }
  func.func @transform_6(%arg0: i32) -> (i32, i32) {
    %c0_i32 = arith.constant 0 : i32
    %c0_i32_0 = arith.constant 0 : i32
    %c0_i32_1 = arith.constant 0 : i32
    return %c0_i32, %c0_i32_0 : i32, i32
  }
  func.func @transform_7(%arg0: i32) -> (i32, i32) {
    %c0_i32 = arith.constant 0 : i32
    %c0_i32_0 = arith.constant 0 : i32
    %c0_i32_1 = arith.constant 0 : i32
    return %c0_i32, %c0_i32_0 : i32, i32
  }
  func.func @transform_8(%arg0: i32) -> (i32, i32) {
    %c0_i32 = arith.constant 0 : i32
    %c0_i32_0 = arith.constant 0 : i32
    %c0_i32_1 = arith.constant 0 : i32
    return %c0_i32, %c0_i32_0 : i32, i32
  }
  func.func @transform_9(%arg0: i32) -> (i32, i32) {
    %c0_i32 = arith.constant 0 : i32
    %c0_i32_0 = arith.constant 0 : i32
    %c0_i32_1 = arith.constant 0 : i32
    return %c0_i32, %c0_i32_0 : i32, i32
  }
  func.func @transform_10(%arg0: i32) -> (i32, i32) {
    %c0_i32 = arith.constant 0 : i32
    %c0_i32_0 = arith.constant 0 : i32
    %c0_i32_1 = arith.constant 0 : i32
    return %c0_i32, %c0_i32_0 : i32, i32
  }
  func.func @transform_11(%arg0: i32) -> (i32, i32) {
    %c0_i32 = arith.constant 0 : i32
    %c0_i32_0 = arith.constant 0 : i32
    %c0_i32_1 = arith.constant 0 : i32
    return %c0_i32, %c0_i32_0 : i32, i32
  }
  func.func @transform_12(%arg0: i32) -> (i32, i32) {
    %c0_i32 = arith.constant 0 : i32
    %c0_i32_0 = arith.constant 0 : i32
    %c0_i32_1 = arith.constant 0 : i32
    return %c0_i32, %c0_i32_0 : i32, i32
  }
  func.func @transform_13(%arg0: i32) -> (i32, i32) {
    %c0_i32 = arith.constant 0 : i32
    %c0_i32_0 = arith.constant 0 : i32
    %c0_i32_1 = arith.constant 0 : i32
    return %c0_i32, %c0_i32_0 : i32, i32
  }
  func.func @transform_14(%arg0: i32) -> (i32, i32) {
    %c0_i32 = arith.constant 0 : i32
    %c0_i32_0 = arith.constant 0 : i32
    %c0_i32_1 = arith.constant 0 : i32
    return %c0_i32, %c0_i32_0 : i32, i32
  }
  func.func @transform_15(%arg0: i32) -> (i32, i32) {
    %c0_i32 = arith.constant 0 : i32
    %c0_i32_0 = arith.constant 0 : i32
    %c0_i32_1 = arith.constant 0 : i32
    return %c0_i32, %c0_i32_0 : i32, i32
  }
  func.func @transform_16(%arg0: i32) -> (i32, i32) {
    %c0_i32 = arith.constant 0 : i32
    %c0_i32_0 = arith.constant 0 : i32
    %c0_i32_1 = arith.constant 0 : i32
    return %c0_i32, %c0_i32_0 : i32, i32
  }
  func.func @transform_17(%arg0: i32) -> (i32, i32) {
    %c0_i32 = arith.constant 0 : i32
    %c0_i32_0 = arith.constant 0 : i32
    %c0_i32_1 = arith.constant 0 : i32
    return %c0_i32, %c0_i32_0 : i32, i32
  }
  func.func @transform_18(%arg0: i32) -> (i32, i32) {
    %c0_i32 = arith.constant 0 : i32
    %c0_i32_0 = arith.constant 0 : i32
    %c0_i32_1 = arith.constant 0 : i32
    return %c0_i32, %c0_i32_0 : i32, i32
  }
  func.func @transform_19(%arg0: i32) -> (i32, i32) {
    %c0_i32 = arith.constant 0 : i32
    %c0_i32_0 = arith.constant 0 : i32
    %c0_i32_1 = arith.constant 0 : i32
    return %c0_i32, %c0_i32_0 : i32, i32
  }
  func.func @transform_20(%arg0: i32) -> (i32, i32) {
    %c0_i32 = arith.constant 0 : i32
    %c0_i32_0 = arith.constant 0 : i32
    %c0_i32_1 = arith.constant 0 : i32
    return %c0_i32, %c0_i32_0 : i32, i32
  }
  func.func @transform_21(%arg0: i32) -> (i32, i32) {
    %c0_i32 = arith.constant 0 : i32
    %c0_i32_0 = arith.constant 0 : i32
    %c0_i32_1 = arith.constant 0 : i32
    return %c0_i32, %c0_i32_0 : i32, i32
  }
  func.func @transform_22(%arg0: i32) -> (i32, i32) {
    %c0_i32 = arith.constant 0 : i32
    %c0_i32_0 = arith.constant 0 : i32
    %c0_i32_1 = arith.constant 0 : i32
    return %c0_i32, %c0_i32_0 : i32, i32
  }
  func.func @transform_23(%arg0: i32) -> (i32, i32) {
    %c0_i32 = arith.constant 0 : i32
    %c0_i32_0 = arith.constant 0 : i32
    %c0_i32_1 = arith.constant 0 : i32
    return %c0_i32, %c0_i32_0 : i32, i32
  }
  func.func @transform_24(%arg0: i32) -> (i32, i32) {
    %c0_i32 = arith.constant 0 : i32
    %c0_i32_0 = arith.constant 0 : i32
    %c0_i32_1 = arith.constant 0 : i32
    return %c0_i32, %c0_i32_0 : i32, i32
  }
  func.func @transform_25(%arg0: i32) -> (i32, i32) {
    %c0_i32 = arith.constant 0 : i32
    %c0_i32_0 = arith.constant 0 : i32
    %c0_i32_1 = arith.constant 0 : i32
    return %c0_i32, %c0_i32_0 : i32, i32
  }
  func.func @transform_26(%arg0: i32) -> (i32, i32) {
    %c0_i32 = arith.constant 0 : i32
    %c0_i32_0 = arith.constant 0 : i32
    %c0_i32_1 = arith.constant 0 : i32
    return %c0_i32, %c0_i32_0 : i32, i32
  }
  func.func @transform_27(%arg0: i32) -> (i32, i32) {
    %c0_i32 = arith.constant 0 : i32
    %c0_i32_0 = arith.constant 0 : i32
    %c0_i32_1 = arith.constant 0 : i32
    return %c0_i32, %c0_i32_0 : i32, i32
  }
  func.func @transform_28(%arg0: i32) -> (i32, i32, i32) {
    %c0_i32 = arith.constant 0 : i32
    %c0_i32_0 = arith.constant 0 : i32
    %c0_i32_1 = arith.constant 0 : i32
    return %arg0, %c0_i32, %c0_i32_0 : i32, i32, i32
  }
}

</mosaic_0001>

<llo_original>
// kernel: tpu_custom_call.1
$region0: #{tpu_custom_call.1}
  #allocation0 [shape = 'u32[]', space=smem, size = 0x4, offset = 0x4, fixed_abs, tag = 'smem constant byte address 0x4 - core index']
  #allocation1 [shape = 'u32[144,128]{1,0:T(1,128)}', space=vmem, size = 0x12000, scoped, tag = 'internal scratch']
  %s0 = inlined_call_operand.hbm [shape: f32[2,32,128], index: 0, kind: input, shape index: {}]
  %s1 = inlined_call_operand.hbm [shape: f32[2,1,128], index: 1, kind: input, shape index: {}]
  %s2 = inlined_call_operand.hbm [shape: f32[32,1], index: 2, kind: input, shape index: {}]
  %s3 = inlined_call_operand.hbm [shape: f32[32,1], index: 3, kind: input, shape index: {}]
  %s4 = inlined_call_operand.hbm [shape: f32[32,1], index: 4, kind: input, shape index: {}]
  %s5 = inlined_call_operand.hbm [shape: f32[32,1], index: 5, kind: input, shape index: {}]
  %s6 = inlined_call_operand.hbm [shape: f32[32,1], index: 6, kind: input, shape index: {}]
  %s7 = inlined_call_operand.hbm [shape: f32[32,1], index: 7, kind: input, shape index: {}]
  %s8 = inlined_call_operand.hbm [shape: f32[96,32], index: 8, kind: input, shape index: {}]
  %s9 = inlined_call_operand.hbm [shape: f32[96,1], index: 9, kind: input, shape index: {}]
  %s10 = inlined_call_operand.hbm [shape: f32[96,7], index: 10, kind: input, shape index: {}]
  %s11 = inlined_call_operand.hbm [shape: f32[96,1], index: 11, kind: input, shape index: {}]
  %s12 = inlined_call_operand.hbm [shape: f32[32,32], index: 12, kind: input, shape index: {}]
  %s13 = inlined_call_operand.hbm [shape: f32[32,1], index: 13, kind: input, shape index: {}]
  %s14 = inlined_call_operand.hbm [shape: f32[32,32], index: 14, kind: input, shape index: {}]
  %s15 = inlined_call_operand.hbm [shape: f32[32,1], index: 15, kind: input, shape index: {}]
  %s16 = inlined_call_operand.hbm [shape: f32[32,32], index: 16, kind: input, shape index: {}]
  %s17 = inlined_call_operand.hbm [shape: f32[32,32], index: 17, kind: input, shape index: {}]
  %s18 = inlined_call_operand.hbm [shape: f32[32,1], index: 18, kind: input, shape index: {}]
  %s19 = inlined_call_operand.hbm [shape: f32[32,32], index: 19, kind: input, shape index: {}]
  %s20 = inlined_call_operand.hbm [shape: f32[32,1], index: 20, kind: input, shape index: {}]
  %s21 = inlined_call_operand.hbm [shape: f32[32,1], index: 21, kind: input, shape index: {}]
  %s22 = inlined_call_operand.hbm [shape: f32[128,32], index: 22, kind: input, shape index: {}]
  %s23 = inlined_call_operand.hbm [shape: f32[128,1], index: 23, kind: input, shape index: {}]
  %s24 = inlined_call_operand.hbm [shape: f32[128,5], index: 24, kind: input, shape index: {}]
  %s25 = inlined_call_operand.hbm [shape: f32[128,1], index: 25, kind: input, shape index: {}]
  %s26 = inlined_call_operand.hbm [shape: f32[32,128], index: 26, kind: input, shape index: {}]
  %s27 = inlined_call_operand.hbm [shape: f32[32,1], index: 27, kind: input, shape index: {}]
  %s28 = inlined_call_operand.hbm [shape: f32[2,32,128], index: 28, kind: output, shape index: {}]
  %s29 = sld [smem:[#allocation0]]
  $region257: #{tpu_custom_call.1} parent=0
    _
  %s31 = ssub.s32 1, %s29
  %s32 = scalar_select 0, %s31, %s29
  $region1: #{tpu_custom_call.1} parent=0
    #allocation2 [shape = 'u8[32768]{0}', space=vmem, size = 0x8000, scoped, tag = 'input window, operand 0']
    #allocation3 [shape = 's32[2]{0}', space=sflag, size = 0x8, scoped, tag = 'scoped memory for tpu_custom_call.1']
    #allocation4 [shape = 's32[2]{0}', space=sflag, size = 0x8, scoped, tag = 'scoped memory for tpu_custom_call.1']
    #allocation5 [shape = 'u8[1024]{0}', space=vmem, size = 0x400, scoped, tag = 'input window, operand 1']
    #allocation6 [shape = 's32[2]{0}', space=sflag, size = 0x8, scoped, tag = 'scoped memory for tpu_custom_call.1']
    #allocation7 [shape = 'u8[16384]{0}', space=vmem, size = 0x4000, scoped, tag = 'input window, operand 2, single buffered']
    #allocation8 [shape = 'u8[16384]{0}', space=vmem, size = 0x4000, scoped, tag = 'input window, operand 3, single buffered']
    #allocation9 [shape = 's32[1]{0}', space=sflag, size = 0x4, scoped, tag = 'scoped memory for tpu_custom_call.1']
    #allocation10 [shape = 'u8[16384]{0}', space=vmem, size = 0x4000, scoped, tag = 'input window, operand 4, single buffered']
    #allocation11 [shape = 'u8[16384]{0}', space=vmem, size = 0x4000, scoped, tag = 'input window, operand 5, single buffered']
    #allocation12 [shape = 's32[1]{0}', space=sflag, size = 0x4, scoped, tag = 'scoped memory for tpu_custom_call.1']
    #allocation13 [shape = 'u8[16384]{0}', space=vmem, size = 0x4000, scoped, tag = 'input window, operand 6, single buffered']
    #allocation14 [shape = 'u8[16384]{0}', space=vmem, size = 0x4000, scoped, tag = 'input window, operand 7, single buffered']
    #allocation15 [shape = 's32[1]{0}', space=sflag, size = 0x4, scoped, tag = 'scoped memory for tpu_custom_call.1']
    #allocation16 [shape = 'u8[49152]{0}', space=vmem, size = 0xc000, scoped, tag = 'input window, operand 8, single buffered']
    #allocation17 [shape = 'u8[49152]{0}', space=vmem, size = 0xc000, scoped, tag = 'input window, operand 9, single buffered']
    #allocation18 [shape = 's32[1]{0}', space=sflag, size = 0x4, scoped, tag = 'scoped memory for tpu_custom_call.1']
    #allocation19 [shape = 'u8[49152]{0}', space=vmem, size = 0xc000, scoped, tag = 'input window, operand 10, single buffered']
    #allocation20 [shape = 'u8[49152]{0}', space=vmem, size = 0xc000, scoped, tag = 'input window, operand 11, single buffered']
    #allocation21 [shape = 's32[1]{0}', space=sflag, size = 0x4, scoped, tag = 'scoped memory for tpu_custom_call.1']
    #allocation22 [shape = 'u8[16384]{0}', space=vmem, size = 0x4000, scoped, tag = 'input window, operand 12, single buffered']
    #allocation23 [shape = 'u8[16384]{0}', space=vmem, size = 0x4000, scoped, tag = 'input window, operand 13, single buffered']
    #allocation24 [shape = 's32[1]{0}', space=sflag, size = 0x4, scoped, tag = 'scoped memory for tpu_custom_call.1']
    #allocation25 [shape = 'u8[16384]{0}', space=vmem, size = 0x4000, scoped, tag = 'input window, operand 14, single buffered']
    #allocation26 [shape = 'u8[16384]{0}', space=vmem, size = 0x4000, scoped, tag = 'input window, operand 15, single buffered']
    #allocation27 [shape = 's32[1]{0}', space=sflag, size = 0x4, scoped, tag = 'scoped memory for tpu_custom_call.1']
    #allocation28 [shape = 'u8[16384]{0}', space=vmem, size = 0x4000, scoped, tag = 'input window, operand 16, single buffered']
    #allocation29 [shape = 'u8[16384]{0}', space=vmem, size = 0x4000, scoped, tag = 'input window, operand 17, single buffered']
    #allocation30 [shape = 's32[1]{0}', space=sflag, size = 0x4, scoped, tag = 'scoped memory for tpu_custom_call.1']
    #allocation31 [shape = 'u8[16384]{0}', space=vmem, size = 0x4000, scoped, tag = 'input window, operand 18, single buffered']
    #allocation32 [shape = 'u8[16384]{0}', space=vmem, size = 0x4000, scoped, tag = 'input window, operand 19, single buffered']
    #allocation33 [shape = 's32[1]{0}', space=sflag, size = 0x4, scoped, tag = 'scoped memory for tpu_custom_call.1']
    #allocation34 [shape = 'u8[16384]{0}', space=vmem, size = 0x4000, scoped, tag = 'input window, operand 20, single buffered']
    #allocation35 [shape = 'u8[16384]{0}', space=vmem, size = 0x4000, scoped, tag = 'input window, operand 21, single buffered']
    #allocation36 [shape = 's32[1]{0}', space=sflag, size = 0x4, scoped, tag = 'scoped memory for tpu_custom_call.1']
    #allocation37 [shape = 'u8[65536]{0}', space=vmem, size = 0x10000, scoped, tag = 'input window, operand 22, single buffered']
    #allocation38 [shape = 'u8[65536]{0}', space=vmem, size = 0x10000, scoped, tag = 'input window, operand 23, single buffered']
    #allocation39 [shape = 's32[1]{0}', space=sflag, size = 0x4, scoped, tag = 'scoped memory for tpu_custom_call.1']
    #allocation40 [shape = 'u8[65536]{0}', space=vmem, size = 0x10000, scoped, tag = 'input window, operand 24, single buffered']
    #allocation41 [shape = 'u8[65536]{0}', space=vmem, size = 0x10000, scoped, tag = 'input window, operand 25, single buffered']
    #allocation42 [shape = 's32[1]{0}', space=sflag, size = 0x4, scoped, tag = 'scoped memory for tpu_custom_call.1']
    #allocation43 [shape = 'u8[16384]{0}', space=vmem, size = 0x4000, scoped, tag = 'input window, operand 26, single buffered']
    #allocation44 [shape = 'u8[16384]{0}', space=vmem, size = 0x4000, scoped, tag = 'input window, operand 27, single buffered']
    #allocation45 [shape = 's32[1]{0}', space=sflag, size = 0x4, scoped, tag = 'scoped memory for tpu_custom_call.1']
    #allocation46 [shape = 'u8[32768]{0}', space=vmem, size = 0x8000, scoped, tag = 'output window, operand 0']
    %33 = vsyncpa [#allocation3], 0
    %s34 = scalar_lea.sflag [#allocation3], 1
    %35 = vsyncpa %s34, 0
    %36 = vsyncpa [#allocation6], 0
    %s37 = scalar_lea.sflag [#allocation6], 1
    %38 = vsyncpa %s37, 0
    %39 = vsyncpa [#allocation9], 0
    %40 = vsyncpa [#allocation12], 0
    %41 = vsyncpa [#allocation15], 0
    %42 = vsyncpa [#allocation18], 0
    %43 = vsyncpa [#allocation21], 0
    %44 = vsyncpa [#allocation24], 0
    %45 = vsyncpa [#allocation27], 0
    %46 = vsyncpa [#allocation30], 0
    %47 = vsyncpa [#allocation33], 0
    %48 = vsyncpa [#allocation36], 0
    %49 = vsyncpa [#allocation39], 0
    %50 = vsyncpa [#allocation42], 0
    %51 = vsyncpa [#allocation45], 0
    %52 = vsyncpa [#allocation4], 0
    %s53 = scalar_lea.sflag [#allocation4], 1
    %54 = vsyncpa %s53, 0
    loop: start=0, step=1, limit=4
    $region2: #{tpu_custom_call.1} parent=1 // loop_pre_header
      _
    $region3: #{tpu_custom_call.1} parent=1 // loop_header
      %s56 = sphi 0, %s60
      %p57 = scmp.ge.s32.totalorder %s56, 4
      %s66 = sphi 0, %s68
      %s69 = sphi 0, %s66
      %s70 = sphi 0, %s69
      %s86 = sphi 0, %s70
      %s92 = sphi 0, %s94
      %s95 = sphi 0, %s92
      %s96 = sphi 0, %s95
      %s112 = sphi 0, %s96
      %s116 = sphi 0, %s116
      %s118 = sphi 0, %s116
      %s119 = sphi 0, %s118
      %s133 = sphi 0, %s119
      %s137 = sphi 0, %s137
      %s139 = sphi 0, %s137
      %s140 = sphi 0, %s139
      %s154 = sphi 0, %s140
      %s158 = sphi 0, %s158
      %s160 = sphi 0, %s158
      %s161 = sphi 0, %s160
      %s175 = sphi 0, %s161
      %s179 = sphi 0, %s179
      %s181 = sphi 0, %s179
      %s182 = sphi 0, %s181
      %s196 = sphi 0, %s182
      %s200 = sphi 0, %s200
      %s202 = sphi 0, %s200
      %s203 = sphi 0, %s202
      %s217 = sphi 0, %s203
      %s221 = sphi 0, %s221
      %s223 = sphi 0, %s221
      %s224 = sphi 0, %s223
      %s238 = sphi 0, %s224
      %s242 = sphi 0, %s242
      %s244 = sphi 0, %s242
      %s245 = sphi 0, %s244
      %s259 = sphi 0, %s245
      %s263 = sphi 0, %s263
      %s265 = sphi 0, %s263
      %s266 = sphi 0, %s265
      %s280 = sphi 0, %s266
      %s284 = sphi 0, %s284
      %s286 = sphi 0, %s284
      %s287 = sphi 0, %s286
      %s301 = sphi 0, %s287
      %s305 = sphi 0, %s305
      %s307 = sphi 0, %s305
      %s308 = sphi 0, %s307
      %s322 = sphi 0, %s308
      %s326 = sphi 0, %s326
      %s328 = sphi 0, %s326
      %s329 = sphi 0, %s328
      %s343 = sphi 0, %s329
      %s347 = sphi 0, %s347
      %s349 = sphi 0, %s347
      %s350 = sphi 0, %s349
      %s364 = sphi 0, %s350
      %s368 = sphi 0, %s368
      %s370 = sphi 0, %s368
      %s371 = sphi 0, %s370
      %s385 = sphi 0, %s371
      %s389 = sphi 0, %s389
      %s391 = sphi 0, %s389
      %s392 = sphi 0, %s391
      %s406 = sphi 0, %s392
      %s410 = sphi 0, %s410
      %s412 = sphi 0, %s410
      %s413 = sphi 0, %s412
      %s427 = sphi 0, %s413
      %s431 = sphi 0, %s431
      %s433 = sphi 0, %s431
      %s434 = sphi 0, %s433
      %s448 = sphi 0, %s434
      %s452 = sphi 0, %s452
      %s454 = sphi 0, %s452
      %s455 = sphi 0, %s454
      %s469 = sphi 0, %s455
      %s473 = sphi 0, %s473
      %s475 = sphi 0, %s473
      %s476 = sphi 0, %s475
      %s490 = sphi 0, %s476
      %s494 = sphi 0, %s494
      %s496 = sphi 0, %s494
      %s497 = sphi 0, %s496
      %s511 = sphi 0, %s497
      %s515 = sphi 0, %s515
      %s517 = sphi 0, %s515
      %s518 = sphi 0, %s517
      %s532 = sphi 0, %s518
      %s536 = sphi 0, %s536
      %s538 = sphi 0, %s536
      %s539 = sphi 0, %s538
      %s553 = sphi 0, %s539
      %s557 = sphi 0, %s557
      %s559 = sphi 0, %s557
      %s560 = sphi 0, %s559
      %s574 = sphi 0, %s560
      %s578 = sphi 0, %s578
      %s580 = sphi 0, %s578
      %s581 = sphi 0, %s580
      %s595 = sphi 0, %s581
      %s599 = sphi 0, %s599
      %s601 = sphi 0, %s599
      %s602 = sphi 0, %s601
      %s616 = sphi 0, %s602
      %s620 = sphi 0, %s620
      %s622 = sphi 0, %s620
      %s623 = sphi 0, %s622
      %s637 = sphi 0, %s623
      %s641 = sphi 0, %s641
      %s643 = sphi 0, %s641
      %s644 = sphi 0, %s643
      %s658 = sphi 0, %s644
      %s664 = sphi 0, %s666
      %s667 = sphi 0, %s664
      %s668 = sphi 0, %s667
      %s684 = sphi 0, %s668
    $region4: #{tpu_custom_call.1} parent=1 // loop_header_branch
      %59 = sbr.rel (%p57) target = $region8
    $region5: #{tpu_custom_call.1} parent=1 // loop_body
      %s61 = ssub.s32 %s56, 1
      %s62 = ssub.s32 %s56, 2
      %s63 = sadd.s32 %s56, 1
      %s64 = ssub.s32 %s56, %s63
      %p65 = scmp.eq.s32.totalorder %s64, 0
      %s67 = sadd.s32 %s66, 1
      %s68 = scalar_select %p65, %s66, %s67
      %p71 = pneg %p65
      %p72 = scmp.eq.s32.totalorder %s56, 1
      %p73 = por %p71, %p72
      %p74 = scmp.ne.s32.totalorder %s66, %s69
      %p75 = scmp.eq.s32.totalorder %s56, 0
      %p76 = por %p74, %p75
      %p77 = scmp.ne.s32.totalorder %s66, %s69
      %p78 = scmp.eq.s32.totalorder %s61, 1
      %p79 = por %p77, %p78
      %p80 = scmp.ne.s32.totalorder %s69, %s70
      %p81 = scmp.eq.s32.totalorder %s61, 0
      %p82 = por %p80, %p81
      %p83 = scmp.ne.s32.totalorder %s69, %s70
      %p84 = scmp.eq.s32.totalorder %s62, 1
      %p85 = por %p83, %p84
      %p87 = scmp.ne.s32.totalorder %s70, %s86
      %p88 = scmp.eq.s32.totalorder %s62, 0
      %p89 = por %p87, %p88
      %s90 = ssub.s32 %s56, %s63
      %p91 = scmp.eq.s32.totalorder %s90, 0
      %s93 = sadd.s32 %s92, 1
      %s94 = scalar_select %p91, %s92, %s93
      %p97 = pneg %p91
      %p98 = scmp.eq.s32.totalorder %s56, 1
      %p99 = por %p97, %p98
      %p100 = scmp.ne.s32.totalorder %s92, %s95
      %p101 = scmp.eq.s32.totalorder %s56, 0
      %p102 = por %p100, %p101
      %p103 = scmp.ne.s32.totalorder %s92, %s95
      %p104 = scmp.eq.s32.totalorder %s61, 1
      %p105 = por %p103, %p104
      %p106 = scmp.ne.s32.totalorder %s95, %s96
      %p107 = scmp.eq.s32.totalorder %s61, 0
      %p108 = por %p106, %p107
      %p109 = scmp.ne.s32.totalorder %s95, %s96
      %p110 = scmp.eq.s32.totalorder %s62, 1
      %p111 = por %p109, %p110
      %p113 = scmp.ne.s32.totalorder %s96, %s112
      %p114 = scmp.eq.s32.totalorder %s62, 0
      %p115 = por %p113, %p114
      %s117 = sadd.s32 %s116, 1
      %p120 = scmp.eq.s32.totalorder %s56, 1
      %p121 = scmp.ne.s32.totalorder %s116, %s118
      %p122 = scmp.eq.s32.totalorder %s56, 0
      %p123 = por %p121, %p122
      %p124 = scmp.ne.s32.totalorder %s116, %s118
      %p125 = scmp.eq.s32.totalorder %s61, 1
      %p126 = por %p124, %p125
      %p127 = scmp.ne.s32.totalorder %s118, %s119
      %p128 = scmp.eq.s32.totalorder %s61, 0
      %p129 = por %p127, %p128
      %p130 = scmp.ne.s32.totalorder %s118, %s119
      %p131 = scmp.eq.s32.totalorder %s62, 1
      %p132 = por %p130, %p131
      %p134 = scmp.ne.s32.totalorder %s119, %s133
      %p135 = scmp.eq.s32.totalorder %s62, 0
      %p136 = por %p134, %p135
      %s138 = sadd.s32 %s137, 1
      %p141 = scmp.eq.s32.totalorder %s56, 1
      %p142 = scmp.ne.s32.totalorder %s137, %s139
      %p143 = scmp.eq.s32.totalorder %s56, 0
      %p144 = por %p142, %p143
      %p145 = scmp.ne.s32.totalorder %s137, %s139
      %p146 = scmp.eq.s32.totalorder %s61, 1
      %p147 = por %p145, %p146
      %p148 = scmp.ne.s32.totalorder %s139, %s140
      %p149 = scmp.eq.s32.totalorder %s61, 0
      %p150 = por %p148, %p149
      %p151 = scmp.ne.s32.totalorder %s139, %s140
      %p152 = scmp.eq.s32.totalorder %s62, 1
      %p153 = por %p151, %p152
      %p155 = scmp.ne.s32.totalorder %s140, %s154
      %p156 = scmp.eq.s32.totalorder %s62, 0
      %p157 = por %p155, %p156
      %s159 = sadd.s32 %s158, 1
      %p162 = scmp.eq.s32.totalorder %s56, 1
      %p163 = scmp.ne.s32.totalorder %s158, %s160
      %p164 = scmp.eq.s32.totalorder %s56, 0
      %p165 = por %p163, %p164
      %p166 = scmp.ne.s32.totalorder %s158, %s160
      %p167 = scmp.eq.s32.totalorder %s61, 1
      %p168 = por %p166, %p167
      %p169 = scmp.ne.s32.totalorder %s160, %s161
      %p170 = scmp.eq.s32.totalorder %s61, 0
      %p171 = por %p169, %p170
      %p172 = scmp.ne.s32.totalorder %s160, %s161
      %p173 = scmp.eq.s32.totalorder %s62, 1
      %p174 = por %p172, %p173
      %p176 = scmp.ne.s32.totalorder %s161, %s175
      %p177 = scmp.eq.s32.totalorder %s62, 0
      %p178 = por %p176, %p177
      %s180 = sadd.s32 %s179, 1
      %p183 = scmp.eq.s32.totalorder %s56, 1
      %p184 = scmp.ne.s32.totalorder %s179, %s181
      %p185 = scmp.eq.s32.totalorder %s56, 0
      %p186 = por %p184, %p185
      %p187 = scmp.ne.s32.totalorder %s179, %s181
      %p188 = scmp.eq.s32.totalorder %s61, 1
      %p189 = por %p187, %p188
      %p190 = scmp.ne.s32.totalorder %s181, %s182
      %p191 = scmp.eq.s32.totalorder %s61, 0
      %p192 = por %p190, %p191
      %p193 = scmp.ne.s32.totalorder %s181, %s182
      %p194 = scmp.eq.s32.totalorder %s62, 1
      %p195 = por %p193, %p194
      %p197 = scmp.ne.s32.totalorder %s182, %s196
      %p198 = scmp.eq.s32.totalorder %s62, 0
      %p199 = por %p197, %p198
      %s201 = sadd.s32 %s200, 1
      %p204 = scmp.eq.s32.totalorder %s56, 1
      %p205 = scmp.ne.s32.totalorder %s200, %s202
      %p206 = scmp.eq.s32.totalorder %s56, 0
      %p207 = por %p205, %p206
      %p208 = scmp.ne.s32.totalorder %s200, %s202
      %p209 = scmp.eq.s32.totalorder %s61, 1
      %p210 = por %p208, %p209
      %p211 = scmp.ne.s32.totalorder %s202, %s203
      %p212 = scmp.eq.s32.totalorder %s61, 0
      %p213 = por %p211, %p212
      %p214 = scmp.ne.s32.totalorder %s202, %s203
      %p215 = scmp.eq.s32.totalorder %s62, 1
      %p216 = por %p214, %p215
      %p218 = scmp.ne.s32.totalorder %s203, %s217
      %p219 = scmp.eq.s32.totalorder %s62, 0
      %p220 = por %p218, %p219
      %s222 = sadd.s32 %s221, 1
      %p225 = scmp.eq.s32.totalorder %s56, 1
      %p226 = scmp.ne.s32.totalorder %s221, %s223
      %p227 = scmp.eq.s32.totalorder %s56, 0
      %p228 = por %p226, %p227
      %p229 = scmp.ne.s32.totalorder %s221, %s223
      %p230 = scmp.eq.s32.totalorder %s61, 1
      %p231 = por %p229, %p230
      %p232 = scmp.ne.s32.totalorder %s223, %s224
      %p233 = scmp.eq.s32.totalorder %s61, 0
      %p234 = por %p232, %p233
      %p235 = scmp.ne.s32.totalorder %s223, %s224
      %p236 = scmp.eq.s32.totalorder %s62, 1
      %p237 = por %p235, %p236
      %p239 = scmp.ne.s32.totalorder %s224, %s238
      %p240 = scmp.eq.s32.totalorder %s62, 0
      %p241 = por %p239, %p240
      %s243 = sadd.s32 %s242, 1
      %p246 = scmp.eq.s32.totalorder %s56, 1
      %p247 = scmp.ne.s32.totalorder %s242, %s244
      %p248 = scmp.eq.s32.totalorder %s56, 0
      %p249 = por %p247, %p248
      %p250 = scmp.ne.s32.totalorder %s242, %s244
      %p251 = scmp.eq.s32.totalorder %s61, 1
      %p252 = por %p250, %p251
      %p253 = scmp.ne.s32.totalorder %s244, %s245
      %p254 = scmp.eq.s32.totalorder %s61, 0
      %p255 = por %p253, %p254
      %p256 = scmp.ne.s32.totalorder %s244, %s245
      %p257 = scmp.eq.s32.totalorder %s62, 1
      %p258 = por %p256, %p257
      %p260 = scmp.ne.s32.totalorder %s245, %s259
      %p261 = scmp.eq.s32.totalorder %s62, 0
      %p262 = por %p260, %p261
      %s264 = sadd.s32 %s263, 1
      %p267 = scmp.eq.s32.totalorder %s56, 1
      %p268 = scmp.ne.s32.totalorder %s263, %s265
      %p269 = scmp.eq.s32.totalorder %s56, 0
      %p270 = por %p268, %p269
      %p271 = scmp.ne.s32.totalorder %s263, %s265
      %p272 = scmp.eq.s32.totalorder %s61, 1
      %p273 = por %p271, %p272
      %p274 = scmp.ne.s32.totalorder %s265, %s266
      %p275 = scmp.eq.s32.totalorder %s61, 0
      %p276 = por %p274, %p275
      %p277 = scmp.ne.s32.totalorder %s265, %s266
      %p278 = scmp.eq.s32.totalorder %s62, 1
      %p279 = por %p277, %p278
      %p281 = scmp.ne.s32.totalorder %s266, %s280
      %p282 = scmp.eq.s32.totalorder %s62, 0
      %p283 = por %p281, %p282
      %s285 = sadd.s32 %s284, 1
      %p288 = scmp.eq.s32.totalorder %s56, 1
      %p289 = scmp.ne.s32.totalorder %s284, %s286
      %p290 = scmp.eq.s32.totalorder %s56, 0
      %p291 = por %p289, %p290
      %p292 = scmp.ne.s32.totalorder %s284, %s286
      %p293 = scmp.eq.s32.totalorder %s61, 1
      %p294 = por %p292, %p293
      %p295 = scmp.ne.s32.totalorder %s286, %s287
      %p296 = scmp.eq.s32.totalorder %s61, 0
      %p297 = por %p295, %p296
      %p298 = scmp.ne.s32.totalorder %s286, %s287
      %p299 = scmp.eq.s32.totalorder %s62, 1
      %p300 = por %p298, %p299
      %p302 = scmp.ne.s32.totalorder %s287, %s301
      %p303 = scmp.eq.s32.totalorder %s62, 0
      %p304 = por %p302, %p303
      %s306 = sadd.s32 %s305, 1
      %p309 = scmp.eq.s32.totalorder %s56, 1
      %p310 = scmp.ne.s32.totalorder %s305, %s307
      %p311 = scmp.eq.s32.totalorder %s56, 0
      %p312 = por %p310, %p311
      %p313 = scmp.ne.s32.totalorder %s305, %s307
      %p314 = scmp.eq.s32.totalorder %s61, 1
      %p315 = por %p313, %p314
      %p316 = scmp.ne.s32.totalorder %s307, %s308
      %p317 = scmp.eq.s32.totalorder %s61, 0
      %p318 = por %p316, %p317
      %p319 = scmp.ne.s32.totalorder %s307, %s308
      %p320 = scmp.eq.s32.totalorder %s62, 1
      %p321 = por %p319, %p320
      %p323 = scmp.ne.s32.totalorder %s308, %s322
      %p324 = scmp.eq.s32.totalorder %s62, 0
      %p325 = por %p323, %p324
      %s327 = sadd.s32 %s326, 1
      %p330 = scmp.eq.s32.totalorder %s56, 1
      %p331 = scmp.ne.s32.totalorder %s326, %s328
      %p332 = scmp.eq.s32.totalorder %s56, 0
      %p333 = por %p331, %p332
      %p334 = scmp.ne.s32.totalorder %s326, %s328
      %p335 = scmp.eq.s32.totalorder %s61, 1
      %p336 = por %p334, %p335
      %p337 = scmp.ne.s32.totalorder %s328, %s329
      %p338 = scmp.eq.s32.totalorder %s61, 0
      %p339 = por %p337, %p338
      %p340 = scmp.ne.s32.totalorder %s328, %s329
      %p341 = scmp.eq.s32.totalorder %s62, 1
      %p342 = por %p340, %p341
      %p344 = scmp.ne.s32.totalorder %s329, %s343
      %p345 = scmp.eq.s32.totalorder %s62, 0
      %p346 = por %p344, %p345
      %s348 = sadd.s32 %s347, 1
      %p351 = scmp.eq.s32.totalorder %s56, 1
      %p352 = scmp.ne.s32.totalorder %s347, %s349
      %p353 = scmp.eq.s32.totalorder %s56, 0
      %p354 = por %p352, %p353
      %p355 = scmp.ne.s32.totalorder %s347, %s349
      %p356 = scmp.eq.s32.totalorder %s61, 1
      %p357 = por %p355, %p356
      %p358 = scmp.ne.s32.totalorder %s349, %s350
      %p359 = scmp.eq.s32.totalorder %s61, 0
      %p360 = por %p358, %p359
      %p361 = scmp.ne.s32.totalorder %s349, %s350
      %p362 = scmp.eq.s32.totalorder %s62, 1
      %p363 = por %p361, %p362
      %p365 = scmp.ne.s32.totalorder %s350, %s364
      %p366 = scmp.eq.s32.totalorder %s62, 0
      %p367 = por %p365, %p366
      %s369 = sadd.s32 %s368, 1
      %p372 = scmp.eq.s32.totalorder %s56, 1
      %p373 = scmp.ne.s32.totalorder %s368, %s370
      %p374 = scmp.eq.s32.totalorder %s56, 0
      %p375 = por %p373, %p374
      %p376 = scmp.ne.s32.totalorder %s368, %s370
      %p377 = scmp.eq.s32.totalorder %s61, 1
      %p378 = por %p376, %p377
      %p379 = scmp.ne.s32.totalorder %s370, %s371
      %p380 = scmp.eq.s32.totalorder %s61, 0
      %p381 = por %p379, %p380
      %p382 = scmp.ne.s32.totalorder %s370, %s371
      %p383 = scmp.eq.s32.totalorder %s62, 1
      %p384 = por %p382, %p383
      %p386 = scmp.ne.s32.totalorder %s371, %s385
      %p387 = scmp.eq.s32.totalorder %s62, 0
      %p388 = por %p386, %p387
      %s390 = sadd.s32 %s389, 1
      %p393 = scmp.eq.s32.totalorder %s56, 1
      %p394 = scmp.ne.s32.totalorder %s389, %s391
      %p395 = scmp.eq.s32.totalorder %s56, 0
      %p396 = por %p394, %p395
      %p397 = scmp.ne.s32.totalorder %s389, %s391
      %p398 = scmp.eq.s32.totalorder %s61, 1
      %p399 = por %p397, %p398
      %p400 = scmp.ne.s32.totalorder %s391, %s392
      %p401 = scmp.eq.s32.totalorder %s61, 0
      %p402 = por %p400, %p401
      %p403 = scmp.ne.s32.totalorder %s391, %s392
      %p404 = scmp.eq.s32.totalorder %s62, 1
      %p405 = por %p403, %p404
      %p407 = scmp.ne.s32.totalorder %s392, %s406
      %p408 = scmp.eq.s32.totalorder %s62, 0
      %p409 = por %p407, %p408
      %s411 = sadd.s32 %s410, 1
      %p414 = scmp.eq.s32.totalorder %s56, 1
      %p415 = scmp.ne.s32.totalorder %s410, %s412
      %p416 = scmp.eq.s32.totalorder %s56, 0
      %p417 = por %p415, %p416
      %p418 = scmp.ne.s32.totalorder %s410, %s412
      %p419 = scmp.eq.s32.totalorder %s61, 1
      %p420 = por %p418, %p419
      %p421 = scmp.ne.s32.totalorder %s412, %s413
      %p422 = scmp.eq.s32.totalorder %s61, 0
      %p423 = por %p421, %p422
      %p424 = scmp.ne.s32.totalorder %s412, %s413
      %p425 = scmp.eq.s32.totalorder %s62, 1
      %p426 = por %p424, %p425
      %p428 = scmp.ne.s32.totalorder %s413, %s427
      %p429 = scmp.eq.s32.totalorder %s62, 0
      %p430 = por %p428, %p429
      %s432 = sadd.s32 %s431, 1
      %p435 = scmp.eq.s32.totalorder %s56, 1
      %p436 = scmp.ne.s32.totalorder %s431, %s433
      %p437 = scmp.eq.s32.totalorder %s56, 0
      %p438 = por %p436, %p437
      %p439 = scmp.ne.s32.totalorder %s431, %s433
      %p440 = scmp.eq.s32.totalorder %s61, 1
      %p441 = por %p439, %p440
      %p442 = scmp.ne.s32.totalorder %s433, %s434
      %p443 = scmp.eq.s32.totalorder %s61, 0
      %p444 = por %p442, %p443
      %p445 = scmp.ne.s32.totalorder %s433, %s434
      %p446 = scmp.eq.s32.totalorder %s62, 1
      %p447 = por %p445, %p446
      %p449 = scmp.ne.s32.totalorder %s434, %s448
      %p450 = scmp.eq.s32.totalorder %s62, 0
      %p451 = por %p449, %p450
      %s453 = sadd.s32 %s452, 1
      %p456 = scmp.eq.s32.totalorder %s56, 1
      %p457 = scmp.ne.s32.totalorder %s452, %s454
      %p458 = scmp.eq.s32.totalorder %s56, 0
      %p459 = por %p457, %p458
      %p460 = scmp.ne.s32.totalorder %s452, %s454
      %p461 = scmp.eq.s32.totalorder %s61, 1
      %p462 = por %p460, %p461
      %p463 = scmp.ne.s32.totalorder %s454, %s455
      %p464 = scmp.eq.s32.totalorder %s61, 0
      %p465 = por %p463, %p464
      %p466 = scmp.ne.s32.totalorder %s454, %s455
      %p467 = scmp.eq.s32.totalorder %s62, 1
      %p468 = por %p466, %p467
      %p470 = scmp.ne.s32.totalorder %s455, %s469
      %p471 = scmp.eq.s32.totalorder %s62, 0
      %p472 = por %p470, %p471
      %s474 = sadd.s32 %s473, 1
      %p477 = scmp.eq.s32.totalorder %s56, 1
      %p478 = scmp.ne.s32.totalorder %s473, %s475
      %p479 = scmp.eq.s32.totalorder %s56, 0
      %p480 = por %p478, %p479
      %p481 = scmp.ne.s32.totalorder %s473, %s475
      %p482 = scmp.eq.s32.totalorder %s61, 1
      %p483 = por %p481, %p482
      %p484 = scmp.ne.s32.totalorder %s475, %s476
      %p485 = scmp.eq.s32.totalorder %s61, 0
      %p486 = por %p484, %p485
      %p487 = scmp.ne.s32.totalorder %s475, %s476
      %p488 = scmp.eq.s32.totalorder %s62, 1
      %p489 = por %p487, %p488
      %p491 = scmp.ne.s32.totalorder %s476, %s490
      %p492 = scmp.eq.s32.totalorder %s62, 0
      %p493 = por %p491, %p492
      %s495 = sadd.s32 %s494, 1
      %p498 = scmp.eq.s32.totalorder %s56, 1
      %p499 = scmp.ne.s32.totalorder %s494, %s496
      %p500 = scmp.eq.s32.totalorder %s56, 0
      %p501 = por %p499, %p500
      %p502 = scmp.ne.s32.totalorder %s494, %s496
      %p503 = scmp.eq.s32.totalorder %s61, 1
      %p504 = por %p502, %p503
      %p505 = scmp.ne.s32.totalorder %s496, %s497
      %p506 = scmp.eq.s32.totalorder %s61, 0
      %p507 = por %p505, %p506
      %p508 = scmp.ne.s32.totalorder %s496, %s497
      %p509 = scmp.eq.s32.totalorder %s62, 1
      %p510 = por %p508, %p509
      %p512 = scmp.ne.s32.totalorder %s497, %s511
      %p513 = scmp.eq.s32.totalorder %s62, 0
      %p514 = por %p512, %p513
      %s516 = sadd.s32 %s515, 1
      %p519 = scmp.eq.s32.totalorder %s56, 1
      %p520 = scmp.ne.s32.totalorder %s515, %s517
      %p521 = scmp.eq.s32.totalorder %s56, 0
      %p522 = por %p520, %p521
      %p523 = scmp.ne.s32.totalorder %s515, %s517
      %p524 = scmp.eq.s32.totalorder %s61, 1
      %p525 = por %p523, %p524
      %p526 = scmp.ne.s32.totalorder %s517, %s518
      %p527 = scmp.eq.s32.totalorder %s61, 0
      %p528 = por %p526, %p527
      %p529 = scmp.ne.s32.totalorder %s517, %s518
      %p530 = scmp.eq.s32.totalorder %s62, 1
      %p531 = por %p529, %p530
      %p533 = scmp.ne.s32.totalorder %s518, %s532
      %p534 = scmp.eq.s32.totalorder %s62, 0
      %p535 = por %p533, %p534
      %s537 = sadd.s32 %s536, 1
      %p540 = scmp.eq.s32.totalorder %s56, 1
      %p541 = scmp.ne.s32.totalorder %s536, %s538
      %p542 = scmp.eq.s32.totalorder %s56, 0
      %p543 = por %p541, %p542
      %p544 = scmp.ne.s32.totalorder %s536, %s538
      %p545 = scmp.eq.s32.totalorder %s61, 1
      %p546 = por %p544, %p545
      %p547 = scmp.ne.s32.totalorder %s538, %s539
      %p548 = scmp.eq.s32.totalorder %s61, 0
      %p549 = por %p547, %p548
      %p550 = scmp.ne.s32.totalorder %s538, %s539
      %p551 = scmp.eq.s32.totalorder %s62, 1
      %p552 = por %p550, %p551
      %p554 = scmp.ne.s32.totalorder %s539, %s553
      %p555 = scmp.eq.s32.totalorder %s62, 0
      %p556 = por %p554, %p555
      %s558 = sadd.s32 %s557, 1
      %p561 = scmp.eq.s32.totalorder %s56, 1
      %p562 = scmp.ne.s32.totalorder %s557, %s559
      %p563 = scmp.eq.s32.totalorder %s56, 0
      %p564 = por %p562, %p563
      %p565 = scmp.ne.s32.totalorder %s557, %s559
      %p566 = scmp.eq.s32.totalorder %s61, 1
      %p567 = por %p565, %p566
      %p568 = scmp.ne.s32.totalorder %s559, %s560
      %p569 = scmp.eq.s32.totalorder %s61, 0
      %p570 = por %p568, %p569
      %p571 = scmp.ne.s32.totalorder %s559, %s560
      %p572 = scmp.eq.s32.totalorder %s62, 1
      %p573 = por %p571, %p572
      %p575 = scmp.ne.s32.totalorder %s560, %s574
      %p576 = scmp.eq.s32.totalorder %s62, 0
      %p577 = por %p575, %p576
      %s579 = sadd.s32 %s578, 1
      %p582 = scmp.eq.s32.totalorder %s56, 1
      %p583 = scmp.ne.s32.totalorder %s578, %s580
      %p584 = scmp.eq.s32.totalorder %s56, 0
      %p585 = por %p583, %p584
      %p586 = scmp.ne.s32.totalorder %s578, %s580
      %p587 = scmp.eq.s32.totalorder %s61, 1
      %p588 = por %p586, %p587
      %p589 = scmp.ne.s32.totalorder %s580, %s581
      %p590 = scmp.eq.s32.totalorder %s61, 0
      %p591 = por %p589, %p590
      %p592 = scmp.ne.s32.totalorder %s580, %s581
      %p593 = scmp.eq.s32.totalorder %s62, 1
      %p594 = por %p592, %p593
      %p596 = scmp.ne.s32.totalorder %s581, %s595
      %p597 = scmp.eq.s32.totalorder %s62, 0
      %p598 = por %p596, %p597
      %s600 = sadd.s32 %s599, 1
      %p603 = scmp.eq.s32.totalorder %s56, 1
      %p604 = scmp.ne.s32.totalorder %s599, %s601
      %p605 = scmp.eq.s32.totalorder %s56, 0
      %p606 = por %p604, %p605
      %p607 = scmp.ne.s32.totalorder %s599, %s601
      %p608 = scmp.eq.s32.totalorder %s61, 1
      %p609 = por %p607, %p608
      %p610 = scmp.ne.s32.totalorder %s601, %s602
      %p611 = scmp.eq.s32.totalorder %s61, 0
      %p612 = por %p610, %p611
      %p613 = scmp.ne.s32.totalorder %s601, %s602
      %p614 = scmp.eq.s32.totalorder %s62, 1
      %p615 = por %p613, %p614
      %p617 = scmp.ne.s32.totalorder %s602, %s616
      %p618 = scmp.eq.s32.totalorder %s62, 0
      %p619 = por %p617, %p618
      %s621 = sadd.s32 %s620, 1
      %p624 = scmp.eq.s32.totalorder %s56, 1
      %p625 = scmp.ne.s32.totalorder %s620, %s622
      %p626 = scmp.eq.s32.totalorder %s56, 0
      %p627 = por %p625, %p626
      %p628 = scmp.ne.s32.totalorder %s620, %s622
      %p629 = scmp.eq.s32.totalorder %s61, 1
      %p630 = por %p628, %p629
      %p631 = scmp.ne.s32.totalorder %s622, %s623
      %p632 = scmp.eq.s32.totalorder %s61, 0
      %p633 = por %p631, %p632
      %p634 = scmp.ne.s32.totalorder %s622, %s623
      %p635 = scmp.eq.s32.totalorder %s62, 1
      %p636 = por %p634, %p635
      %p638 = scmp.ne.s32.totalorder %s623, %s637
      %p639 = scmp.eq.s32.totalorder %s62, 0
      %p640 = por %p638, %p639
      %s642 = sadd.s32 %s641, 1
      %p645 = scmp.eq.s32.totalorder %s56, 1
      %p646 = scmp.ne.s32.totalorder %s641, %s643
      %p647 = scmp.eq.s32.totalorder %s56, 0
      %p648 = por %p646, %p647
      %p649 = scmp.ne.s32.totalorder %s641, %s643
      %p650 = scmp.eq.s32.totalorder %s61, 1
      %p651 = por %p649, %p650
      %p652 = scmp.ne.s32.totalorder %s643, %s644
      %p653 = scmp.eq.s32.totalorder %s61, 0
      %p654 = por %p652, %p653
      %p655 = scmp.ne.s32.totalorder %s643, %s644
      %p656 = scmp.eq.s32.totalorder %s62, 1
      %p657 = por %p655, %p656
      %p659 = scmp.ne.s32.totalorder %s644, %s658
      %p660 = scmp.eq.s32.totalorder %s62, 0
      %p661 = por %p659, %p660
      %s662 = ssub.s32 %s56, %s63
      %p663 = scmp.eq.s32.totalorder %s662, 0
      %s665 = sadd.s32 %s664, 1
      %s666 = scalar_select %p663, %s664, %s665
      %p669 = pneg %p663
      %p670 = scmp.eq.s32.totalorder %s56, 1
      %p671 = por %p669, %p670
      %p672 = scmp.ne.s32.totalorder %s664, %s667
      %p673 = scmp.eq.s32.totalorder %s56, 0
      %p674 = por %p672, %p673
      %p675 = scmp.ne.s32.totalorder %s664, %s667
      %p676 = scmp.eq.s32.totalorder %s61, 1
      %p677 = por %p675, %p676
      %p678 = scmp.ne.s32.totalorder %s667, %s668
      %p679 = scmp.eq.s32.totalorder %s61, 0
      %p680 = por %p678, %p679
      %p681 = scmp.ne.s32.totalorder %s667, %s668
      %p682 = scmp.eq.s32.totalorder %s62, 1
      %p683 = por %p681, %p682
      %p685 = scmp.ne.s32.totalorder %s668, %s684
      %p686 = scmp.eq.s32.totalorder %s62, 0
      %p687 = por %p685, %p686
      %p688 = scmp.le.s32.totalorder 1, %s56
      %p689 = scmp.lt.s32.totalorder %s56, 3
      %p690 = pnand %p688, %p689
      %p691 = pneg %p690
      // Predicated region
      $region9: #{tpu_custom_call.1} parent=5 // pred_check
        _
      $region10: #{tpu_custom_call.1} parent=5 // pred_check_branch
        %693 = sbr.rel (%p690) target = $region12
      $region11: #{tpu_custom_call.1} parent=5 // pred_region
        %s694 = ssub.s32 %s56, 1
        // Predicated region
        $region13: #{tpu_custom_call.1} parent=11 // pred_check
          %p695 = pneg %p129
        $region14: #{tpu_custom_call.1} parent=11 // pred_check_branch
          %697 = sbr.rel (%p695) target = $region16
        $region15: #{tpu_custom_call.1} parent=11 // pred_region
          %s699 = ssub.s32 512, 512
          %700 = vsyncadd [#allocation6], %s699
          %s701 = sshll.u32 [#allocation7], 4
          %s702 = int_to_ptr.vmem [resolvable:$true] %s701
          %707 = dma.hbm_to_vmem [thread:$0]  %s2, 512, %s702, [#allocation6], 128, 128, 8
        $region16: #{tpu_custom_call.1} parent=11 // pred_fallthru
          _
        // Predicated region
        $region17: #{tpu_custom_call.1} parent=11 // pred_check
          %p708 = pneg %p150
        $region18: #{tpu_custom_call.1} parent=11 // pred_check_branch
          %710 = sbr.rel (%p708) target = $region20
        $region19: #{tpu_custom_call.1} parent=11 // pred_region
          %s712 = ssub.s32 512, 512
          %713 = vsyncadd [#allocation9], %s712
          %s714 = sshll.u32 [#allocation8], 4
          %s715 = int_to_ptr.vmem [resolvable:$true] %s714
          %720 = dma.hbm_to_vmem [thread:$0]  %s3, 512, %s715, [#allocation9], 128, 128, 8
        $region20: #{tpu_custom_call.1} parent=11 // pred_fallthru
          _
        // Predicated region
        $region21: #{tpu_custom_call.1} parent=11 // pred_check
          %p721 = pneg %p171
        $region22: #{tpu_custom_call.1} parent=11 // pred_check_branch
          %723 = sbr.rel (%p721) target = $region24
        $region23: #{tpu_custom_call.1} parent=11 // pred_region
          %s725 = ssub.s32 512, 512
          %726 = vsyncadd [#allocation9], %s725
          %s727 = sshll.u32 [#allocation10], 4
          %s728 = int_to_ptr.vmem [resolvable:$true] %s727
          %733 = dma.hbm_to_vmem [thread:$0]  %s4, 512, %s728, [#allocation9], 128, 128, 8
        $region24: #{tpu_custom_call.1} parent=11 // pred_fallthru
          _
        // Predicated region
        $region25: #{tpu_custom_call.1} parent=11 // pred_check
          %p734 = pneg %p192
        $region26: #{tpu_custom_call.1} parent=11 // pred_check_branch
          %736 = sbr.rel (%p734) target = $region28
        $region27: #{tpu_custom_call.1} parent=11 // pred_region
          %s738 = ssub.s32 512, 512
          %739 = vsyncadd [#allocation12], %s738
          %s740 = sshll.u32 [#allocation11], 4
          %s741 = int_to_ptr.vmem [resolvable:$true] %s740
          %746 = dma.hbm_to_vmem [thread:$0]  %s5, 512, %s741, [#allocation12], 128, 128, 8
        $region28: #{tpu_custom_call.1} parent=11 // pred_fallthru
          _
        // Predicated region
        $region29: #{tpu_custom_call.1} parent=11 // pred_check
          %p747 = pneg %p213
        $region30: #{tpu_custom_call.1} parent=11 // pred_check_branch
          %749 = sbr.rel (%p747) target = $region32
        $region31: #{tpu_custom_call.1} parent=11 // pred_region
          %s751 = ssub.s32 512, 512
          %752 = vsyncadd [#allocation12], %s751
          %s753 = sshll.u32 [#allocation13], 4
          %s754 = int_to_ptr.vmem [resolvable:$true] %s753
          %759 = dma.hbm_to_vmem [thread:$0]  %s6, 512, %s754, [#allocation12], 128, 128, 8
        $region32: #{tpu_custom_call.1} parent=11 // pred_fallthru
          _
        // Predicated region
        $region33: #{tpu_custom_call.1} parent=11 // pred_check
          %p760 = pneg %p234
        $region34: #{tpu_custom_call.1} parent=11 // pred_check_branch
          %762 = sbr.rel (%p760) target = $region36
        $region35: #{tpu_custom_call.1} parent=11 // pred_region
          %s764 = ssub.s32 512, 512
          %765 = vsyncadd [#allocation15], %s764
          %s766 = sshll.u32 [#allocation14], 4
          %s767 = int_to_ptr.vmem [resolvable:$true] %s766
          %772 = dma.hbm_to_vmem [thread:$0]  %s7, 512, %s767, [#allocation15], 128, 128, 8
        $region36: #{tpu_custom_call.1} parent=11 // pred_fallthru
          _
        // Predicated region
        $region37: #{tpu_custom_call.1} parent=11 // pred_check
          %p773 = pneg %p255
        $region38: #{tpu_custom_call.1} parent=11 // pred_check_branch
          %775 = sbr.rel (%p773) target = $region40
        $region39: #{tpu_custom_call.1} parent=11 // pred_region
          %s777 = ssub.s32 1536, 1536
          %778 = vsyncadd [#allocation15], %s777
          %s779 = sshll.u32 [#allocation16], 4
          %s780 = int_to_ptr.vmem [resolvable:$true] %s779
          %785 = dma.hbm_to_vmem [thread:$0]  %s8, 1536, %s780, [#allocation15], 128, 128, 8
        $region40: #{tpu_custom_call.1} parent=11 // pred_fallthru
          _
        // Predicated region
        $region41: #{tpu_custom_call.1} parent=11 // pred_check
          %p786 = pneg %p276
        $region42: #{tpu_custom_call.1} parent=11 // pred_check_branch
          %788 = sbr.rel (%p786) target = $region44
        $region43: #{tpu_custom_call.1} parent=11 // pred_region
          %s790 = ssub.s32 1536, 1536
          %791 = vsyncadd [#allocation18], %s790
          %s792 = sshll.u32 [#allocation17], 4
          %s793 = int_to_ptr.vmem [resolvable:$true] %s792
          %798 = dma.hbm_to_vmem [thread:$0]  %s9, 1536, %s793, [#allocation18], 128, 128, 8
        $region44: #{tpu_custom_call.1} parent=11 // pred_fallthru
          _
        // Predicated region
        $region45: #{tpu_custom_call.1} parent=11 // pred_check
          %p799 = pneg %p297
        $region46: #{tpu_custom_call.1} parent=11 // pred_check_branch
          %801 = sbr.rel (%p799) target = $region48
        $region47: #{tpu_custom_call.1} parent=11 // pred_region
          %s803 = ssub.s32 1536, 1536
          %804 = vsyncadd [#allocation18], %s803
          %s805 = sshll.u32 [#allocation19], 4
          %s806 = int_to_ptr.vmem [resolvable:$true] %s805
          %811 = dma.hbm_to_vmem [thread:$0]  %s10, 1536, %s806, [#allocation18], 128, 128, 8
        $region48: #{tpu_custom_call.1} parent=11 // pred_fallthru
          _
        // Predicated region
        $region49: #{tpu_custom_call.1} parent=11 // pred_check
          %p812 = pneg %p318
        $region50: #{tpu_custom_call.1} parent=11 // pred_check_branch
          %814 = sbr.rel (%p812) target = $region52
        $region51: #{tpu_custom_call.1} parent=11 // pred_region
          %s816 = ssub.s32 1536, 1536
          %817 = vsyncadd [#allocation21], %s816
          %s818 = sshll.u32 [#allocation20], 4
          %s819 = int_to_ptr.vmem [resolvable:$true] %s818
          %824 = dma.hbm_to_vmem [thread:$0]  %s11, 1536, %s819, [#allocation21], 128, 128, 8
        $region52: #{tpu_custom_call.1} parent=11 // pred_fallthru
          _
        // Predicated region
        $region53: #{tpu_custom_call.1} parent=11 // pred_check
          %p825 = pneg %p339
        $region54: #{tpu_custom_call.1} parent=11 // pred_check_branch
          %827 = sbr.rel (%p825) target = $region56
        $region55: #{tpu_custom_call.1} parent=11 // pred_region
          %s829 = ssub.s32 512, 512
          %830 = vsyncadd [#allocation21], %s829
          %s831 = sshll.u32 [#allocation22], 4
          %s832 = int_to_ptr.vmem [resolvable:$true] %s831
          %837 = dma.hbm_to_vmem [thread:$0]  %s12, 512, %s832, [#allocation21], 128, 128, 8
        $region56: #{tpu_custom_call.1} parent=11 // pred_fallthru
          _
        // Predicated region
        $region57: #{tpu_custom_call.1} parent=11 // pred_check
          %p838 = pneg %p360
        $region58: #{tpu_custom_call.1} parent=11 // pred_check_branch
          %840 = sbr.rel (%p838) target = $region60
        $region59: #{tpu_custom_call.1} parent=11 // pred_region
          %s842 = ssub.s32 512, 512
          %843 = vsyncadd [#allocation24], %s842
          %s844 = sshll.u32 [#allocation23], 4
          %s845 = int_to_ptr.vmem [resolvable:$true] %s844
          %850 = dma.hbm_to_vmem [thread:$0]  %s13, 512, %s845, [#allocation24], 128, 128, 8
        $region60: #{tpu_custom_call.1} parent=11 // pred_fallthru
          _
        // Predicated region
        $region61: #{tpu_custom_call.1} parent=11 // pred_check
          %p851 = pneg %p381
        $region62: #{tpu_custom_call.1} parent=11 // pred_check_branch
          %853 = sbr.rel (%p851) target = $region64
        $region63: #{tpu_custom_call.1} parent=11 // pred_region
          %s855 = ssub.s32 512, 512
          %856 = vsyncadd [#allocation24], %s855
          %s857 = sshll.u32 [#allocation25], 4
          %s858 = int_to_ptr.vmem [resolvable:$true] %s857
          %863 = dma.hbm_to_vmem [thread:$0]  %s14, 512, %s858, [#allocation24], 128, 128, 8
        $region64: #{tpu_custom_call.1} parent=11 // pred_fallthru
          _
        // Predicated region
        $region65: #{tpu_custom_call.1} parent=11 // pred_check
          %p864 = pneg %p402
        $region66: #{tpu_custom_call.1} parent=11 // pred_check_branch
          %866 = sbr.rel (%p864) target = $region68
        $region67: #{tpu_custom_call.1} parent=11 // pred_region
          %s868 = ssub.s32 512, 512
          %869 = vsyncadd [#allocation27], %s868
          %s870 = sshll.u32 [#allocation26], 4
          %s871 = int_to_ptr.vmem [resolvable:$true] %s870
          %876 = dma.hbm_to_vmem [thread:$0]  %s15, 512, %s871, [#allocation27], 128, 128, 8
        $region68: #{tpu_custom_call.1} parent=11 // pred_fallthru
          _
        // Predicated region
        $region69: #{tpu_custom_call.1} parent=11 // pred_check
          %p877 = pneg %p423
        $region70: #{tpu_custom_call.1} parent=11 // pred_check_branch
          %879 = sbr.rel (%p877) target = $region72
        $region71: #{tpu_custom_call.1} parent=11 // pred_region
          %s881 = ssub.s32 512, 512
          %882 = vsyncadd [#allocation27], %s881
          %s883 = sshll.u32 [#allocation28], 4
          %s884 = int_to_ptr.vmem [resolvable:$true] %s883
          %889 = dma.hbm_to_vmem [thread:$0]  %s16, 512, %s884, [#allocation27], 128, 128, 8
        $region72: #{tpu_custom_call.1} parent=11 // pred_fallthru
          _
        // Predicated region
        $region73: #{tpu_custom_call.1} parent=11 // pred_check
          %p890 = pneg %p444
        $region74: #{tpu_custom_call.1} parent=11 // pred_check_branch
          %892 = sbr.rel (%p890) target = $region76
        $region75: #{tpu_custom_call.1} parent=11 // pred_region
          %s894 = ssub.s32 512, 512
          %895 = vsyncadd [#allocation30], %s894
          %s896 = sshll.u32 [#allocation29], 4
          %s897 = int_to_ptr.vmem [resolvable:$true] %s896
          %902 = dma.hbm_to_vmem [thread:$0]  %s17, 512, %s897, [#allocation30], 128, 128, 8
        $region76: #{tpu_custom_call.1} parent=11 // pred_fallthru
          _
        // Predicated region
        $region77: #{tpu_custom_call.1} parent=11 // pred_check
          %p903 = pneg %p465
        $region78: #{tpu_custom_call.1} parent=11 // pred_check_branch
          %905 = sbr.rel (%p903) target = $region80
        $region79: #{tpu_custom_call.1} parent=11 // pred_region
          %s907 = ssub.s32 512, 512
          %908 = vsyncadd [#allocation30], %s907
          %s909 = sshll.u32 [#allocation31], 4
          %s910 = int_to_ptr.vmem [resolvable:$true] %s909
          %915 = dma.hbm_to_vmem [thread:$0]  %s18, 512, %s910, [#allocation30], 128, 128, 8
        $region80: #{tpu_custom_call.1} parent=11 // pred_fallthru
          _
        // Predicated region
        $region81: #{tpu_custom_call.1} parent=11 // pred_check
          %p916 = pneg %p486
        $region82: #{tpu_custom_call.1} parent=11 // pred_check_branch
          %918 = sbr.rel (%p916) target = $region84
        $region83: #{tpu_custom_call.1} parent=11 // pred_region
          %s920 = ssub.s32 512, 512
          %921 = vsyncadd [#allocation33], %s920
          %s922 = sshll.u32 [#allocation32], 4
          %s923 = int_to_ptr.vmem [resolvable:$true] %s922
          %928 = dma.hbm_to_vmem [thread:$0]  %s19, 512, %s923, [#allocation33], 128, 128, 8
        $region84: #{tpu_custom_call.1} parent=11 // pred_fallthru
          _
        // Predicated region
        $region85: #{tpu_custom_call.1} parent=11 // pred_check
          %p929 = pneg %p507
        $region86: #{tpu_custom_call.1} parent=11 // pred_check_branch
          %931 = sbr.rel (%p929) target = $region88
        $region87: #{tpu_custom_call.1} parent=11 // pred_region
          %s933 = ssub.s32 512, 512
          %934 = vsyncadd [#allocation33], %s933
          %s935 = sshll.u32 [#allocation34], 4
          %s936 = int_to_ptr.vmem [resolvable:$true] %s935
          %941 = dma.hbm_to_vmem [thread:$0]  %s20, 512, %s936, [#allocation33], 128, 128, 8
        $region88: #{tpu_custom_call.1} parent=11 // pred_fallthru
          _
        // Predicated region
        $region89: #{tpu_custom_call.1} parent=11 // pred_check
          %p942 = pneg %p528
        $region90: #{tpu_custom_call.1} parent=11 // pred_check_branch
          %944 = sbr.rel (%p942) target = $region92
        $region91: #{tpu_custom_call.1} parent=11 // pred_region
          %s946 = ssub.s32 512, 512
          %947 = vsyncadd [#allocation36], %s946
          %s948 = sshll.u32 [#allocation35], 4
          %s949 = int_to_ptr.vmem [resolvable:$true] %s948
          %954 = dma.hbm_to_vmem [thread:$0]  %s21, 512, %s949, [#allocation36], 128, 128, 8
        $region92: #{tpu_custom_call.1} parent=11 // pred_fallthru
          _
        // Predicated region
        $region93: #{tpu_custom_call.1} parent=11 // pred_check
          %p955 = pneg %p549
        $region94: #{tpu_custom_call.1} parent=11 // pred_check_branch
          %957 = sbr.rel (%p955) target = $region96
        $region95: #{tpu_custom_call.1} parent=11 // pred_region
          %s959 = ssub.s32 2048, 2048
          %960 = vsyncadd [#allocation36], %s959
          %s961 = sshll.u32 [#allocation37], 4
          %s962 = int_to_ptr.vmem [resolvable:$true] %s961
          %967 = dma.hbm_to_vmem [thread:$0]  %s22, 2048, %s962, [#allocation36], 128, 128, 8
        $region96: #{tpu_custom_call.1} parent=11 // pred_fallthru
          _
        // Predicated region
        $region97: #{tpu_custom_call.1} parent=11 // pred_check
          %p968 = pneg %p570
        $region98: #{tpu_custom_call.1} parent=11 // pred_check_branch
          %970 = sbr.rel (%p968) target = $region100
        $region99: #{tpu_custom_call.1} parent=11 // pred_region
          %s972 = ssub.s32 2048, 2048
          %973 = vsyncadd [#allocation39], %s972
          %s974 = sshll.u32 [#allocation38], 4
          %s975 = int_to_ptr.vmem [resolvable:$true] %s974
          %980 = dma.hbm_to_vmem [thread:$0]  %s23, 2048, %s975, [#allocation39], 128, 128, 8
        $region100: #{tpu_custom_call.1} parent=11 // pred_fallthru
          _
        // Predicated region
        $region101: #{tpu_custom_call.1} parent=11 // pred_check
          %p981 = pneg %p591
        $region102: #{tpu_custom_call.1} parent=11 // pred_check_branch
          %983 = sbr.rel (%p981) target = $region104
        $region103: #{tpu_custom_call.1} parent=11 // pred_region
          %s985 = ssub.s32 2048, 2048
          %986 = vsyncadd [#allocation39], %s985
          %s987 = sshll.u32 [#allocation40], 4
          %s988 = int_to_ptr.vmem [resolvable:$true] %s987
          %993 = dma.hbm_to_vmem [thread:$0]  %s24, 2048, %s988, [#allocation39], 128, 128, 8
        $region104: #{tpu_custom_call.1} parent=11 // pred_fallthru
          _
        // Predicated region
        $region105: #{tpu_custom_call.1} parent=11 // pred_check
          %p994 = pneg %p612
        $region106: #{tpu_custom_call.1} parent=11 // pred_check_branch
          %996 = sbr.rel (%p994) target = $region108
        $region107: #{tpu_custom_call.1} parent=11 // pred_region
          %s998 = ssub.s32 2048, 2048
          %999 = vsyncadd [#allocation42], %s998
          %s1000 = sshll.u32 [#allocation41], 4
          %s1001 = int_to_ptr.vmem [resolvable:$true] %s1000
          %1006 = dma.hbm_to_vmem [thread:$0]  %s25, 2048, %s1001, [#allocation42], 128, 128, 8
        $region108: #{tpu_custom_call.1} parent=11 // pred_fallthru
          _
        // Predicated region
        $region109: #{tpu_custom_call.1} parent=11 // pred_check
          %p1007 = pneg %p633
        $region110: #{tpu_custom_call.1} parent=11 // pred_check_branch
          %1009 = sbr.rel (%p1007) target = $region112
        $region111: #{tpu_custom_call.1} parent=11 // pred_region
          %s1011 = ssub.s32 512, 512
          %1012 = vsyncadd [#allocation42], %s1011
          %s1013 = sshll.u32 [#allocation43], 4
          %s1014 = int_to_ptr.vmem [resolvable:$true] %s1013
          %1019 = dma.hbm_to_vmem [thread:$0]  %s26, 512, %s1014, [#allocation42], 128, 128, 8
        $region112: #{tpu_custom_call.1} parent=11 // pred_fallthru
          _
        // Predicated region
        $region113: #{tpu_custom_call.1} parent=11 // pred_check
          %p1020 = pneg %p654
        $region114: #{tpu_custom_call.1} parent=11 // pred_check_branch
          %1022 = sbr.rel (%p1020) target = $region116
        $region115: #{tpu_custom_call.1} parent=11 // pred_region
          %s1024 = ssub.s32 512, 512
          %1025 = vsyncadd [#allocation45], %s1024
          %s1026 = sshll.u32 [#allocation44], 4
          %s1027 = int_to_ptr.vmem [resolvable:$true] %s1026
          %1032 = dma.hbm_to_vmem [thread:$0]  %s27, 512, %s1027, [#allocation45], 128, 128, 8
        $region116: #{tpu_custom_call.1} parent=11 // pred_fallthru
          _
      $region12: #{tpu_custom_call.1} parent=5 // pred_fallthru
        _
      %p1033 = scmp.lt.s32.totalorder %s56, 2
      // Predicated region
      $region117: #{tpu_custom_call.1} parent=5 // pred_check
        %p1034 = pneg %p1033
      $region118: #{tpu_custom_call.1} parent=5 // pred_check_branch
        %1036 = sbr.rel (%p1034) target = $region120
      $region119: #{tpu_custom_call.1} parent=5 // pred_region
        // Predicated region
        $region121: #{tpu_custom_call.1} parent=119 // pred_check
          %p1037 = pneg %p76
        $region122: #{tpu_custom_call.1} parent=119 // pred_check_branch
          %1039 = sbr.rel (%p1037) target = $region124
        $region123: #{tpu_custom_call.1} parent=119 // pred_region
          %s1040 = sand.u32 %s66, 1
          %s1041 = scalar_lea.sflag [#allocation3], %s1040
          %s1042 = sand.u32 %s66, 1
          %s1043 = smul.addr %s1042, 32
          %s1044 = scalar_lea.vmem [#allocation2], %s1043
          %s1046 = ssub.s32 512, 512
          %1047 = vsyncadd %s1041, %s1046
          %s1048 = smul.addr %s56, 4
          %s1049 = smul.addr %s1048, 128
          %s1050 = scalar_lea.hbm %s0, %s1049
          %s1051 = sshll.u32 %s1044, 4
          %s1052 = int_to_ptr.vmem [resolvable:$true] %s1051
          %1057 = dma.hbm_to_vmem [thread:$0]  %s1050, 512, %s1052, %s1041, 128, 128, 8
        $region124: #{tpu_custom_call.1} parent=119 // pred_fallthru
          _
        // Predicated region
        $region125: #{tpu_custom_call.1} parent=119 // pred_check
          %p1058 = pneg %p102
        $region126: #{tpu_custom_call.1} parent=119 // pred_check_branch
          %1060 = sbr.rel (%p1058) target = $region128
        $region127: #{tpu_custom_call.1} parent=119 // pred_region
          %s1061 = sand.u32 %s56, 1
          %s1062 = scalar_lea.sflag [#allocation6], %s1061
          %s1063 = sand.u32 %s92, 1
          %s1064 = scalar_lea.vmem [#allocation5], %s1063
          %s1066 = ssub.s32 16, 16
          %1067 = vsyncadd %s1062, %s1066
          %s1068 = smul.addr %s56, 16
          %s1069 = scalar_lea.hbm %s1, %s1068
          %s1071 = sshll.u32 %s1064, 4
          %s1072 = int_to_ptr.vmem [resolvable:$true] %s1071
          %1074 = dma.hbm_to_vmem [thread:$0]  %s1069, 16, %s1072, %s1062
        $region128: #{tpu_custom_call.1} parent=119 // pred_fallthru
          _
      $region120: #{tpu_custom_call.1} parent=5 // pred_fallthru
        _
      %p1075 = scmp.le.s32.totalorder 1, %s56
      %p1076 = scmp.lt.s32.totalorder %s56, 3
      %p1077 = pnand %p1075, %p1076
      %p1078 = pneg %p1077
      // Predicated region
      $region129: #{tpu_custom_call.1} parent=5 // pred_check
        _
      $region130: #{tpu_custom_call.1} parent=5 // pred_check_branch
        %1080 = sbr.rel (%p1077) target = $region132
      $region131: #{tpu_custom_call.1} parent=5 // pred_region
        %s1081 = ssub.s32 %s56, 1
        %s1082 = sand.u32 %s69, 1
        %s1083 = scalar_lea.sflag [#allocation3], %s1082
        %s1084 = sand.u32 %s69, 1
        %s1085 = smul.addr %s1084, 32
        %s1086 = scalar_lea.vmem [#allocation2], %s1085
        // Predicated region
        $region133: #{tpu_custom_call.1} parent=131 // pred_check
          %p1087 = pneg %p82
        $region134: #{tpu_custom_call.1} parent=131 // pred_check_branch
          %1089 = sbr.rel (%p1087) target = $region136
        $region135: #{tpu_custom_call.1} parent=131 // pred_region
          %1090 = dma.done %s1083, 512
        $region136: #{tpu_custom_call.1} parent=131 // pred_fallthru
          _
        %s1091 = sand.u32 %s61, 1
        %s1092 = scalar_lea.sflag [#allocation6], %s1091
        %s1093 = sand.u32 %s95, 1
        %s1094 = scalar_lea.vmem [#allocation5], %s1093
        // Predicated region
        $region137: #{tpu_custom_call.1} parent=131 // pred_check
          %p1095 = pneg %p108
        $region138: #{tpu_custom_call.1} parent=131 // pred_check_branch
          %1097 = sbr.rel (%p1095) target = $region140
        $region139: #{tpu_custom_call.1} parent=131 // pred_region
          %1098 = dma.done %s1092, 16
        $region140: #{tpu_custom_call.1} parent=131 // pred_fallthru
          _
        // Predicated region
        $region141: #{tpu_custom_call.1} parent=131 // pred_check
          %p1099 = pneg %p129
        $region142: #{tpu_custom_call.1} parent=131 // pred_check_branch
          %1101 = sbr.rel (%p1099) target = $region144
        $region143: #{tpu_custom_call.1} parent=131 // pred_region
          %1102 = dma.done [#allocation6], 512
        $region144: #{tpu_custom_call.1} parent=131 // pred_fallthru
          _
        // Predicated region
        $region145: #{tpu_custom_call.1} parent=131 // pred_check
          %p1103 = pneg %p150
        $region146: #{tpu_custom_call.1} parent=131 // pred_check_branch
          %1105 = sbr.rel (%p1103) target = $region148
        $region147: #{tpu_custom_call.1} parent=131 // pred_region
          %1106 = dma.done [#allocation9], 512
        $region148: #{tpu_custom_call.1} parent=131 // pred_fallthru
          _
        // Predicated region
        $region149: #{tpu_custom_call.1} parent=131 // pred_check
          %p1107 = pneg %p171
        $region150: #{tpu_custom_call.1} parent=131 // pred_check_branch
          %1109 = sbr.rel (%p1107) target = $region152
        $region151: #{tpu_custom_call.1} parent=131 // pred_region
          %1110 = dma.done [#allocation9], 512
        $region152: #{tpu_custom_call.1} parent=131 // pred_fallthru
          _
        // Predicated region
        $region153: #{tpu_custom_call.1} parent=131 // pred_check
          %p1111 = pneg %p192
        $region154: #{tpu_custom_call.1} parent=131 // pred_check_branch
          %1113 = sbr.rel (%p1111) target = $region156
        $region155: #{tpu_custom_call.1} parent=131 // pred_region
          %1114 = dma.done [#allocation12], 512
        $region156: #{tpu_custom_call.1} parent=131 // pred_fallthru
          _
        // Predicated region
        $region157: #{tpu_custom_call.1} parent=131 // pred_check
          %p1115 = pneg %p213
        $region158: #{tpu_custom_call.1} parent=131 // pred_check_branch
          %1117 = sbr.rel (%p1115) target = $region160
        $region159: #{tpu_custom_call.1} parent=131 // pred_region
          %1118 = dma.done [#allocation12], 512
        $region160: #{tpu_custom_call.1} parent=131 // pred_fallthru
          _
        // Predicated region
        $region161: #{tpu_custom_call.1} parent=131 // pred_check
          %p1119 = pneg %p234
        $region162: #{tpu_custom_call.1} parent=131 // pred_check_branch
          %1121 = sbr.rel (%p1119) target = $region164
        $region163: #{tpu_custom_call.1} parent=131 // pred_region
          %1122 = dma.done [#allocation15], 512
        $region164: #{tpu_custom_call.1} parent=131 // pred_fallthru
          _
        // Predicated region
        $region165: #{tpu_custom_call.1} parent=131 // pred_check
          %p1123 = pneg %p255
        $region166: #{tpu_custom_call.1} parent=131 // pred_check_branch
          %1125 = sbr.rel (%p1123) target = $region168
        $region167: #{tpu_custom_call.1} parent=131 // pred_region
          %1126 = dma.done [#allocation15], 1536
        $region168: #{tpu_custom_call.1} parent=131 // pred_fallthru
          _
        // Predicated region
        $region169: #{tpu_custom_call.1} parent=131 // pred_check
          %p1127 = pneg %p276
        $region170: #{tpu_custom_call.1} parent=131 // pred_check_branch
          %1129 = sbr.rel (%p1127) target = $region172
        $region171: #{tpu_custom_call.1} parent=131 // pred_region
          %1130 = dma.done [#allocation18], 1536
        $region172: #{tpu_custom_call.1} parent=131 // pred_fallthru
          _
        // Predicated region
        $region173: #{tpu_custom_call.1} parent=131 // pred_check
          %p1131 = pneg %p297
        $region174: #{tpu_custom_call.1} parent=131 // pred_check_branch
          %1133 = sbr.rel (%p1131) target = $region176
        $region175: #{tpu_custom_call.1} parent=131 // pred_region
          %1134 = dma.done [#allocation18], 1536
        $region176: #{tpu_custom_call.1} parent=131 // pred_fallthru
          _
        // Predicated region
        $region177: #{tpu_custom_call.1} parent=131 // pred_check
          %p1135 = pneg %p318
        $region178: #{tpu_custom_call.1} parent=131 // pred_check_branch
          %1137 = sbr.rel (%p1135) target = $region180
        $region179: #{tpu_custom_call.1} parent=131 // pred_region
          %1138 = dma.done [#allocation21], 1536
        $region180: #{tpu_custom_call.1} parent=131 // pred_fallthru
          _
        // Predicated region
        $region181: #{tpu_custom_call.1} parent=131 // pred_check
          %p1139 = pneg %p339
        $region182: #{tpu_custom_call.1} parent=131 // pred_check_branch
          %1141 = sbr.rel (%p1139) target = $region184
        $region183: #{tpu_custom_call.1} parent=131 // pred_region
          %1142 = dma.done [#allocation21], 512
        $region184: #{tpu_custom_call.1} parent=131 // pred_fallthru
          _
        // Predicated region
        $region185: #{tpu_custom_call.1} parent=131 // pred_check
          %p1143 = pneg %p360
        $region186: #{tpu_custom_call.1} parent=131 // pred_check_branch
          %1145 = sbr.rel (%p1143) target = $region188
        $region187: #{tpu_custom_call.1} parent=131 // pred_region
          %1146 = dma.done [#allocation24], 512
        $region188: #{tpu_custom_call.1} parent=131 // pred_fallthru
          _
        // Predicated region
        $region189: #{tpu_custom_call.1} parent=131 // pred_check
          %p1147 = pneg %p381
        $region190: #{tpu_custom_call.1} parent=131 // pred_check_branch
          %1149 = sbr.rel (%p1147) target = $region192
        $region191: #{tpu_custom_call.1} parent=131 // pred_region
          %1150 = dma.done [#allocation24], 512
        $region192: #{tpu_custom_call.1} parent=131 // pred_fallthru
          _
        // Predicated region
        $region193: #{tpu_custom_call.1} parent=131 // pred_check
          %p1151 = pneg %p402
        $region194: #{tpu_custom_call.1} parent=131 // pred_check_branch
          %1153 = sbr.rel (%p1151) target = $region196
        $region195: #{tpu_custom_call.1} parent=131 // pred_region
          %1154 = dma.done [#allocation27], 512
        $region196: #{tpu_custom_call.1} parent=131 // pred_fallthru
          _
        // Predicated region
        $region197: #{tpu_custom_call.1} parent=131 // pred_check
          %p1155 = pneg %p423
        $region198: #{tpu_custom_call.1} parent=131 // pred_check_branch
          %1157 = sbr.rel (%p1155) target = $region200
        $region199: #{tpu_custom_call.1} parent=131 // pred_region
          %1158 = dma.done [#allocation27], 512
        $region200: #{tpu_custom_call.1} parent=131 // pred_fallthru
          _
        // Predicated region
        $region201: #{tpu_custom_call.1} parent=131 // pred_check
          %p1159 = pneg %p444
        $region202: #{tpu_custom_call.1} parent=131 // pred_check_branch
          %1161 = sbr.rel (%p1159) target = $region204
        $region203: #{tpu_custom_call.1} parent=131 // pred_region
          %1162 = dma.done [#allocation30], 512
        $region204: #{tpu_custom_call.1} parent=131 // pred_fallthru
          _
        // Predicated region
        $region205: #{tpu_custom_call.1} parent=131 // pred_check
          %p1163 = pneg %p465
        $region206: #{tpu_custom_call.1} parent=131 // pred_check_branch
          %1165 = sbr.rel (%p1163) target = $region208
        $region207: #{tpu_custom_call.1} parent=131 // pred_region
          %1166 = dma.done [#allocation30], 512
        $region208: #{tpu_custom_call.1} parent=131 // pred_fallthru
          _
        // Predicated region
        $region209: #{tpu_custom_call.1} parent=131 // pred_check
          %p1167 = pneg %p486
        $region210: #{tpu_custom_call.1} parent=131 // pred_check_branch
          %1169 = sbr.rel (%p1167) target = $region212
        $region211: #{tpu_custom_call.1} parent=131 // pred_region
          %1170 = dma.done [#allocation33], 512
        $region212: #{tpu_custom_call.1} parent=131 // pred_fallthru
          _
        // Predicated region
        $region213: #{tpu_custom_call.1} parent=131 // pred_check
          %p1171 = pneg %p507
        $region214: #{tpu_custom_call.1} parent=131 // pred_check_branch
          %1173 = sbr.rel (%p1171) target = $region216
        $region215: #{tpu_custom_call.1} parent=131 // pred_region
          %1174 = dma.done [#allocation33], 512
        $region216: #{tpu_custom_call.1} parent=131 // pred_fallthru
          _
        // Predicated region
        $region217: #{tpu_custom_call.1} parent=131 // pred_check
          %p1175 = pneg %p528
        $region218: #{tpu_custom_call.1} parent=131 // pred_check_branch
          %1177 = sbr.rel (%p1175) target = $region220
        $region219: #{tpu_custom_call.1} parent=131 // pred_region
          %1178 = dma.done [#allocation36], 512
        $region220: #{tpu_custom_call.1} parent=131 // pred_fallthru
          _
        // Predicated region
        $region221: #{tpu_custom_call.1} parent=131 // pred_check
          %p1179 = pneg %p549
        $region222: #{tpu_custom_call.1} parent=131 // pred_check_branch
          %1181 = sbr.rel (%p1179) target = $region224
        $region223: #{tpu_custom_call.1} parent=131 // pred_region
          %1182 = dma.done [#allocation36], 2048
        $region224: #{tpu_custom_call.1} parent=131 // pred_fallthru
          _
        // Predicated region
        $region225: #{tpu_custom_call.1} parent=131 // pred_check
          %p1183 = pneg %p570
        $region226: #{tpu_custom_call.1} parent=131 // pred_check_branch
          %1185 = sbr.rel (%p1183) target = $region228
        $region227: #{tpu_custom_call.1} parent=131 // pred_region
          %1186 = dma.done [#allocation39], 2048
        $region228: #{tpu_custom_call.1} parent=131 // pred_fallthru
          _
        // Predicated region
        $region229: #{tpu_custom_call.1} parent=131 // pred_check
          %p1187 = pneg %p591
        $region230: #{tpu_custom_call.1} parent=131 // pred_check_branch
          %1189 = sbr.rel (%p1187) target = $region232
        $region231: #{tpu_custom_call.1} parent=131 // pred_region
          %1190 = dma.done [#allocation39], 2048
        $region232: #{tpu_custom_call.1} parent=131 // pred_fallthru
          _
        // Predicated region
        $region233: #{tpu_custom_call.1} parent=131 // pred_check
          %p1191 = pneg %p612
        $region234: #{tpu_custom_call.1} parent=131 // pred_check_branch
          %1193 = sbr.rel (%p1191) target = $region236
        $region235: #{tpu_custom_call.1} parent=131 // pred_region
          %1194 = dma.done [#allocation42], 2048
        $region236: #{tpu_custom_call.1} parent=131 // pred_fallthru
          _
        // Predicated region
        $region237: #{tpu_custom_call.1} parent=131 // pred_check
          %p1195 = pneg %p633
        $region238: #{tpu_custom_call.1} parent=131 // pred_check_branch
          %1197 = sbr.rel (%p1195) target = $region240
        $region239: #{tpu_custom_call.1} parent=131 // pred_region
          %1198 = dma.done [#allocation42], 512
        $region240: #{tpu_custom_call.1} parent=131 // pred_fallthru
          _
        // Predicated region
        $region241: #{tpu_custom_call.1} parent=131 // pred_check
          %p1199 = pneg %p654
        $region242: #{tpu_custom_call.1} parent=131 // pred_check_branch
          %1201 = sbr.rel (%p1199) target = $region244
        $region243: #{tpu_custom_call.1} parent=131 // pred_region
          %1202 = dma.done [#allocation45], 512
        $region244: #{tpu_custom_call.1} parent=131 // pred_fallthru
          _
        %s1203 = sand.u32 %s69, 1
        %s1204 = scalar_lea.sflag [#allocation3], %s1203
        %s1205 = sand.u32 %s69, 1
        %s1206 = smul.addr %s1205, 32
        %s1207 = scalar_lea.vmem [#allocation2], %s1206
        %p1208 = pneg %p82
        %p1209 = pneg %p79
        %s1210 = sand.u32 %s61, 1
        %s1211 = scalar_lea.sflag [#allocation6], %s1210
        %s1212 = sand.u32 %s95, 1
        %s1213 = scalar_lea.vmem [#allocation5], %s1212
        %p1214 = pneg %p108
        %p1215 = pneg %p105
        %p1216 = pneg %p129
        %p1217 = pneg %p126
        %p1218 = pneg %p150
        %p1219 = pneg %p147
        %p1220 = pneg %p171
        %p1221 = pneg %p168
        %p1222 = pneg %p192
        %p1223 = pneg %p189
        %p1224 = pneg %p213
        %p1225 = pneg %p210
        %p1226 = pneg %p234
        %p1227 = pneg %p231
        %p1228 = pneg %p255
        %p1229 = pneg %p252
        %p1230 = pneg %p276
        %p1231 = pneg %p273
        %p1232 = pneg %p297
        %p1233 = pneg %p294
        %p1234 = pneg %p318
        %p1235 = pneg %p315
        %p1236 = pneg %p339
        %p1237 = pneg %p336
        %p1238 = pneg %p360
        %p1239 = pneg %p357
        %p1240 = pneg %p381
        %p1241 = pneg %p378
        %p1242 = pneg %p402
        %p1243 = pneg %p399
        %p1244 = pneg %p423
        %p1245 = pneg %p420
        %p1246 = pneg %p444
        %p1247 = pneg %p441
        %p1248 = pneg %p465
        %p1249 = pneg %p462
        %p1250 = pneg %p486
        %p1251 = pneg %p483
        %p1252 = pneg %p507
        %p1253 = pneg %p504
        %p1254 = pneg %p528
        %p1255 = pneg %p525
        %p1256 = pneg %p549
        %p1257 = pneg %p546
        %p1258 = pneg %p570
        %p1259 = pneg %p567
        %p1260 = pneg %p591
        %p1261 = pneg %p588
        %p1262 = pneg %p612
        %p1263 = pneg %p609
        %p1264 = pneg %p633
        %p1265 = pneg %p630
        %p1266 = pneg %p654
        %p1267 = pneg %p651
        %p1268 = pneg %p680
        %p1269 = pneg %p677
        %s1270 = sand.u32 %s667, 1
        %s1271 = scalar_lea.sflag [#allocation4], %s1270
        %s1272 = sand.u32 %s667, 1
        %s1273 = smul.addr %s1272, 32
        %s1274 = scalar_lea.vmem [#allocation46], %s1273
        %v1275 = vld [vmem:[%s1086] sm:$0xff]
        %v1276 = vld [vmem:[%s1086 + $0x8] sm:$0xff]
        %v1277 = vld [vmem:[%s1086 + $0x10] sm:$0xff]
        %v1278 = vld [vmem:[%s1086 + $0x18] sm:$0xff]
        %v1279 = vld [vmem:[%s1094] sm:$0x1]
        %v1280 = vlaneseq
        %v1281 = vand.u32 %v1280, 127
        %v1282 = vadd.f32 %v1275, %v1276
        %v1283 = vadd.f32 %v1282, %v1277
        %v1284 = vadd.f32 %v1283, %v1278
        %v1285 = vrot.slane %v1284, 4
        %v1286 = vadd.f32 %v1284, %v1285
        %v1287 = vrot.slane %v1286, 2
        %v1288 = vadd.f32 %v1286, %v1287
        %v1289 = vrot.slane %v1288, 1
        %v1290 = vadd.f32 %v1288, %v1289
        %v1291 = vrcp.pop 32.0
        %v1292 = vmul.f32 %v1290, %v1291
        %v1293 = vsub.f32 %v1275, %v1292
        %v1294 = vsub.f32 %v1276, %v1292
        %v1295 = vsub.f32 %v1277, %v1292
        %v1296 = vsub.f32 %v1278, %v1292
        %v1297 = vmul.f32 %v1293, %v1293
        %v1298 = vmul.f32 %v1294, %v1294
        %v1299 = vmul.f32 %v1295, %v1295
        %v1300 = vmul.f32 %v1296, %v1296
        %v1301 = vadd.f32 %v1297, %v1298
        %v1302 = vadd.f32 %v1301, %v1299
        %v1303 = vadd.f32 %v1302, %v1300
        %v1304 = vrot.slane %v1303, 4
        %v1305 = vadd.f32 %v1303, %v1304
        %v1306 = vrot.slane %v1305, 2
        %v1307 = vadd.f32 %v1305, %v1306
        %v1308 = vrot.slane %v1307, 1
        %v1309 = vadd.f32 %v1307, %v1308
        %v1310 = vmul.f32 %v1309, %v1291
        %v1311 = vadd.f32 %v1310, 1e-05
        %v1312 = vrsqrt.pop %v1311
        %v1313 = vmul.f32 %v1293, %v1312
        %v1314 = vmul.f32 %v1294, %v1312
        %v1315 = vmul.f32 %v1295, %v1312
        %v1316 = vmul.f32 %v1296, %v1312
        %v1317 = vld [vmem:[#allocation7] sm:$0xff]
        %v1318 = vld [vmem:[#allocation7 + $0x8] sm:$0xff]
        %v1319 = vld [vmem:[#allocation7 + $0x10] sm:$0xff]
        %v1320 = vld [vmem:[#allocation7 + $0x18] sm:$0xff]
        %1322 = vset.pattern.permute.xlu0 0
        %1323 = vperm.xlu0 %1322, %v1317
        %v1324 = vpop.permute.xlu0 %1323
        %1327 = vset.pattern.permute.xlu0 0
        %1328 = vperm.xlu0 %1327, %v1318
        %v1329 = vpop.permute.xlu0 %1328
        %1332 = vset.pattern.permute.xlu0 0
        %1333 = vperm.xlu0 %1332, %v1319
        %v1334 = vpop.permute.xlu0 %1333
        %1337 = vset.pattern.permute.xlu0 0
        %1338 = vperm.xlu0 %1337, %v1320
        %v1339 = vpop.permute.xlu0 %1338
        %v1341 = vmul.f32 %v1313, %v1324
        %v1342 = vmul.f32 %v1314, %v1329
        %v1343 = vmul.f32 %v1315, %v1334
        %v1344 = vmul.f32 %v1316, %v1339
        %v1345 = vld [vmem:[#allocation8] sm:$0xff]
        %v1346 = vld [vmem:[#allocation8 + $0x8] sm:$0xff]
        %v1347 = vld [vmem:[#allocation8 + $0x10] sm:$0xff]
        %v1348 = vld [vmem:[#allocation8 + $0x18] sm:$0xff]
        %1350 = vset.pattern.permute.xlu0 0
        %1351 = vperm.xlu0 %1350, %v1345
        %v1352 = vpop.permute.xlu0 %1351
        %1355 = vset.pattern.permute.xlu0 0
        %1356 = vperm.xlu0 %1355, %v1346
        %v1357 = vpop.permute.xlu0 %1356
        %1360 = vset.pattern.permute.xlu0 0
        %1361 = vperm.xlu0 %1360, %v1347
        %v1362 = vpop.permute.xlu0 %1361
        %1365 = vset.pattern.permute.xlu0 0
        %1366 = vperm.xlu0 %1365, %v1348
        %v1367 = vpop.permute.xlu0 %1366
        %v1369 = vadd.f32 %v1341, %v1352
        %v1370 = vadd.f32 %v1342, %v1357
        %v1371 = vadd.f32 %v1343, %v1362
        %v1372 = vadd.f32 %v1344, %v1367
        %v1373 = vld [vmem:[#allocation10] sm:$0xff]
        %v1374 = vld [vmem:[#allocation10 + $0x8] sm:$0xff]
        %v1375 = vld [vmem:[#allocation10 + $0x10] sm:$0xff]
        %v1376 = vld [vmem:[#allocation10 + $0x18] sm:$0xff]
        %1378 = vset.pattern.permute.xlu0 0
        %1379 = vperm.xlu0 %1378, %v1373
        %v1380 = vpop.permute.xlu0 %1379
        %1383 = vset.pattern.permute.xlu0 0
        %1384 = vperm.xlu0 %1383, %v1374
        %v1385 = vpop.permute.xlu0 %1384
        %1388 = vset.pattern.permute.xlu0 0
        %1389 = vperm.xlu0 %1388, %v1375
        %v1390 = vpop.permute.xlu0 %1389
        %1393 = vset.pattern.permute.xlu0 0
        %1394 = vperm.xlu0 %1393, %v1376
        %v1395 = vpop.permute.xlu0 %1394
        %v1397 = vmul.f32 %v1369, %v1380
        %v1398 = vmul.f32 %v1370, %v1385
        %v1399 = vmul.f32 %v1371, %v1390
        %v1400 = vmul.f32 %v1372, %v1395
        %v1401 = vld [vmem:[#allocation11] sm:$0xff]
        %v1402 = vld [vmem:[#allocation11 + $0x8] sm:$0xff]
        %v1403 = vld [vmem:[#allocation11 + $0x10] sm:$0xff]
        %v1404 = vld [vmem:[#allocation11 + $0x18] sm:$0xff]
        %1406 = vset.pattern.permute.xlu0 0
        %1407 = vperm.xlu0 %1406, %v1401
        %v1408 = vpop.permute.xlu0 %1407
        %1411 = vset.pattern.permute.xlu0 0
        %1412 = vperm.xlu0 %1411, %v1402
        %v1413 = vpop.permute.xlu0 %1412
        %1416 = vset.pattern.permute.xlu0 0
        %1417 = vperm.xlu0 %1416, %v1403
        %v1418 = vpop.permute.xlu0 %1417
        %1421 = vset.pattern.permute.xlu0 0
        %1422 = vperm.xlu0 %1421, %v1404
        %v1423 = vpop.permute.xlu0 %1422
        %v1425 = vadd.f32 %v1397, %v1408
        %v1426 = vadd.f32 %v1398, %v1413
        %v1427 = vadd.f32 %v1399, %v1418
        %v1428 = vadd.f32 %v1400, %v1423
        %1429 = vadd.xlane.f32.xlu0 %v1369
        %v1430 = vpop.xlane.xlu0 %1429
        %1431 = vadd.xlane.f32.xlu0 %v1370
        %v1432 = vpop.xlane.xlu0 %1431
        %1433 = vadd.xlane.f32.xlu0 %v1371
        %v1434 = vpop.xlane.xlu0 %1433
        %1435 = vadd.xlane.f32.xlu0 %v1372
        %v1436 = vpop.xlane.xlu0 %1435
        %v1437 = vrcp.pop 128.0
        %v1438 = vmul.f32 %v1430, %v1437
        %v1439 = vmul.f32 %v1432, %v1437
        %v1440 = vmul.f32 %v1434, %v1437
        %v1441 = vmul.f32 %v1436, %v1437
        %v1442 = vld [vmem:[#allocation13] sm:$0xff]
        %v1443 = vld [vmem:[#allocation13 + $0x8] sm:$0xff]
        %v1444 = vld [vmem:[#allocation13 + $0x10] sm:$0xff]
        %v1445 = vld [vmem:[#allocation13 + $0x18] sm:$0xff]
        %v1446 = vmul.f32 %v1438, %v1442
        %v1447 = vmul.f32 %v1439, %v1443
        %v1448 = vmul.f32 %v1440, %v1444
        %v1449 = vmul.f32 %v1441, %v1445
        %v1450 = vld [vmem:[#allocation14] sm:$0xff]
        %v1451 = vld [vmem:[#allocation14 + $0x8] sm:$0xff]
        %v1452 = vld [vmem:[#allocation14 + $0x10] sm:$0xff]
        %v1453 = vld [vmem:[#allocation14 + $0x18] sm:$0xff]
        %v1454 = vadd.f32 %v1446, %v1450
        %v1455 = vadd.f32 %v1447, %v1451
        %v1456 = vadd.f32 %v1448, %v1452
        %v1457 = vadd.f32 %v1449, %v1453
        %v1458 = vmax.f32 %v1454, 0.0
        %v1459 = vmax.f32 %v1455, 0.0
        %v1460 = vmax.f32 %v1456, 0.0
        %v1461 = vmax.f32 %v1457, 0.0
        %1463 = vset.pattern.permute.xlu0 0
        %1464 = vperm.xlu0 %1463, %v1458
        %v1465 = vpop.permute.xlu0 %1464
        %1468 = vset.pattern.permute.xlu0 0
        %1469 = vperm.xlu0 %1468, %v1459
        %v1470 = vpop.permute.xlu0 %1469
        %1473 = vset.pattern.permute.xlu0 0
        %1474 = vperm.xlu0 %1473, %v1460
        %v1475 = vpop.permute.xlu0 %1474
        %1478 = vset.pattern.permute.xlu0 0
        %1479 = vperm.xlu0 %1478, %v1461
        %v1480 = vpop.permute.xlu0 %1479
        %v1482 = vmul.f32 %v1425, %v1465
        %v1483 = vmul.f32 %v1426, %v1470
        %v1484 = vmul.f32 %v1427, %v1475
        %v1485 = vmul.f32 %v1428, %v1480
        %v1486 = vld [vmem:[#allocation16] sm:$0xff]
        %v1487 = vld [vmem:[#allocation16 + $0x8] sm:$0xff]
        %v1488 = vld [vmem:[#allocation16 + $0x10] sm:$0xff]
        %v1489 = vld [vmem:[#allocation16 + $0x18] sm:$0xff]
        %v1490 = vld [vmem:[#allocation16 + $0x20] sm:$0xff]
        %v1491 = vld [vmem:[#allocation16 + $0x28] sm:$0xff]
        %v1492 = vld [vmem:[#allocation16 + $0x30] sm:$0xff]
        %v1493 = vld [vmem:[#allocation16 + $0x38] sm:$0xff]
        %v1494 = vld [vmem:[#allocation16 + $0x40] sm:$0xff]
        %v1495 = vld [vmem:[#allocation16 + $0x48] sm:$0xff]
        %v1496 = vld [vmem:[#allocation16 + $0x50] sm:$0xff]
        %v1497 = vld [vmem:[#allocation16 + $0x58] sm:$0xff]
        %v1498 = vld [vmem:[#allocation17] sm:$0xff]
        %v1499 = vld [vmem:[#allocation17 + $0x8] sm:$0xff]
        %v1500 = vld [vmem:[#allocation17 + $0x10] sm:$0xff]
        %v1501 = vld [vmem:[#allocation17 + $0x18] sm:$0xff]
        %v1502 = vld [vmem:[#allocation17 + $0x20] sm:$0xff]
        %v1503 = vld [vmem:[#allocation17 + $0x28] sm:$0xff]
        %v1504 = vld [vmem:[#allocation17 + $0x30] sm:$0xff]
        %v1505 = vld [vmem:[#allocation17 + $0x38] sm:$0xff]
        %v1506 = vld [vmem:[#allocation17 + $0x40] sm:$0xff]
        %v1507 = vld [vmem:[#allocation17 + $0x48] sm:$0xff]
        %v1508 = vld [vmem:[#allocation17 + $0x50] sm:$0xff]
        %v1509 = vld [vmem:[#allocation17 + $0x58] sm:$0xff]
        %1511 = vset.pattern.permute.xlu0 0
        %1512 = vperm.xlu0 %1511, %v1498
        %v1513 = vpop.permute.xlu0 %1512
        %1516 = vset.pattern.permute.xlu0 0
        %1517 = vperm.xlu0 %1516, %v1499
        %v1518 = vpop.permute.xlu0 %1517
        %1521 = vset.pattern.permute.xlu0 0
        %1522 = vperm.xlu0 %1521, %v1500
        %v1523 = vpop.permute.xlu0 %1522
        %1526 = vset.pattern.permute.xlu0 0
        %1527 = vperm.xlu0 %1526, %v1501
        %v1528 = vpop.permute.xlu0 %1527
        %1531 = vset.pattern.permute.xlu0 0
        %1532 = vperm.xlu0 %1531, %v1502
        %v1533 = vpop.permute.xlu0 %1532
        %1536 = vset.pattern.permute.xlu0 0
        %1537 = vperm.xlu0 %1536, %v1503
        %v1538 = vpop.permute.xlu0 %1537
        %1541 = vset.pattern.permute.xlu0 0
        %1542 = vperm.xlu0 %1541, %v1504
        %v1543 = vpop.permute.xlu0 %1542
        %1546 = vset.pattern.permute.xlu0 0
        %1547 = vperm.xlu0 %1546, %v1505
        %v1548 = vpop.permute.xlu0 %1547
        %1551 = vset.pattern.permute.xlu0 0
        %1552 = vperm.xlu0 %1551, %v1506
        %v1553 = vpop.permute.xlu0 %1552
        %1556 = vset.pattern.permute.xlu0 0
        %1557 = vperm.xlu0 %1556, %v1507
        %v1558 = vpop.permute.xlu0 %1557
        %1561 = vset.pattern.permute.xlu0 0
        %1562 = vperm.xlu0 %1561, %v1508
        %v1563 = vpop.permute.xlu0 %1562
        %1566 = vset.pattern.permute.xlu0 0
        %1567 = vperm.xlu0 %1566, %v1509
        %v1568 = vpop.permute.xlu0 %1567
        %vm1570 = vcmask 261120
        %v1572 = vsel %vm1570, %v1486, 0
        %v1575 = vsel %vm1570, %v1487, 0
        %v1578 = vsel %vm1570, %v1488, 0
        %v1581 = vsel %vm1570, %v1489, 0
        %v1584 = vsel %vm1570, %v1490, 0
        %v1587 = vsel %vm1570, %v1491, 0
        %v1590 = vsel %vm1570, %v1492, 0
        %v1593 = vsel %vm1570, %v1493, 0
        %v1596 = vsel %vm1570, %v1494, 0
        %v1599 = vsel %vm1570, %v1495, 0
        %v1602 = vsel %vm1570, %v1496, 0
        %v1605 = vsel %vm1570, %v1497, 0
        %1607 = vmatprep.subr.mxu0 0.0
        %1608 = vmatpush1.msra.mxu0 %v1275
        %1609 = vmatprep.subr.mxu0 0.0
        %1610 = vmatpush1.msra.mxu0 %v1276
        %1611 = vmatprep.subr.mxu0 0.0
        %1612 = vmatpush1.msra.mxu0 %v1277
        %1613 = vmatprep.subr.mxu0 0.0
        %1614 = vmatpush1.msra.mxu0 %v1278
        %1615 = vmatprep.subr.mxu0 0.0
        %1616 = vmatpush1.msra.mxu0 0.0
        %1617 = vmatprep.subr.mxu0 0.0
        %1618 = vmatpush1.msra.mxu0 0.0
        %1619 = vmatprep.subr.mxu0 0.0
        %1620 = vmatpush1.msra.mxu0 0.0
        %1621 = vmatprep.subr.mxu0 0.0
        %1622 = vmatpush1.msra.mxu0 0.0
        %1623 = vmatprep.subr.mxu0 0.0
        %1624 = vmatpush1.msra.mxu0 0.0
        %1625 = vmatprep.subr.mxu0 0.0
        %1626 = vmatpush1.msra.mxu0 0.0
        %1627 = vmatprep.subr.mxu0 0.0
        %1628 = vmatpush1.msra.mxu0 0.0
        %1629 = vmatprep.subr.mxu0 0.0
        %1630 = vmatpush1.msra.mxu0 0.0
        %1631 = vmatprep.subr.mxu0 0.0
        %1632 = vmatpush1.msra.mxu0 0.0
        %1633 = vmatprep.subr.mxu0 0.0
        %1634 = vmatpush1.msra.mxu0 0.0
        %1635 = vmatprep.subr.mxu0 0.0
        %1636 = vmatpush1.msra.mxu0 0.0
        %1637 = vmatprep.subr.mxu0 0.0
        %1638 = vmatpush1.msra.mxu0 0.0
        %1639 = vmatprep.subr.mxu0 0.0
        %1640 = vmatpush1.msra.mxu0 0.0
        %1641 = vmatprep.subr.mxu0 0.0
        %1642 = vmatpush1.msra.mxu0 0.0
        %1643 = vmatprep.subr.mxu0 0.0
        %1644 = vmatpush1.msra.mxu0 0.0
        %1645 = vmatprep.subr.mxu0 0.0
        %1646 = vmatpush1.msra.mxu0 0.0
        %1647 = vmatprep.subr.mxu0 0.0
        %1648 = vmatpush1.msra.mxu0 0.0
        %1649 = vmatprep.subr.mxu0 0.0
        %1650 = vmatpush1.msra.mxu0 0.0
        %1651 = vmatprep.subr.mxu0 0.0
        %1652 = vmatpush1.msra.mxu0 0.0
        %1653 = vmatprep.subr.mxu0 0.0
        %1654 = vmatpush1.msra.mxu0 0.0
        %1655 = vmatprep.subr.mxu0 0.0
        %1656 = vmatpush1.msra.mxu0 0.0
        %1657 = vmatprep.subr.mxu0 0.0
        %1658 = vmatpush1.msra.mxu0 0.0
        %1659 = vmatprep.subr.mxu0 0.0
        %1660 = vmatpush1.msra.mxu0 0.0
        %1661 = vmatprep.subr.mxu0 0.0
        %1662 = vmatpush1.msra.mxu0 0.0
        %1663 = vmatprep.subr.mxu0 0.0
        %1664 = vmatpush1.msra.mxu0 0.0
        %1665 = vmatprep.subr.mxu0 0.0
        %1666 = vmatpush1.msra.mxu0 0.0
        %1667 = vmatprep.subr.mxu0 0.0
        %1668 = vmatpush1.msra.mxu0 0.0
        %1669 = vmatprep.subr.mxu0 0.0
        %1670 = vmatpush1.msra.mxu0 0.0
        %1671 = vmatprep.mubr.f32.mxu0 0.0
        %1672 = vmatmul.mubr.f32.gmra.mrb[0].mxu0 %v1572
        %v1673 = vpop.f32.mrb[0].mxu0
        %v1674 = vadd.f32 %v1513, %v1673
        %v1675 = vpop.f32.mrb[0].mxu0
        %1676 = vmatprep.mubr.f32.mxu0 0.0
        %1677 = vmatmul.mubr.f32.gmra.mrb[0].mxu0 %v1575
        %v1678 = vpop.f32.mrb[0].mxu0
        %v1679 = vadd.f32 %v1518, %v1678
        %v1680 = vpop.f32.mrb[0].mxu0
        %1681 = vmatprep.mubr.f32.mxu0 0.0
        %1682 = vmatmul.mubr.f32.gmra.mrb[0].mxu0 %v1578
        %v1683 = vpop.f32.mrb[0].mxu0
        %v1684 = vadd.f32 %v1523, %v1683
        %v1685 = vpop.f32.mrb[0].mxu0
        %1686 = vmatprep.mubr.f32.mxu0 0.0
        %1687 = vmatmul.mubr.f32.gmra.mrb[0].mxu0 %v1581
        %v1688 = vpop.f32.mrb[0].mxu0
        %v1689 = vadd.f32 %v1528, %v1688
        %v1690 = vpop.f32.mrb[0].mxu0
        %1691 = vmatprep.mubr.f32.mxu0 0.0
        %1692 = vmatmul.mubr.f32.gmra.mrb[0].mxu0 %v1584
        %v1693 = vpop.f32.mrb[0].mxu0
        %v1694 = vadd.f32 %v1533, %v1693
        %v1695 = vpop.f32.mrb[0].mxu0
        %1696 = vmatprep.mubr.f32.mxu0 0.0
        %1697 = vmatmul.mubr.f32.gmra.mrb[0].mxu0 %v1587
        %v1698 = vpop.f32.mrb[0].mxu0
        %v1699 = vadd.f32 %v1538, %v1698
        %v1700 = vpop.f32.mrb[0].mxu0
        %1701 = vmatprep.mubr.f32.mxu0 0.0
        %1702 = vmatmul.mubr.f32.gmra.mrb[0].mxu0 %v1590
        %v1703 = vpop.f32.mrb[0].mxu0
        %v1704 = vadd.f32 %v1543, %v1703
        %v1705 = vpop.f32.mrb[0].mxu0
        %1706 = vmatprep.mubr.f32.mxu0 0.0
        %1707 = vmatmul.mubr.f32.gmra.mrb[0].mxu0 %v1593
        %v1708 = vpop.f32.mrb[0].mxu0
        %v1709 = vadd.f32 %v1548, %v1708
        %v1710 = vpop.f32.mrb[0].mxu0
        %1711 = vmatprep.mubr.f32.mxu0 0.0
        %1712 = vmatmul.mubr.f32.gmra.mrb[0].mxu0 %v1596
        %v1713 = vpop.f32.mrb[0].mxu0
        %v1714 = vadd.f32 %v1553, %v1713
        %v1715 = vpop.f32.mrb[0].mxu0
        %1716 = vmatprep.mubr.f32.mxu0 0.0
        %1717 = vmatmul.mubr.f32.gmra.mrb[0].mxu0 %v1599
        %v1718 = vpop.f32.mrb[0].mxu0
        %v1719 = vadd.f32 %v1558, %v1718
        %v1720 = vpop.f32.mrb[0].mxu0
        %1721 = vmatprep.mubr.f32.mxu0 0.0
        %1722 = vmatmul.mubr.f32.gmra.mrb[0].mxu0 %v1602
        %v1723 = vpop.f32.mrb[0].mxu0
        %v1724 = vadd.f32 %v1563, %v1723
        %v1725 = vpop.f32.mrb[0].mxu0
        %1726 = vmatprep.mubr.f32.mxu0 0.0
        %1727 = vmatmul.mubr.f32.gmra.mrb[0].mxu0 %v1605
        %v1728 = vpop.f32.mrb[0].mxu0
        %v1729 = vadd.f32 %v1568, %v1728
        %v1730 = vpop.f32.mrb[0].mxu0
        %1731 = vdwg.mxu0
        %v1732 = vld [vmem:[#allocation19] sm:$0xff]
        %v1733 = vld [vmem:[#allocation19 + $0x8] sm:$0xff]
        %v1734 = vld [vmem:[#allocation19 + $0x10] sm:$0xff]
        %v1735 = vld [vmem:[#allocation19 + $0x18] sm:$0xff]
        %v1736 = vld [vmem:[#allocation19 + $0x20] sm:$0xff]
        %v1737 = vld [vmem:[#allocation19 + $0x28] sm:$0xff]
        %v1738 = vld [vmem:[#allocation19 + $0x30] sm:$0xff]
        %v1739 = vld [vmem:[#allocation19 + $0x38] sm:$0xff]
        %v1740 = vld [vmem:[#allocation19 + $0x40] sm:$0xff]
        %v1741 = vld [vmem:[#allocation19 + $0x48] sm:$0xff]
        %v1742 = vld [vmem:[#allocation19 + $0x50] sm:$0xff]
        %v1743 = vld [vmem:[#allocation19 + $0x58] sm:$0xff]
        %v1744 = vld [vmem:[#allocation20] sm:$0xff]
        %v1745 = vld [vmem:[#allocation20 + $0x8] sm:$0xff]
        %v1746 = vld [vmem:[#allocation20 + $0x10] sm:$0xff]
        %v1747 = vld [vmem:[#allocation20 + $0x18] sm:$0xff]
        %v1748 = vld [vmem:[#allocation20 + $0x20] sm:$0xff]
        %v1749 = vld [vmem:[#allocation20 + $0x28] sm:$0xff]
        %v1750 = vld [vmem:[#allocation20 + $0x30] sm:$0xff]
        %v1751 = vld [vmem:[#allocation20 + $0x38] sm:$0xff]
        %v1752 = vld [vmem:[#allocation20 + $0x40] sm:$0xff]
        %v1753 = vld [vmem:[#allocation20 + $0x48] sm:$0xff]
        %v1754 = vld [vmem:[#allocation20 + $0x50] sm:$0xff]
        %v1755 = vld [vmem:[#allocation20 + $0x58] sm:$0xff]
        %1756 = vrot.lane.b32.xlu0 %v1674, 3
        %v1757 = vpop.permute.xlu0 %1756
        %1758 = vrot.lane.b32.xlu0 %v1679, 3
        %v1759 = vpop.permute.xlu0 %1758
        %1760 = vrot.lane.b32.xlu0 %v1684, 3
        %v1761 = vpop.permute.xlu0 %1760
        %1762 = vrot.lane.b32.xlu0 %v1689, 3
        %v1763 = vpop.permute.xlu0 %1762
        %1764 = vrot.lane.b32.xlu0 %v1694, 3
        %v1765 = vpop.permute.xlu0 %1764
        %1766 = vrot.lane.b32.xlu0 %v1699, 3
        %v1767 = vpop.permute.xlu0 %1766
        %1768 = vrot.lane.b32.xlu0 %v1704, 3
        %v1769 = vpop.permute.xlu0 %1768
        %1770 = vrot.lane.b32.xlu0 %v1709, 3
        %v1771 = vpop.permute.xlu0 %1770
        %1772 = vrot.lane.b32.xlu0 %v1714, 3
        %v1773 = vpop.permute.xlu0 %1772
        %1774 = vrot.lane.b32.xlu0 %v1719, 3
        %v1775 = vpop.permute.xlu0 %1774
        %1776 = vrot.lane.b32.xlu0 %v1724, 3
        %v1777 = vpop.permute.xlu0 %1776
        %1778 = vrot.lane.b32.xlu0 %v1729, 3
        %v1779 = vpop.permute.xlu0 %1778
        %vm1780 = vcmp.ge.s32.totalorder %v1281, 3
        %vm1781 = vcmp.lt.s32.totalorder %v1281, 131
        %vm1782 = vmand %vm1780, %vm1781
        %v1783 = vsel %vm1782, 1, 0
        %v1784 = vcvt.s32.f32 %v1783
        %v1785 = vmul.f32 %v1757, %v1784
        %v1786 = vmul.f32 %v1759, %v1784
        %v1787 = vmul.f32 %v1761, %v1784
        %v1788 = vmul.f32 %v1763, %v1784
        %v1789 = vmul.f32 %v1765, %v1784
        %v1790 = vmul.f32 %v1767, %v1784
        %v1791 = vmul.f32 %v1769, %v1784
        %v1792 = vmul.f32 %v1771, %v1784
        %v1793 = vmul.f32 %v1773, %v1784
        %v1794 = vmul.f32 %v1775, %v1784
        %v1795 = vmul.f32 %v1777, %v1784
        %v1796 = vmul.f32 %v1779, %v1784
        %1798 = vset.pattern.permute.xlu0 0
        %1799 = vperm.xlu0 %1798, %v1732
        %v1800 = vpop.permute.xlu0 %1799
        %1803 = vset.pattern.permute.xlu0 0
        %1804 = vperm.xlu0 %1803, %v1733
        %v1805 = vpop.permute.xlu0 %1804
        %1808 = vset.pattern.permute.xlu0 0
        %1809 = vperm.xlu0 %1808, %v1734
        %v1810 = vpop.permute.xlu0 %1809
        %1813 = vset.pattern.permute.xlu0 0
        %1814 = vperm.xlu0 %1813, %v1735
        %v1815 = vpop.permute.xlu0 %1814
        %1818 = vset.pattern.permute.xlu0 0
        %1819 = vperm.xlu0 %1818, %v1736
        %v1820 = vpop.permute.xlu0 %1819
        %1823 = vset.pattern.permute.xlu0 0
        %1824 = vperm.xlu0 %1823, %v1737
        %v1825 = vpop.permute.xlu0 %1824
        %1828 = vset.pattern.permute.xlu0 0
        %1829 = vperm.xlu0 %1828, %v1738
        %v1830 = vpop.permute.xlu0 %1829
        %1833 = vset.pattern.permute.xlu0 0
        %1834 = vperm.xlu0 %1833, %v1739
        %v1835 = vpop.permute.xlu0 %1834
        %1838 = vset.pattern.permute.xlu0 0
        %1839 = vperm.xlu0 %1838, %v1740
        %v1840 = vpop.permute.xlu0 %1839
        %1843 = vset.pattern.permute.xlu0 0
        %1844 = vperm.xlu0 %1843, %v1741
        %v1845 = vpop.permute.xlu0 %1844
        %1848 = vset.pattern.permute.xlu0 0
        %1849 = vperm.xlu0 %1848, %v1742
        %v1850 = vpop.permute.xlu0 %1849
        %1853 = vset.pattern.permute.xlu0 0
        %1854 = vperm.xlu0 %1853, %v1743
        %v1855 = vpop.permute.xlu0 %1854
        %v1857 = vmul.f32 %v1785, %v1800
        %v1858 = vmul.f32 %v1786, %v1805
        %v1859 = vmul.f32 %v1787, %v1810
        %v1860 = vmul.f32 %v1788, %v1815
        %v1861 = vmul.f32 %v1789, %v1820
        %v1862 = vmul.f32 %v1790, %v1825
        %v1863 = vmul.f32 %v1791, %v1830
        %v1864 = vmul.f32 %v1792, %v1835
        %v1865 = vmul.f32 %v1793, %v1840
        %v1866 = vmul.f32 %v1794, %v1845
        %v1867 = vmul.f32 %v1795, %v1850
        %v1868 = vmul.f32 %v1796, %v1855
        %v1869 = vadd.f32 %v1857, 0.0
        %v1870 = vadd.f32 %v1858, 0.0
        %v1871 = vadd.f32 %v1859, 0.0
        %v1872 = vadd.f32 %v1860, 0.0
        %v1873 = vadd.f32 %v1861, 0.0
        %v1874 = vadd.f32 %v1862, 0.0
        %v1875 = vadd.f32 %v1863, 0.0
        %v1876 = vadd.f32 %v1864, 0.0
        %v1877 = vadd.f32 %v1865, 0.0
        %v1878 = vadd.f32 %v1866, 0.0
        %v1879 = vadd.f32 %v1867, 0.0
        %v1880 = vadd.f32 %v1868, 0.0
        %1881 = vrot.lane.b32.xlu0 %v1674, 2
        %v1882 = vpop.permute.xlu0 %1881
        %1883 = vrot.lane.b32.xlu0 %v1679, 2
        %v1884 = vpop.permute.xlu0 %1883
        %1885 = vrot.lane.b32.xlu0 %v1684, 2
        %v1886 = vpop.permute.xlu0 %1885
        %1887 = vrot.lane.b32.xlu0 %v1689, 2
        %v1888 = vpop.permute.xlu0 %1887
        %1889 = vrot.lane.b32.xlu0 %v1694, 2
        %v1890 = vpop.permute.xlu0 %1889
        %1891 = vrot.lane.b32.xlu0 %v1699, 2
        %v1892 = vpop.permute.xlu0 %1891
        %1893 = vrot.lane.b32.xlu0 %v1704, 2
        %v1894 = vpop.permute.xlu0 %1893
        %1895 = vrot.lane.b32.xlu0 %v1709, 2
        %v1896 = vpop.permute.xlu0 %1895
        %1897 = vrot.lane.b32.xlu0 %v1714, 2
        %v1898 = vpop.permute.xlu0 %1897
        %1899 = vrot.lane.b32.xlu0 %v1719, 2
        %v1900 = vpop.permute.xlu0 %1899
        %1901 = vrot.lane.b32.xlu0 %v1724, 2
        %v1902 = vpop.permute.xlu0 %1901
        %1903 = vrot.lane.b32.xlu0 %v1729, 2
        %v1904 = vpop.permute.xlu0 %1903
        %vm1905 = vcmp.ge.s32.totalorder %v1281, 2
        %vm1906 = vcmp.lt.s32.totalorder %v1281, 130
        %vm1907 = vmand %vm1905, %vm1906
        %v1908 = vsel %vm1907, 1, 0
        %v1909 = vcvt.s32.f32 %v1908
        %v1910 = vmul.f32 %v1882, %v1909
        %v1911 = vmul.f32 %v1884, %v1909
        %v1912 = vmul.f32 %v1886, %v1909
        %v1913 = vmul.f32 %v1888, %v1909
        %v1914 = vmul.f32 %v1890, %v1909
        %v1915 = vmul.f32 %v1892, %v1909
        %v1916 = vmul.f32 %v1894, %v1909
        %v1917 = vmul.f32 %v1896, %v1909
        %v1918 = vmul.f32 %v1898, %v1909
        %v1919 = vmul.f32 %v1900, %v1909
        %v1920 = vmul.f32 %v1902, %v1909
        %v1921 = vmul.f32 %v1904, %v1909
        %1922 = vset.pattern.permute.xlu0 1
        %1923 = vperm.xlu0 %1922, %v1732
        %v1924 = vpop.permute.xlu0 %1923
        %1926 = vset.pattern.permute.xlu0 1
        %1927 = vperm.xlu0 %1926, %v1733
        %v1928 = vpop.permute.xlu0 %1927
        %1930 = vset.pattern.permute.xlu0 1
        %1931 = vperm.xlu0 %1930, %v1734
        %v1932 = vpop.permute.xlu0 %1931
        %1934 = vset.pattern.permute.xlu0 1
        %1935 = vperm.xlu0 %1934, %v1735
        %v1936 = vpop.permute.xlu0 %1935
        %1938 = vset.pattern.permute.xlu0 1
        %1939 = vperm.xlu0 %1938, %v1736
        %v1940 = vpop.permute.xlu0 %1939
        %1942 = vset.pattern.permute.xlu0 1
        %1943 = vperm.xlu0 %1942, %v1737
        %v1944 = vpop.permute.xlu0 %1943
        %1946 = vset.pattern.permute.xlu0 1
        %1947 = vperm.xlu0 %1946, %v1738
        %v1948 = vpop.permute.xlu0 %1947
        %1950 = vset.pattern.permute.xlu0 1
        %1951 = vperm.xlu0 %1950, %v1739
        %v1952 = vpop.permute.xlu0 %1951
        %1954 = vset.pattern.permute.xlu0 1
        %1955 = vperm.xlu0 %1954, %v1740
        %v1956 = vpop.permute.xlu0 %1955
        %1958 = vset.pattern.permute.xlu0 1
        %1959 = vperm.xlu0 %1958, %v1741
        %v1960 = vpop.permute.xlu0 %1959
        %1962 = vset.pattern.permute.xlu0 1
        %1963 = vperm.xlu0 %1962, %v1742
        %v1964 = vpop.permute.xlu0 %1963
        %1966 = vset.pattern.permute.xlu0 1
        %1967 = vperm.xlu0 %1966, %v1743
        %v1968 = vpop.permute.xlu0 %1967
        %v1970 = vmul.f32 %v1910, %v1924
        %v1971 = vmul.f32 %v1911, %v1928
        %v1972 = vmul.f32 %v1912, %v1932
        %v1973 = vmul.f32 %v1913, %v1936
        %v1974 = vmul.f32 %v1914, %v1940
        %v1975 = vmul.f32 %v1915, %v1944
        %v1976 = vmul.f32 %v1916, %v1948
        %v1977 = vmul.f32 %v1917, %v1952
        %v1978 = vmul.f32 %v1918, %v1956
        %v1979 = vmul.f32 %v1919, %v1960
        %v1980 = vmul.f32 %v1920, %v1964
        %v1981 = vmul.f32 %v1921, %v1968
        %v1982 = vadd.f32 %v1869, %v1970
        %v1983 = vadd.f32 %v1870, %v1971
        %v1984 = vadd.f32 %v1871, %v1972
        %v1985 = vadd.f32 %v1872, %v1973
        %v1986 = vadd.f32 %v1873, %v1974
        %v1987 = vadd.f32 %v1874, %v1975
        %v1988 = vadd.f32 %v1875, %v1976
        %v1989 = vadd.f32 %v1876, %v1977
        %v1990 = vadd.f32 %v1877, %v1978
        %v1991 = vadd.f32 %v1878, %v1979
        %v1992 = vadd.f32 %v1879, %v1980
        %v1993 = vadd.f32 %v1880, %v1981
        %1994 = vrot.lane.b32.xlu0 %v1674, 1
        %v1995 = vpop.permute.xlu0 %1994
        %1996 = vrot.lane.b32.xlu0 %v1679, 1
        %v1997 = vpop.permute.xlu0 %1996
        %1998 = vrot.lane.b32.xlu0 %v1684, 1
        %v1999 = vpop.permute.xlu0 %1998
        %2000 = vrot.lane.b32.xlu0 %v1689, 1
        %v2001 = vpop.permute.xlu0 %2000
        %2002 = vrot.lane.b32.xlu0 %v1694, 1
        %v2003 = vpop.permute.xlu0 %2002
        %2004 = vrot.lane.b32.xlu0 %v1699, 1
        %v2005 = vpop.permute.xlu0 %2004
        %2006 = vrot.lane.b32.xlu0 %v1704, 1
        %v2007 = vpop.permute.xlu0 %2006
        %2008 = vrot.lane.b32.xlu0 %v1709, 1
        %v2009 = vpop.permute.xlu0 %2008
        %2010 = vrot.lane.b32.xlu0 %v1714, 1
        %v2011 = vpop.permute.xlu0 %2010
        %2012 = vrot.lane.b32.xlu0 %v1719, 1
        %v2013 = vpop.permute.xlu0 %2012
        %2014 = vrot.lane.b32.xlu0 %v1724, 1
        %v2015 = vpop.permute.xlu0 %2014
        %2016 = vrot.lane.b32.xlu0 %v1729, 1
        %v2017 = vpop.permute.xlu0 %2016
        %vm2018 = vcmp.ge.s32.totalorder %v1281, 1
        %vm2019 = vcmp.lt.s32.totalorder %v1281, 129
        %vm2020 = vmand %vm2018, %vm2019
        %v2021 = vsel %vm2020, 1, 0
        %v2022 = vcvt.s32.f32 %v2021
        %v2023 = vmul.f32 %v1995, %v2022
        %v2024 = vmul.f32 %v1997, %v2022
        %v2025 = vmul.f32 %v1999, %v2022
        %v2026 = vmul.f32 %v2001, %v2022
        %v2027 = vmul.f32 %v2003, %v2022
        %v2028 = vmul.f32 %v2005, %v2022
        %v2029 = vmul.f32 %v2007, %v2022
        %v2030 = vmul.f32 %v2009, %v2022
        %v2031 = vmul.f32 %v2011, %v2022
        %v2032 = vmul.f32 %v2013, %v2022
        %v2033 = vmul.f32 %v2015, %v2022
        %v2034 = vmul.f32 %v2017, %v2022
        %2035 = vset.pattern.permute.xlu0 2
        %2036 = vperm.xlu0 %2035, %v1732
        %v2037 = vpop.permute.xlu0 %2036
        %2039 = vset.pattern.permute.xlu0 2
        %2040 = vperm.xlu0 %2039, %v1733
        %v2041 = vpop.permute.xlu0 %2040
        %2043 = vset.pattern.permute.xlu0 2
        %2044 = vperm.xlu0 %2043, %v1734
        %v2045 = vpop.permute.xlu0 %2044
        %2047 = vset.pattern.permute.xlu0 2
        %2048 = vperm.xlu0 %2047, %v1735
        %v2049 = vpop.permute.xlu0 %2048
        %2051 = vset.pattern.permute.xlu0 2
        %2052 = vperm.xlu0 %2051, %v1736
        %v2053 = vpop.permute.xlu0 %2052
        %2055 = vset.pattern.permute.xlu0 2
        %2056 = vperm.xlu0 %2055, %v1737
        %v2057 = vpop.permute.xlu0 %2056
        %2059 = vset.pattern.permute.xlu0 2
        %2060 = vperm.xlu0 %2059, %v1738
        %v2061 = vpop.permute.xlu0 %2060
        %2063 = vset.pattern.permute.xlu0 2
        %2064 = vperm.xlu0 %2063, %v1739
        %v2065 = vpop.permute.xlu0 %2064
        %2067 = vset.pattern.permute.xlu0 2
        %2068 = vperm.xlu0 %2067, %v1740
        %v2069 = vpop.permute.xlu0 %2068
        %2071 = vset.pattern.permute.xlu0 2
        %2072 = vperm.xlu0 %2071, %v1741
        %v2073 = vpop.permute.xlu0 %2072
        %2075 = vset.pattern.permute.xlu0 2
        %2076 = vperm.xlu0 %2075, %v1742
        %v2077 = vpop.permute.xlu0 %2076
        %2079 = vset.pattern.permute.xlu0 2
        %2080 = vperm.xlu0 %2079, %v1743
        %v2081 = vpop.permute.xlu0 %2080
        %v2083 = vmul.f32 %v2023, %v2037
        %v2084 = vmul.f32 %v2024, %v2041
        %v2085 = vmul.f32 %v2025, %v2045
        %v2086 = vmul.f32 %v2026, %v2049
        %v2087 = vmul.f32 %v2027, %v2053
        %v2088 = vmul.f32 %v2028, %v2057
        %v2089 = vmul.f32 %v2029, %v2061
        %v2090 = vmul.f32 %v2030, %v2065
        %v2091 = vmul.f32 %v2031, %v2069
        %v2092 = vmul.f32 %v2032, %v2073
        %v2093 = vmul.f32 %v2033, %v2077
        %v2094 = vmul.f32 %v2034, %v2081
        %v2095 = vadd.f32 %v1982, %v2083
        %v2096 = vadd.f32 %v1983, %v2084
        %v2097 = vadd.f32 %v1984, %v2085
        %v2098 = vadd.f32 %v1985, %v2086
        %v2099 = vadd.f32 %v1986, %v2087
        %v2100 = vadd.f32 %v1987, %v2088
        %v2101 = vadd.f32 %v1988, %v2089
        %v2102 = vadd.f32 %v1989, %v2090
        %v2103 = vadd.f32 %v1990, %v2091
        %v2104 = vadd.f32 %v1991, %v2092
        %v2105 = vadd.f32 %v1992, %v2093
        %v2106 = vadd.f32 %v1993, %v2094
        %2107 = vset.pattern.permute.xlu0 3
        %2108 = vperm.xlu0 %2107, %v1732
        %v2109 = vpop.permute.xlu0 %2108
        %2111 = vset.pattern.permute.xlu0 3
        %2112 = vperm.xlu0 %2111, %v1733
        %v2113 = vpop.permute.xlu0 %2112
        %2115 = vset.pattern.permute.xlu0 3
        %2116 = vperm.xlu0 %2115, %v1734
        %v2117 = vpop.permute.xlu0 %2116
        %2119 = vset.pattern.permute.xlu0 3
        %2120 = vperm.xlu0 %2119, %v1735
        %v2121 = vpop.permute.xlu0 %2120
        %2123 = vset.pattern.permute.xlu0 3
        %2124 = vperm.xlu0 %2123, %v1736
        %v2125 = vpop.permute.xlu0 %2124
        %2127 = vset.pattern.permute.xlu0 3
        %2128 = vperm.xlu0 %2127, %v1737
        %v2129 = vpop.permute.xlu0 %2128
        %2131 = vset.pattern.permute.xlu0 3
        %2132 = vperm.xlu0 %2131, %v1738
        %v2133 = vpop.permute.xlu0 %2132
        %2135 = vset.pattern.permute.xlu0 3
        %2136 = vperm.xlu0 %2135, %v1739
        %v2137 = vpop.permute.xlu0 %2136
        %2139 = vset.pattern.permute.xlu0 3
        %2140 = vperm.xlu0 %2139, %v1740
        %v2141 = vpop.permute.xlu0 %2140
        %2143 = vset.pattern.permute.xlu0 3
        %2144 = vperm.xlu0 %2143, %v1741
        %v2145 = vpop.permute.xlu0 %2144
        %2147 = vset.pattern.permute.xlu0 3
        %2148 = vperm.xlu0 %2147, %v1742
        %v2149 = vpop.permute.xlu0 %2148
        %2151 = vset.pattern.permute.xlu0 3
        %2152 = vperm.xlu0 %2151, %v1743
        %v2153 = vpop.permute.xlu0 %2152
        %v2155 = vmul.f32 %v1674, %v2109
        %v2156 = vmul.f32 %v1679, %v2113
        %v2157 = vmul.f32 %v1684, %v2117
        %v2158 = vmul.f32 %v1689, %v2121
        %v2159 = vmul.f32 %v1694, %v2125
        %v2160 = vmul.f32 %v1699, %v2129
        %v2161 = vmul.f32 %v1704, %v2133
        %v2162 = vmul.f32 %v1709, %v2137
        %v2163 = vmul.f32 %v1714, %v2141
        %v2164 = vmul.f32 %v1719, %v2145
        %v2165 = vmul.f32 %v1724, %v2149
        %v2166 = vmul.f32 %v1729, %v2153
        %v2167 = vadd.f32 %v2095, %v2155
        %v2168 = vadd.f32 %v2096, %v2156
        %v2169 = vadd.f32 %v2097, %v2157
        %v2170 = vadd.f32 %v2098, %v2158
        %v2171 = vadd.f32 %v2099, %v2159
        %v2172 = vadd.f32 %v2100, %v2160
        %v2173 = vadd.f32 %v2101, %v2161
        %v2174 = vadd.f32 %v2102, %v2162
        %v2175 = vadd.f32 %v2103, %v2163
        %v2176 = vadd.f32 %v2104, %v2164
        %v2177 = vadd.f32 %v2105, %v2165
        %v2178 = vadd.f32 %v2106, %v2166
        %2179 = vrot.lane.b32.xlu0 %v1674, 127
        %v2180 = vpop.permute.xlu0 %2179
        %2181 = vrot.lane.b32.xlu0 %v1679, 127
        %v2182 = vpop.permute.xlu0 %2181
        %2183 = vrot.lane.b32.xlu0 %v1684, 127
        %v2184 = vpop.permute.xlu0 %2183
        %2185 = vrot.lane.b32.xlu0 %v1689, 127
        %v2186 = vpop.permute.xlu0 %2185
        %2187 = vrot.lane.b32.xlu0 %v1694, 127
        %v2188 = vpop.permute.xlu0 %2187
        %2189 = vrot.lane.b32.xlu0 %v1699, 127
        %v2190 = vpop.permute.xlu0 %2189
        %2191 = vrot.lane.b32.xlu0 %v1704, 127
        %v2192 = vpop.permute.xlu0 %2191
        %2193 = vrot.lane.b32.xlu0 %v1709, 127
        %v2194 = vpop.permute.xlu0 %2193
        %2195 = vrot.lane.b32.xlu0 %v1714, 127
        %v2196 = vpop.permute.xlu0 %2195
        %2197 = vrot.lane.b32.xlu0 %v1719, 127
        %v2198 = vpop.permute.xlu0 %2197
        %2199 = vrot.lane.b32.xlu0 %v1724, 127
        %v2200 = vpop.permute.xlu0 %2199
        %2201 = vrot.lane.b32.xlu0 %v1729, 127
        %v2202 = vpop.permute.xlu0 %2201
        %vm2203 = vcmp.ge.s32.totalorder %v1281, 4294967295
        %vm2204 = vcmp.lt.s32.totalorder %v1281, 127
        %vm2205 = vmand %vm2203, %vm2204
        %v2206 = vsel %vm2205, 1, 0
        %v2207 = vcvt.s32.f32 %v2206
        %v2208 = vmul.f32 %v2180, %v2207
        %v2209 = vmul.f32 %v2182, %v2207
        %v2210 = vmul.f32 %v2184, %v2207
        %v2211 = vmul.f32 %v2186, %v2207
        %v2212 = vmul.f32 %v2188, %v2207
        %v2213 = vmul.f32 %v2190, %v2207
        %v2214 = vmul.f32 %v2192, %v2207
        %v2215 = vmul.f32 %v2194, %v2207
        %v2216 = vmul.f32 %v2196, %v2207
        %v2217 = vmul.f32 %v2198, %v2207
        %v2218 = vmul.f32 %v2200, %v2207
        %v2219 = vmul.f32 %v2202, %v2207
        %2220 = vset.pattern.permute.xlu0 4
        %2221 = vperm.xlu0 %2220, %v1732
        %v2222 = vpop.permute.xlu0 %2221
        %2224 = vset.pattern.permute.xlu0 4
        %2225 = vperm.xlu0 %2224, %v1733
        %v2226 = vpop.permute.xlu0 %2225
        %2228 = vset.pattern.permute.xlu0 4
        %2229 = vperm.xlu0 %2228, %v1734
        %v2230 = vpop.permute.xlu0 %2229
        %2232 = vset.pattern.permute.xlu0 4
        %2233 = vperm.xlu0 %2232, %v1735
        %v2234 = vpop.permute.xlu0 %2233
        %2236 = vset.pattern.permute.xlu0 4
        %2237 = vperm.xlu0 %2236, %v1736
        %v2238 = vpop.permute.xlu0 %2237
        %2240 = vset.pattern.permute.xlu0 4
        %2241 = vperm.xlu0 %2240, %v1737
        %v2242 = vpop.permute.xlu0 %2241
        %2244 = vset.pattern.permute.xlu0 4
        %2245 = vperm.xlu0 %2244, %v1738
        %v2246 = vpop.permute.xlu0 %2245
        %2248 = vset.pattern.permute.xlu0 4
        %2249 = vperm.xlu0 %2248, %v1739
        %v2250 = vpop.permute.xlu0 %2249
        %2252 = vset.pattern.permute.xlu0 4
        %2253 = vperm.xlu0 %2252, %v1740
        %v2254 = vpop.permute.xlu0 %2253
        %2256 = vset.pattern.permute.xlu0 4
        %2257 = vperm.xlu0 %2256, %v1741
        %v2258 = vpop.permute.xlu0 %2257
        %2260 = vset.pattern.permute.xlu0 4
        %2261 = vperm.xlu0 %2260, %v1742
        %v2262 = vpop.permute.xlu0 %2261
        %2264 = vset.pattern.permute.xlu0 4
        %2265 = vperm.xlu0 %2264, %v1743
        %v2266 = vpop.permute.xlu0 %2265
        %v2268 = vmul.f32 %v2208, %v2222
        %v2269 = vmul.f32 %v2209, %v2226
        %v2270 = vmul.f32 %v2210, %v2230
        %v2271 = vmul.f32 %v2211, %v2234
        %v2272 = vmul.f32 %v2212, %v2238
        %v2273 = vmul.f32 %v2213, %v2242
        %v2274 = vmul.f32 %v2214, %v2246
        %v2275 = vmul.f32 %v2215, %v2250
        %v2276 = vmul.f32 %v2216, %v2254
        %v2277 = vmul.f32 %v2217, %v2258
        %v2278 = vmul.f32 %v2218, %v2262
        %v2279 = vmul.f32 %v2219, %v2266
        %v2280 = vadd.f32 %v2167, %v2268
        %v2281 = vadd.f32 %v2168, %v2269
        %v2282 = vadd.f32 %v2169, %v2270
        %v2283 = vadd.f32 %v2170, %v2271
        %v2284 = vadd.f32 %v2171, %v2272
        %v2285 = vadd.f32 %v2172, %v2273
        %v2286 = vadd.f32 %v2173, %v2274
        %v2287 = vadd.f32 %v2174, %v2275
        %v2288 = vadd.f32 %v2175, %v2276
        %v2289 = vadd.f32 %v2176, %v2277
        %v2290 = vadd.f32 %v2177, %v2278
        %v2291 = vadd.f32 %v2178, %v2279
        %2292 = vrot.lane.b32.xlu0 %v1674, 126
        %v2293 = vpop.permute.xlu0 %2292
        %2294 = vrot.lane.b32.xlu0 %v1679, 126
        %v2295 = vpop.permute.xlu0 %2294
        %2296 = vrot.lane.b32.xlu0 %v1684, 126
        %v2297 = vpop.permute.xlu0 %2296
        %2298 = vrot.lane.b32.xlu0 %v1689, 126
        %v2299 = vpop.permute.xlu0 %2298
        %2300 = vrot.lane.b32.xlu0 %v1694, 126
        %v2301 = vpop.permute.xlu0 %2300
        %2302 = vrot.lane.b32.xlu0 %v1699, 126
        %v2303 = vpop.permute.xlu0 %2302
        %2304 = vrot.lane.b32.xlu0 %v1704, 126
        %v2305 = vpop.permute.xlu0 %2304
        %2306 = vrot.lane.b32.xlu0 %v1709, 126
        %v2307 = vpop.permute.xlu0 %2306
        %2308 = vrot.lane.b32.xlu0 %v1714, 126
        %v2309 = vpop.permute.xlu0 %2308
        %2310 = vrot.lane.b32.xlu0 %v1719, 126
        %v2311 = vpop.permute.xlu0 %2310
        %2312 = vrot.lane.b32.xlu0 %v1724, 126
        %v2313 = vpop.permute.xlu0 %2312
        %2314 = vrot.lane.b32.xlu0 %v1729, 126
        %v2315 = vpop.permute.xlu0 %2314
        %vm2316 = vcmp.ge.s32.totalorder %v1281, 4294967294
        %vm2317 = vcmp.lt.s32.totalorder %v1281, 126
        %vm2318 = vmand %vm2316, %vm2317
        %v2319 = vsel %vm2318, 1, 0
        %v2320 = vcvt.s32.f32 %v2319
        %v2321 = vmul.f32 %v2293, %v2320
        %v2322 = vmul.f32 %v2295, %v2320
        %v2323 = vmul.f32 %v2297, %v2320
        %v2324 = vmul.f32 %v2299, %v2320
        %v2325 = vmul.f32 %v2301, %v2320
        %v2326 = vmul.f32 %v2303, %v2320
        %v2327 = vmul.f32 %v2305, %v2320
        %v2328 = vmul.f32 %v2307, %v2320
        %v2329 = vmul.f32 %v2309, %v2320
        %v2330 = vmul.f32 %v2311, %v2320
        %v2331 = vmul.f32 %v2313, %v2320
        %v2332 = vmul.f32 %v2315, %v2320
        %2333 = vset.pattern.permute.xlu0 5
        %2334 = vperm.xlu0 %2333, %v1732
        %v2335 = vpop.permute.xlu0 %2334
        %2337 = vset.pattern.permute.xlu0 5
        %2338 = vperm.xlu0 %2337, %v1733
        %v2339 = vpop.permute.xlu0 %2338
        %2341 = vset.pattern.permute.xlu0 5
        %2342 = vperm.xlu0 %2341, %v1734
        %v2343 = vpop.permute.xlu0 %2342
        %2345 = vset.pattern.permute.xlu0 5
        %2346 = vperm.xlu0 %2345, %v1735
        %v2347 = vpop.permute.xlu0 %2346
        %2349 = vset.pattern.permute.xlu0 5
        %2350 = vperm.xlu0 %2349, %v1736
        %v2351 = vpop.permute.xlu0 %2350
        %2353 = vset.pattern.permute.xlu0 5
        %2354 = vperm.xlu0 %2353, %v1737
        %v2355 = vpop.permute.xlu0 %2354
        %2357 = vset.pattern.permute.xlu0 5
        %2358 = vperm.xlu0 %2357, %v1738
        %v2359 = vpop.permute.xlu0 %2358
        %2361 = vset.pattern.permute.xlu0 5
        %2362 = vperm.xlu0 %2361, %v1739
        %v2363 = vpop.permute.xlu0 %2362
        %2365 = vset.pattern.permute.xlu0 5
        %2366 = vperm.xlu0 %2365, %v1740
        %v2367 = vpop.permute.xlu0 %2366
        %2369 = vset.pattern.permute.xlu0 5
        %2370 = vperm.xlu0 %2369, %v1741
        %v2371 = vpop.permute.xlu0 %2370
        %2373 = vset.pattern.permute.xlu0 5
        %2374 = vperm.xlu0 %2373, %v1742
        %v2375 = vpop.permute.xlu0 %2374
        %2377 = vset.pattern.permute.xlu0 5
        %2378 = vperm.xlu0 %2377, %v1743
        %v2379 = vpop.permute.xlu0 %2378
        %v2381 = vmul.f32 %v2321, %v2335
        %v2382 = vmul.f32 %v2322, %v2339
        %v2383 = vmul.f32 %v2323, %v2343
        %v2384 = vmul.f32 %v2324, %v2347
        %v2385 = vmul.f32 %v2325, %v2351
        %v2386 = vmul.f32 %v2326, %v2355
        %v2387 = vmul.f32 %v2327, %v2359
        %v2388 = vmul.f32 %v2328, %v2363
        %v2389 = vmul.f32 %v2329, %v2367
        %v2390 = vmul.f32 %v2330, %v2371
        %v2391 = vmul.f32 %v2331, %v2375
        %v2392 = vmul.f32 %v2332, %v2379
        %v2393 = vadd.f32 %v2280, %v2381
        %v2394 = vadd.f32 %v2281, %v2382
        %v2395 = vadd.f32 %v2282, %v2383
        %v2396 = vadd.f32 %v2283, %v2384
        %v2397 = vadd.f32 %v2284, %v2385
        %v2398 = vadd.f32 %v2285, %v2386
        %v2399 = vadd.f32 %v2286, %v2387
        %v2400 = vadd.f32 %v2287, %v2388
        %v2401 = vadd.f32 %v2288, %v2389
        %v2402 = vadd.f32 %v2289, %v2390
        %v2403 = vadd.f32 %v2290, %v2391
        %v2404 = vadd.f32 %v2291, %v2392
        %2405 = vrot.lane.b32.xlu0 %v1674, 125
        %v2406 = vpop.permute.xlu0 %2405
        %2407 = vrot.lane.b32.xlu0 %v1679, 125
        %v2408 = vpop.permute.xlu0 %2407
        %2409 = vrot.lane.b32.xlu0 %v1684, 125
        %v2410 = vpop.permute.xlu0 %2409
        %2411 = vrot.lane.b32.xlu0 %v1689, 125
        %v2412 = vpop.permute.xlu0 %2411
        %2413 = vrot.lane.b32.xlu0 %v1694, 125
        %v2414 = vpop.permute.xlu0 %2413
        %2415 = vrot.lane.b32.xlu0 %v1699, 125
        %v2416 = vpop.permute.xlu0 %2415
        %2417 = vrot.lane.b32.xlu0 %v1704, 125
        %v2418 = vpop.permute.xlu0 %2417
        %2419 = vrot.lane.b32.xlu0 %v1709, 125
        %v2420 = vpop.permute.xlu0 %2419
        %2421 = vrot.lane.b32.xlu0 %v1714, 125
        %v2422 = vpop.permute.xlu0 %2421
        %2423 = vrot.lane.b32.xlu0 %v1719, 125
        %v2424 = vpop.permute.xlu0 %2423
        %2425 = vrot.lane.b32.xlu0 %v1724, 125
        %v2426 = vpop.permute.xlu0 %2425
        %2427 = vrot.lane.b32.xlu0 %v1729, 125
        %v2428 = vpop.permute.xlu0 %2427
        %vm2429 = vcmp.ge.s32.totalorder %v1281, 4294967293
        %vm2430 = vcmp.lt.s32.totalorder %v1281, 125
        %vm2431 = vmand %vm2429, %vm2430
        %v2432 = vsel %vm2431, 1, 0
        %v2433 = vcvt.s32.f32 %v2432
        %v2434 = vmul.f32 %v2406, %v2433
        %v2435 = vmul.f32 %v2408, %v2433
        %v2436 = vmul.f32 %v2410, %v2433
        %v2437 = vmul.f32 %v2412, %v2433
        %v2438 = vmul.f32 %v2414, %v2433
        %v2439 = vmul.f32 %v2416, %v2433
        %v2440 = vmul.f32 %v2418, %v2433
        %v2441 = vmul.f32 %v2420, %v2433
        %v2442 = vmul.f32 %v2422, %v2433
        %v2443 = vmul.f32 %v2424, %v2433
        %v2444 = vmul.f32 %v2426, %v2433
        %v2445 = vmul.f32 %v2428, %v2433
        %2446 = vset.pattern.permute.xlu0 6
        %2447 = vperm.xlu0 %2446, %v1732
        %v2448 = vpop.permute.xlu0 %2447
        %2450 = vset.pattern.permute.xlu0 6
        %2451 = vperm.xlu0 %2450, %v1733
        %v2452 = vpop.permute.xlu0 %2451
        %2454 = vset.pattern.permute.xlu0 6
        %2455 = vperm.xlu0 %2454, %v1734
        %v2456 = vpop.permute.xlu0 %2455
        %2458 = vset.pattern.permute.xlu0 6
        %2459 = vperm.xlu0 %2458, %v1735
        %v2460 = vpop.permute.xlu0 %2459
        %2462 = vset.pattern.permute.xlu0 6
        %2463 = vperm.xlu0 %2462, %v1736
        %v2464 = vpop.permute.xlu0 %2463
        %2466 = vset.pattern.permute.xlu0 6
        %2467 = vperm.xlu0 %2466, %v1737
        %v2468 = vpop.permute.xlu0 %2467
        %2470 = vset.pattern.permute.xlu0 6
        %2471 = vperm.xlu0 %2470, %v1738
        %v2472 = vpop.permute.xlu0 %2471
        %2474 = vset.pattern.permute.xlu0 6
        %2475 = vperm.xlu0 %2474, %v1739
        %v2476 = vpop.permute.xlu0 %2475
        %2478 = vset.pattern.permute.xlu0 6
        %2479 = vperm.xlu0 %2478, %v1740
        %v2480 = vpop.permute.xlu0 %2479
        %2482 = vset.pattern.permute.xlu0 6
        %2483 = vperm.xlu0 %2482, %v1741
        %v2484 = vpop.permute.xlu0 %2483
        %2486 = vset.pattern.permute.xlu0 6
        %2487 = vperm.xlu0 %2486, %v1742
        %v2488 = vpop.permute.xlu0 %2487
        %2490 = vset.pattern.permute.xlu0 6
        %2491 = vperm.xlu0 %2490, %v1743
        %v2492 = vpop.permute.xlu0 %2491
        %v2494 = vmul.f32 %v2434, %v2448
        %v2495 = vmul.f32 %v2435, %v2452
        %v2496 = vmul.f32 %v2436, %v2456
        %v2497 = vmul.f32 %v2437, %v2460
        %v2498 = vmul.f32 %v2438, %v2464
        %v2499 = vmul.f32 %v2439, %v2468
        %v2500 = vmul.f32 %v2440, %v2472
        %v2501 = vmul.f32 %v2441, %v2476
        %v2502 = vmul.f32 %v2442, %v2480
        %v2503 = vmul.f32 %v2443, %v2484
        %v2504 = vmul.f32 %v2444, %v2488
        %v2505 = vmul.f32 %v2445, %v2492
        %v2506 = vadd.f32 %v2393, %v2494
        %v2507 = vadd.f32 %v2394, %v2495
        %v2508 = vadd.f32 %v2395, %v2496
        %v2509 = vadd.f32 %v2396, %v2497
        %v2510 = vadd.f32 %v2397, %v2498
        %v2511 = vadd.f32 %v2398, %v2499
        %v2512 = vadd.f32 %v2399, %v2500
        %v2513 = vadd.f32 %v2400, %v2501
        %v2514 = vadd.f32 %v2401, %v2502
        %v2515 = vadd.f32 %v2402, %v2503
        %v2516 = vadd.f32 %v2403, %v2504
        %v2517 = vadd.f32 %v2404, %v2505
        %2519 = vset.pattern.permute.xlu0 0
        %2520 = vperm.xlu0 %2519, %v1744
        %v2521 = vpop.permute.xlu0 %2520
        %2524 = vset.pattern.permute.xlu0 0
        %2525 = vperm.xlu0 %2524, %v1745
        %v2526 = vpop.permute.xlu0 %2525
        %2529 = vset.pattern.permute.xlu0 0
        %2530 = vperm.xlu0 %2529, %v1746
        %v2531 = vpop.permute.xlu0 %2530
        %2534 = vset.pattern.permute.xlu0 0
        %2535 = vperm.xlu0 %2534, %v1747
        %v2536 = vpop.permute.xlu0 %2535
        %2539 = vset.pattern.permute.xlu0 0
        %2540 = vperm.xlu0 %2539, %v1748
        %v2541 = vpop.permute.xlu0 %2540
        %2544 = vset.pattern.permute.xlu0 0
        %2545 = vperm.xlu0 %2544, %v1749
        %v2546 = vpop.permute.xlu0 %2545
        %2549 = vset.pattern.permute.xlu0 0
        %2550 = vperm.xlu0 %2549, %v1750
        %v2551 = vpop.permute.xlu0 %2550
        %2554 = vset.pattern.permute.xlu0 0
        %2555 = vperm.xlu0 %2554, %v1751
        %v2556 = vpop.permute.xlu0 %2555
        %2559 = vset.pattern.permute.xlu0 0
        %2560 = vperm.xlu0 %2559, %v1752
        %v2561 = vpop.permute.xlu0 %2560
        %2564 = vset.pattern.permute.xlu0 0
        %2565 = vperm.xlu0 %2564, %v1753
        %v2566 = vpop.permute.xlu0 %2565
        %2569 = vset.pattern.permute.xlu0 0
        %2570 = vperm.xlu0 %2569, %v1754
        %v2571 = vpop.permute.xlu0 %2570
        %2574 = vset.pattern.permute.xlu0 0
        %2575 = vperm.xlu0 %2574, %v1755
        %v2576 = vpop.permute.xlu0 %2575
        %v2578 = vadd.f32 %v2506, %v2521
        %v2579 = vadd.f32 %v2507, %v2526
        %v2580 = vadd.f32 %v2508, %v2531
        %v2581 = vadd.f32 %v2509, %v2536
        %v2582 = vadd.f32 %v2510, %v2541
        %v2583 = vadd.f32 %v2511, %v2546
        %v2584 = vadd.f32 %v2512, %v2551
        %v2585 = vadd.f32 %v2513, %v2556
        %v2586 = vadd.f32 %v2514, %v2561
        %v2587 = vadd.f32 %v2515, %v2566
        %v2588 = vadd.f32 %v2516, %v2571
        %v2589 = vadd.f32 %v2517, %v2576
        %v2590 = vld [vmem:[#allocation22] sm:$0xff]
        %v2591 = vld [vmem:[#allocation22 + $0x8] sm:$0xff]
        %v2592 = vld [vmem:[#allocation22 + $0x10] sm:$0xff]
        %v2593 = vld [vmem:[#allocation22 + $0x18] sm:$0xff]
        %v2594 = vmul.f32 %v2578, %v2582
        %v2595 = vmul.f32 %v2579, %v2583
        %v2596 = vmul.f32 %v2580, %v2584
        %v2597 = vmul.f32 %v2581, %v2585
        %v2598 = vld [vmem:[#allocation23] sm:$0xff]
        %v2599 = vld [vmem:[#allocation23 + $0x8] sm:$0xff]
        %v2600 = vld [vmem:[#allocation23 + $0x10] sm:$0xff]
        %v2601 = vld [vmem:[#allocation23 + $0x18] sm:$0xff]
        %2603 = vset.pattern.permute.xlu0 0
        %2604 = vperm.xlu0 %2603, %v2598
        %v2605 = vpop.permute.xlu0 %2604
        %2608 = vset.pattern.permute.xlu0 0
        %2609 = vperm.xlu0 %2608, %v2599
        %v2610 = vpop.permute.xlu0 %2609
        %2613 = vset.pattern.permute.xlu0 0
        %2614 = vperm.xlu0 %2613, %v2600
        %v2615 = vpop.permute.xlu0 %2614
        %2618 = vset.pattern.permute.xlu0 0
        %2619 = vperm.xlu0 %2618, %v2601
        %v2620 = vpop.permute.xlu0 %2619
        %v2623 = vsel %vm1570, %v2590, 0
        %v2626 = vsel %vm1570, %v2591, 0
        %v2629 = vsel %vm1570, %v2592, 0
        %v2632 = vsel %vm1570, %v2593, 0
        %2634 = vmatprep.subr.mxu0 0.0
        %2635 = vmatpush1.msra.mxu0 %v2594
        %2636 = vmatprep.subr.mxu0 0.0
        %2637 = vmatpush1.msra.mxu0 %v2595
        %2638 = vmatprep.subr.mxu0 0.0
        %2639 = vmatpush1.msra.mxu0 %v2596
        %2640 = vmatprep.subr.mxu0 0.0
        %2641 = vmatpush1.msra.mxu0 %v2597
        %2642 = vmatprep.subr.mxu0 0.0
        %2643 = vmatpush1.msra.mxu0 0.0
        %2644 = vmatprep.subr.mxu0 0.0
        %2645 = vmatpush1.msra.mxu0 0.0
        %2646 = vmatprep.subr.mxu0 0.0
        %2647 = vmatpush1.msra.mxu0 0.0
        %2648 = vmatprep.subr.mxu0 0.0
        %2649 = vmatpush1.msra.mxu0 0.0
        %2650 = vmatprep.subr.mxu0 0.0
        %2651 = vmatpush1.msra.mxu0 0.0
        %2652 = vmatprep.subr.mxu0 0.0
        %2653 = vmatpush1.msra.mxu0 0.0
        %2654 = vmatprep.subr.mxu0 0.0
        %2655 = vmatpush1.msra.mxu0 0.0
        %2656 = vmatprep.subr.mxu0 0.0
        %2657 = vmatpush1.msra.mxu0 0.0
        %2658 = vmatprep.subr.mxu0 0.0
        %2659 = vmatpush1.msra.mxu0 0.0
        %2660 = vmatprep.subr.mxu0 0.0
        %2661 = vmatpush1.msra.mxu0 0.0
        %2662 = vmatprep.subr.mxu0 0.0
        %2663 = vmatpush1.msra.mxu0 0.0
        %2664 = vmatprep.subr.mxu0 0.0
        %2665 = vmatpush1.msra.mxu0 0.0
        %2666 = vmatprep.subr.mxu0 0.0
        %2667 = vmatpush1.msra.mxu0 0.0
        %2668 = vmatprep.subr.mxu0 0.0
        %2669 = vmatpush1.msra.mxu0 0.0
        %2670 = vmatprep.subr.mxu0 0.0
        %2671 = vmatpush1.msra.mxu0 0.0
        %2672 = vmatprep.subr.mxu0 0.0
        %2673 = vmatpush1.msra.mxu0 0.0
        %2674 = vmatprep.subr.mxu0 0.0
        %2675 = vmatpush1.msra.mxu0 0.0
        %2676 = vmatprep.subr.mxu0 0.0
        %2677 = vmatpush1.msra.mxu0 0.0
        %2678 = vmatprep.subr.mxu0 0.0
        %2679 = vmatpush1.msra.mxu0 0.0
        %2680 = vmatprep.subr.mxu0 0.0
        %2681 = vmatpush1.msra.mxu0 0.0
        %2682 = vmatprep.subr.mxu0 0.0
        %2683 = vmatpush1.msra.mxu0 0.0
        %2684 = vmatprep.subr.mxu0 0.0
        %2685 = vmatpush1.msra.mxu0 0.0
        %2686 = vmatprep.subr.mxu0 0.0
        %2687 = vmatpush1.msra.mxu0 0.0
        %2688 = vmatprep.subr.mxu0 0.0
        %2689 = vmatpush1.msra.mxu0 0.0
        %2690 = vmatprep.subr.mxu0 0.0
        %2691 = vmatpush1.msra.mxu0 0.0
        %2692 = vmatprep.subr.mxu0 0.0
        %2693 = vmatpush1.msra.mxu0 0.0
        %2694 = vmatprep.subr.mxu0 0.0
        %2695 = vmatpush1.msra.mxu0 0.0
        %2696 = vmatprep.subr.mxu0 0.0
        %2697 = vmatpush1.msra.mxu0 0.0
        %2698 = vmatprep.mubr.f32.mxu0 0.0
        %2699 = vmatmul.mubr.f32.gmra.mrb[0].mxu0 %v2623
        %v2700 = vpop.f32.mrb[0].mxu0
        %v2701 = vadd.f32 %v2605, %v2700
        %v2702 = vpop.f32.mrb[0].mxu0
        %2703 = vmatprep.mubr.f32.mxu0 0.0
        %2704 = vmatmul.mubr.f32.gmra.mrb[0].mxu0 %v2626
        %v2705 = vpop.f32.mrb[0].mxu0
        %v2706 = vadd.f32 %v2610, %v2705
        %v2707 = vpop.f32.mrb[0].mxu0
        %2708 = vmatprep.mubr.f32.mxu0 0.0
        %2709 = vmatmul.mubr.f32.gmra.mrb[0].mxu0 %v2629
        %v2710 = vpop.f32.mrb[0].mxu0
        %v2711 = vadd.f32 %v2615, %v2710
        %v2712 = vpop.f32.mrb[0].mxu0
        %2713 = vmatprep.mubr.f32.mxu0 0.0
        %2714 = vmatmul.mubr.f32.gmra.mrb[0].mxu0 %v2632
        %v2715 = vpop.f32.mrb[0].mxu0
        %v2716 = vadd.f32 %v2620, %v2715
        %v2717 = vpop.f32.mrb[0].mxu0
        %2718 = vdwg.mxu0
        %v2719 = vxor.u32 %v2701, 2147483648
        %v2720 = vxor.u32 %v2706, 2147483648
        %v2721 = vxor.u32 %v2711, 2147483648
        %v2722 = vxor.u32 %v2716, 2147483648
        %v2723 = vmul.f32 %v2719, 1.442695
        %v2724 = vpow.pop %v2723
        %v2725 = vmul.f32 %v2720, 1.442695
        %v2726 = vpow.pop %v2725
        %v2727 = vmul.f32 %v2721, 1.442695
        %v2728 = vpow.pop %v2727
        %v2729 = vmul.f32 %v2722, 1.442695
        %v2730 = vpow.pop %v2729
        %v2731 = vadd.f32 %v2724, 1.0
        %v2732 = vadd.f32 %v2726, 1.0
        %v2733 = vadd.f32 %v2728, 1.0
        %v2734 = vadd.f32 %v2730, 1.0
        %v2735 = vrcp.pop %v2731
        %v2736 = vmul.f32 1.0, %v2735
        %v2737 = vrcp.pop %v2732
        %v2738 = vmul.f32 1.0, %v2737
        %v2739 = vrcp.pop %v2733
        %v2740 = vmul.f32 1.0, %v2739
        %v2741 = vrcp.pop %v2734
        %v2742 = vmul.f32 1.0, %v2741
        %v2743 = vmul.f32 %v2701, %v2736
        %v2744 = vmul.f32 %v2706, %v2738
        %v2745 = vmul.f32 %v2711, %v2740
        %v2746 = vmul.f32 %v2716, %v2742
        %v2747 = vld [vmem:[#allocation25] sm:$0xff]
        %v2748 = vld [vmem:[#allocation25 + $0x8] sm:$0xff]
        %v2749 = vld [vmem:[#allocation25 + $0x10] sm:$0xff]
        %v2750 = vld [vmem:[#allocation25 + $0x18] sm:$0xff]
        %v2751 = vld [vmem:[#allocation26] sm:$0xff]
        %v2752 = vld [vmem:[#allocation26 + $0x8] sm:$0xff]
        %v2753 = vld [vmem:[#allocation26 + $0x10] sm:$0xff]
        %v2754 = vld [vmem:[#allocation26 + $0x18] sm:$0xff]
        %2756 = vset.pattern.permute.xlu0 0
        %2757 = vperm.xlu0 %2756, %v2751
        %v2758 = vpop.permute.xlu0 %2757
        %2761 = vset.pattern.permute.xlu0 0
        %2762 = vperm.xlu0 %2761, %v2752
        %v2763 = vpop.permute.xlu0 %2762
        %2766 = vset.pattern.permute.xlu0 0
        %2767 = vperm.xlu0 %2766, %v2753
        %v2768 = vpop.permute.xlu0 %2767
        %2771 = vset.pattern.permute.xlu0 0
        %2772 = vperm.xlu0 %2771, %v2754
        %v2773 = vpop.permute.xlu0 %2772
        %v2776 = vsel %vm1570, %v2747, 0
        %v2779 = vsel %vm1570, %v2748, 0
        %v2782 = vsel %vm1570, %v2749, 0
        %v2785 = vsel %vm1570, %v2750, 0
        %2787 = vmatprep.subr.mxu0 0.0
        %2788 = vmatpush1.msra.mxu0 %v2743
        %2789 = vmatprep.subr.mxu0 0.0
        %2790 = vmatpush1.msra.mxu0 %v2744
        %2791 = vmatprep.subr.mxu0 0.0
        %2792 = vmatpush1.msra.mxu0 %v2745
        %2793 = vmatprep.subr.mxu0 0.0
        %2794 = vmatpush1.msra.mxu0 %v2746
        %2795 = vmatprep.subr.mxu0 0.0
        %2796 = vmatpush1.msra.mxu0 0.0
        %2797 = vmatprep.subr.mxu0 0.0
        %2798 = vmatpush1.msra.mxu0 0.0
        %2799 = vmatprep.subr.mxu0 0.0
        %2800 = vmatpush1.msra.mxu0 0.0
        %2801 = vmatprep.subr.mxu0 0.0
        %2802 = vmatpush1.msra.mxu0 0.0
        %2803 = vmatprep.subr.mxu0 0.0
        %2804 = vmatpush1.msra.mxu0 0.0
        %2805 = vmatprep.subr.mxu0 0.0
        %2806 = vmatpush1.msra.mxu0 0.0
        %2807 = vmatprep.subr.mxu0 0.0
        %2808 = vmatpush1.msra.mxu0 0.0
        %2809 = vmatprep.subr.mxu0 0.0
        %2810 = vmatpush1.msra.mxu0 0.0
        %2811 = vmatprep.subr.mxu0 0.0
        %2812 = vmatpush1.msra.mxu0 0.0
        %2813 = vmatprep.subr.mxu0 0.0
        %2814 = vmatpush1.msra.mxu0 0.0
        %2815 = vmatprep.subr.mxu0 0.0
        %2816 = vmatpush1.msra.mxu0 0.0
        %2817 = vmatprep.subr.mxu0 0.0
        %2818 = vmatpush1.msra.mxu0 0.0
        %2819 = vmatprep.subr.mxu0 0.0
        %2820 = vmatpush1.msra.mxu0 0.0
        %2821 = vmatprep.subr.mxu0 0.0
        %2822 = vmatpush1.msra.mxu0 0.0
        %2823 = vmatprep.subr.mxu0 0.0
        %2824 = vmatpush1.msra.mxu0 0.0
        %2825 = vmatprep.subr.mxu0 0.0
        %2826 = vmatpush1.msra.mxu0 0.0
        %2827 = vmatprep.subr.mxu0 0.0
        %2828 = vmatpush1.msra.mxu0 0.0
        %2829 = vmatprep.subr.mxu0 0.0
        %2830 = vmatpush1.msra.mxu0 0.0
        %2831 = vmatprep.subr.mxu0 0.0
        %2832 = vmatpush1.msra.mxu0 0.0
        %2833 = vmatprep.subr.mxu0 0.0
        %2834 = vmatpush1.msra.mxu0 0.0
        %2835 = vmatprep.subr.mxu0 0.0
        %2836 = vmatpush1.msra.mxu0 0.0
        %2837 = vmatprep.subr.mxu0 0.0
        %2838 = vmatpush1.msra.mxu0 0.0
        %2839 = vmatprep.subr.mxu0 0.0
        %2840 = vmatpush1.msra.mxu0 0.0
        %2841 = vmatprep.subr.mxu0 0.0
        %2842 = vmatpush1.msra.mxu0 0.0
        %2843 = vmatprep.subr.mxu0 0.0
        %2844 = vmatpush1.msra.mxu0 0.0
        %2845 = vmatprep.subr.mxu0 0.0
        %2846 = vmatpush1.msra.mxu0 0.0
        %2847 = vmatprep.subr.mxu0 0.0
        %2848 = vmatpush1.msra.mxu0 0.0
        %2849 = vmatprep.subr.mxu0 0.0
        %2850 = vmatpush1.msra.mxu0 0.0
        %2851 = vmatprep.mubr.f32.mxu0 0.0
        %2852 = vmatmul.mubr.f32.gmra.mrb[0].mxu0 %v2776
        %v2853 = vpop.f32.mrb[0].mxu0
        %v2854 = vadd.f32 %v2758, %v2853
        %v2855 = vpop.f32.mrb[0].mxu0
        %2856 = vmatprep.mubr.f32.mxu0 0.0
        %2857 = vmatmul.mubr.f32.gmra.mrb[0].mxu0 %v2779
        %v2858 = vpop.f32.mrb[0].mxu0
        %v2859 = vadd.f32 %v2763, %v2858
        %v2860 = vpop.f32.mrb[0].mxu0
        %2861 = vmatprep.mubr.f32.mxu0 0.0
        %2862 = vmatmul.mubr.f32.gmra.mrb[0].mxu0 %v2782
        %v2863 = vpop.f32.mrb[0].mxu0
        %v2864 = vadd.f32 %v2768, %v2863
        %v2865 = vpop.f32.mrb[0].mxu0
        %2866 = vmatprep.mubr.f32.mxu0 0.0
        %2867 = vmatmul.mubr.f32.gmra.mrb[0].mxu0 %v2785
        %v2868 = vpop.f32.mrb[0].mxu0
        %v2869 = vadd.f32 %v2773, %v2868
        %v2870 = vpop.f32.mrb[0].mxu0
        %2871 = vdwg.mxu0
        %v2872 = vmul.f32 %v2854, 0.25
        %v2873 = vmul.f32 %v2859, 0.25
        %v2874 = vmul.f32 %v2864, 0.25
        %v2875 = vmul.f32 %v2869, 0.25
        %v2876 = vtanh.pop %v2872
        %v2877 = vtanh.pop %v2873
        %v2878 = vtanh.pop %v2874
        %v2879 = vtanh.pop %v2875
        %v2880 = vmul.f32 %v2876, %v2586
        %v2881 = vmul.f32 %v2877, %v2587
        %v2882 = vmul.f32 %v2878, %v2588
        %v2883 = vmul.f32 %v2879, %v2589
        %v2884 = vld [vmem:[#allocation28] sm:$0xff]
        %v2885 = vld [vmem:[#allocation28 + $0x8] sm:$0xff]
        %v2886 = vld [vmem:[#allocation28 + $0x10] sm:$0xff]
        %v2887 = vld [vmem:[#allocation28 + $0x18] sm:$0xff]
        %v2888 = vld [vmem:[#allocation29] sm:$0xff]
        %v2889 = vld [vmem:[#allocation29 + $0x8] sm:$0xff]
        %v2890 = vld [vmem:[#allocation29 + $0x10] sm:$0xff]
        %v2891 = vld [vmem:[#allocation29 + $0x18] sm:$0xff]
        %v2893 = vsel %vm1570, %v2888, 0
        %v2896 = vsel %vm1570, %v2889, 0
        %v2899 = vsel %vm1570, %v2890, 0
        %v2902 = vsel %vm1570, %v2891, 0
        %2904 = vmatprep.subr.mxu0 0.0
        %2905 = vmatpush1.msra.mxu0 %v1482
        %2906 = vmatprep.subr.mxu0 0.0
        %2907 = vmatpush1.msra.mxu0 %v1483
        %2908 = vmatprep.subr.mxu0 0.0
        %2909 = vmatpush1.msra.mxu0 %v1484
        %2910 = vmatprep.subr.mxu0 0.0
        %2911 = vmatpush1.msra.mxu0 %v1485
        %2912 = vmatprep.subr.mxu0 0.0
        %2913 = vmatpush1.msra.mxu0 0.0
        %2914 = vmatprep.subr.mxu0 0.0
        %2915 = vmatpush1.msra.mxu0 0.0
        %2916 = vmatprep.subr.mxu0 0.0
        %2917 = vmatpush1.msra.mxu0 0.0
        %2918 = vmatprep.subr.mxu0 0.0
        %2919 = vmatpush1.msra.mxu0 0.0
        %2920 = vmatprep.subr.mxu0 0.0
        %2921 = vmatpush1.msra.mxu0 0.0
        %2922 = vmatprep.subr.mxu0 0.0
        %2923 = vmatpush1.msra.mxu0 0.0
        %2924 = vmatprep.subr.mxu0 0.0
        %2925 = vmatpush1.msra.mxu0 0.0
        %2926 = vmatprep.subr.mxu0 0.0
        %2927 = vmatpush1.msra.mxu0 0.0
        %2928 = vmatprep.subr.mxu0 0.0
        %2929 = vmatpush1.msra.mxu0 0.0
        %2930 = vmatprep.subr.mxu0 0.0
        %2931 = vmatpush1.msra.mxu0 0.0
        %2932 = vmatprep.subr.mxu0 0.0
        %2933 = vmatpush1.msra.mxu0 0.0
        %2934 = vmatprep.subr.mxu0 0.0
        %2935 = vmatpush1.msra.mxu0 0.0
        %2936 = vmatprep.subr.mxu0 0.0
        %2937 = vmatpush1.msra.mxu0 0.0
        %2938 = vmatprep.subr.mxu0 0.0
        %2939 = vmatpush1.msra.mxu0 0.0
        %2940 = vmatprep.subr.mxu0 0.0
        %2941 = vmatpush1.msra.mxu0 0.0
        %2942 = vmatprep.subr.mxu0 0.0
        %2943 = vmatpush1.msra.mxu0 0.0
        %2944 = vmatprep.subr.mxu0 0.0
        %2945 = vmatpush1.msra.mxu0 0.0
        %2946 = vmatprep.subr.mxu0 0.0
        %2947 = vmatpush1.msra.mxu0 0.0
        %2948 = vmatprep.subr.mxu0 0.0
        %2949 = vmatpush1.msra.mxu0 0.0
        %2950 = vmatprep.subr.mxu0 0.0
        %2951 = vmatpush1.msra.mxu0 0.0
        %2952 = vmatprep.subr.mxu0 0.0
        %2953 = vmatpush1.msra.mxu0 0.0
        %2954 = vmatprep.subr.mxu0 0.0
        %2955 = vmatpush1.msra.mxu0 0.0
        %2956 = vmatprep.subr.mxu0 0.0
        %2957 = vmatpush1.msra.mxu0 0.0
        %2958 = vmatprep.subr.mxu0 0.0
        %2959 = vmatpush1.msra.mxu0 0.0
        %2960 = vmatprep.subr.mxu0 0.0
        %2961 = vmatpush1.msra.mxu0 0.0
        %2962 = vmatprep.subr.mxu0 0.0
        %2963 = vmatpush1.msra.mxu0 0.0
        %2964 = vmatprep.subr.mxu0 0.0
        %2965 = vmatpush1.msra.mxu0 0.0
        %2966 = vmatprep.subr.mxu0 0.0
        %2967 = vmatpush1.msra.mxu0 0.0
        %2968 = vmatprep.mubr.f32.mxu0 0.0
        %2969 = vmatmul.mubr.f32.gmra.mrb[0].mxu0 %v2893
        %v2970 = vpop.f32.mrb[0].mxu0
        %v2971 = vadd.f32 0.0, %v2970
        %v2972 = vpop.f32.mrb[0].mxu0
        %2973 = vmatprep.mubr.f32.mxu0 0.0
        %2974 = vmatmul.mubr.f32.gmra.mrb[0].mxu0 %v2896
        %v2975 = vpop.f32.mrb[0].mxu0
        %v2976 = vadd.f32 0.0, %v2975
        %v2977 = vpop.f32.mrb[0].mxu0
        %2978 = vmatprep.mubr.f32.mxu0 0.0
        %2979 = vmatmul.mubr.f32.gmra.mrb[0].mxu0 %v2899
        %v2980 = vpop.f32.mrb[0].mxu0
        %v2981 = vadd.f32 0.0, %v2980
        %v2982 = vpop.f32.mrb[0].mxu0
        %2983 = vmatprep.mubr.f32.mxu0 0.0
        %2984 = vmatmul.mubr.f32.gmra.mrb[0].mxu0 %v2902
        %v2985 = vpop.f32.mrb[0].mxu0
        %v2986 = vadd.f32 0.0, %v2985
        %v2987 = vpop.f32.mrb[0].mxu0
        %2988 = vdwg.mxu0
        %v2990 = vsel %vm1570, %v2884, 0
        %v2993 = vsel %vm1570, %v2885, 0
        %v2996 = vsel %vm1570, %v2886, 0
        %v2999 = vsel %vm1570, %v2887, 0
        %3001 = vmatprep.subr.mxu0 0.0
        %3002 = vmatpush1.msra.mxu0 %v2880
        %3003 = vmatprep.subr.mxu0 0.0
        %3004 = vmatpush1.msra.mxu0 %v2881
        %3005 = vmatprep.subr.mxu0 0.0
        %3006 = vmatpush1.msra.mxu0 %v2882
        %3007 = vmatprep.subr.mxu0 0.0
        %3008 = vmatpush1.msra.mxu0 %v2883
        %3009 = vmatprep.subr.mxu0 0.0
        %3010 = vmatpush1.msra.mxu0 0.0
        %3011 = vmatprep.subr.mxu0 0.0
        %3012 = vmatpush1.msra.mxu0 0.0
        %3013 = vmatprep.subr.mxu0 0.0
        %3014 = vmatpush1.msra.mxu0 0.0
        %3015 = vmatprep.subr.mxu0 0.0
        %3016 = vmatpush1.msra.mxu0 0.0
        %3017 = vmatprep.subr.mxu0 0.0
        %3018 = vmatpush1.msra.mxu0 0.0
        %3019 = vmatprep.subr.mxu0 0.0
        %3020 = vmatpush1.msra.mxu0 0.0
        %3021 = vmatprep.subr.mxu0 0.0
        %3022 = vmatpush1.msra.mxu0 0.0
        %3023 = vmatprep.subr.mxu0 0.0
        %3024 = vmatpush1.msra.mxu0 0.0
        %3025 = vmatprep.subr.mxu0 0.0
        %3026 = vmatpush1.msra.mxu0 0.0
        %3027 = vmatprep.subr.mxu0 0.0
        %3028 = vmatpush1.msra.mxu0 0.0
        %3029 = vmatprep.subr.mxu0 0.0
        %3030 = vmatpush1.msra.mxu0 0.0
        %3031 = vmatprep.subr.mxu0 0.0
        %3032 = vmatpush1.msra.mxu0 0.0
        %3033 = vmatprep.subr.mxu0 0.0
        %3034 = vmatpush1.msra.mxu0 0.0
        %3035 = vmatprep.subr.mxu0 0.0
        %3036 = vmatpush1.msra.mxu0 0.0
        %3037 = vmatprep.subr.mxu0 0.0
        %3038 = vmatpush1.msra.mxu0 0.0
        %3039 = vmatprep.subr.mxu0 0.0
        %3040 = vmatpush1.msra.mxu0 0.0
        %3041 = vmatprep.subr.mxu0 0.0
        %3042 = vmatpush1.msra.mxu0 0.0
        %3043 = vmatprep.subr.mxu0 0.0
        %3044 = vmatpush1.msra.mxu0 0.0
        %3045 = vmatprep.subr.mxu0 0.0
        %3046 = vmatpush1.msra.mxu0 0.0
        %3047 = vmatprep.subr.mxu0 0.0
        %3048 = vmatpush1.msra.mxu0 0.0
        %3049 = vmatprep.subr.mxu0 0.0
        %3050 = vmatpush1.msra.mxu0 0.0
        %3051 = vmatprep.subr.mxu0 0.0
        %3052 = vmatpush1.msra.mxu0 0.0
        %3053 = vmatprep.subr.mxu0 0.0
        %3054 = vmatpush1.msra.mxu0 0.0
        %3055 = vmatprep.subr.mxu0 0.0
        %3056 = vmatpush1.msra.mxu0 0.0
        %3057 = vmatprep.subr.mxu0 0.0
        %3058 = vmatpush1.msra.mxu0 0.0
        %3059 = vmatprep.subr.mxu0 0.0
        %3060 = vmatpush1.msra.mxu0 0.0
        %3061 = vmatprep.subr.mxu0 0.0
        %3062 = vmatpush1.msra.mxu0 0.0
        %3063 = vmatprep.subr.mxu0 0.0
        %3064 = vmatpush1.msra.mxu0 0.0
        %3065 = vmatprep.mubr.f32.mxu0 0.0
        %3066 = vmatmul.mubr.f32.gmra.mrb[0].mxu0 %v2990
        %v3067 = vpop.f32.mrb[0].mxu0
        %v3068 = vadd.f32 %v2971, %v3067
        %v3069 = vpop.f32.mrb[0].mxu0
        %3070 = vmatprep.mubr.f32.mxu0 0.0
        %3071 = vmatmul.mubr.f32.gmra.mrb[0].mxu0 %v2993
        %v3072 = vpop.f32.mrb[0].mxu0
        %v3073 = vadd.f32 %v2976, %v3072
        %v3074 = vpop.f32.mrb[0].mxu0
        %3075 = vmatprep.mubr.f32.mxu0 0.0
        %3076 = vmatmul.mubr.f32.gmra.mrb[0].mxu0 %v2996
        %v3077 = vpop.f32.mrb[0].mxu0
        %v3078 = vadd.f32 %v2981, %v3077
        %v3079 = vpop.f32.mrb[0].mxu0
        %3080 = vmatprep.mubr.f32.mxu0 0.0
        %3081 = vmatmul.mubr.f32.gmra.mrb[0].mxu0 %v2999
        %v3082 = vpop.f32.mrb[0].mxu0
        %v3083 = vadd.f32 %v2986, %v3082
        %v3084 = vpop.f32.mrb[0].mxu0
        %3085 = vdwg.mxu0
        %v3086 = vld [vmem:[#allocation31] sm:$0xff]
        %v3087 = vld [vmem:[#allocation31 + $0x8] sm:$0xff]
        %v3088 = vld [vmem:[#allocation31 + $0x10] sm:$0xff]
        %v3089 = vld [vmem:[#allocation31 + $0x18] sm:$0xff]
        %3091 = vset.pattern.permute.xlu0 0
        %3092 = vperm.xlu0 %3091, %v3086
        %v3093 = vpop.permute.xlu0 %3092
        %3096 = vset.pattern.permute.xlu0 0
        %3097 = vperm.xlu0 %3096, %v3087
        %v3098 = vpop.permute.xlu0 %3097
        %3101 = vset.pattern.permute.xlu0 0
        %3102 = vperm.xlu0 %3101, %v3088
        %v3103 = vpop.permute.xlu0 %3102
        %3106 = vset.pattern.permute.xlu0 0
        %3107 = vperm.xlu0 %3106, %v3089
        %v3108 = vpop.permute.xlu0 %3107
        %v3110 = vadd.f32 %v3068, %v3093
        %v3111 = vadd.f32 %v3073, %v3098
        %v3112 = vadd.f32 %v3078, %v3103
        %v3113 = vadd.f32 %v3083, %v3108
        %v3115 = vlaneseq
        %v3116 = vshrl.u32 %v3115, 7
        %v3117 = vsub.s32 0, %v3116
        %v3118 = vrot.slane %v1279, %v3117
        %v3120 = vmul.f32 %v1275, %v3118
        %v3121 = vmul.f32 %v1276, %v3118
        %v3122 = vmul.f32 %v1277, %v3118
        %v3123 = vmul.f32 %v1278, %v3118
        %v3124 = vadd.f32 %v3110, %v1369
        %v3125 = vadd.f32 %v3111, %v1370
        %v3126 = vadd.f32 %v3112, %v1371
        %v3127 = vadd.f32 %v3113, %v1372
        %v3128 = vadd.f32 %v3120, %v3124
        %v3129 = vadd.f32 %v3121, %v3125
        %v3130 = vadd.f32 %v3122, %v3126
        %v3131 = vadd.f32 %v3123, %v3127
        %v3132 = vld [vmem:[#allocation32] sm:$0xff]
        %v3133 = vld [vmem:[#allocation32 + $0x8] sm:$0xff]
        %v3134 = vld [vmem:[#allocation32 + $0x10] sm:$0xff]
        %v3135 = vld [vmem:[#allocation32 + $0x18] sm:$0xff]
        %v3137 = vsel %vm1570, %v3132, 0
        %v3140 = vsel %vm1570, %v3133, 0
        %v3143 = vsel %vm1570, %v3134, 0
        %v3146 = vsel %vm1570, %v3135, 0
        %3148 = vmatprep.subr.mxu0 0.0
        %3149 = vmatpush1.msra.mxu0 %v3128
        %3150 = vmatprep.subr.mxu0 0.0
        %3151 = vmatpush1.msra.mxu0 %v3129
        %3152 = vmatprep.subr.mxu0 0.0
        %3153 = vmatpush1.msra.mxu0 %v3130
        %3154 = vmatprep.subr.mxu0 0.0
        %3155 = vmatpush1.msra.mxu0 %v3131
        %3156 = vmatprep.subr.mxu0 0.0
        %3157 = vmatpush1.msra.mxu0 0.0
        %3158 = vmatprep.subr.mxu0 0.0
        %3159 = vmatpush1.msra.mxu0 0.0
        %3160 = vmatprep.subr.mxu0 0.0
        %3161 = vmatpush1.msra.mxu0 0.0
        %3162 = vmatprep.subr.mxu0 0.0
        %3163 = vmatpush1.msra.mxu0 0.0
        %3164 = vmatprep.subr.mxu0 0.0
        %3165 = vmatpush1.msra.mxu0 0.0
        %3166 = vmatprep.subr.mxu0 0.0
        %3167 = vmatpush1.msra.mxu0 0.0
        %3168 = vmatprep.subr.mxu0 0.0
        %3169 = vmatpush1.msra.mxu0 0.0
        %3170 = vmatprep.subr.mxu0 0.0
        %3171 = vmatpush1.msra.mxu0 0.0
        %3172 = vmatprep.subr.mxu0 0.0
        %3173 = vmatpush1.msra.mxu0 0.0
        %3174 = vmatprep.subr.mxu0 0.0
        %3175 = vmatpush1.msra.mxu0 0.0
        %3176 = vmatprep.subr.mxu0 0.0
        %3177 = vmatpush1.msra.mxu0 0.0
        %3178 = vmatprep.subr.mxu0 0.0
        %3179 = vmatpush1.msra.mxu0 0.0
        %3180 = vmatprep.subr.mxu0 0.0
        %3181 = vmatpush1.msra.mxu0 0.0
        %3182 = vmatprep.subr.mxu0 0.0
        %3183 = vmatpush1.msra.mxu0 0.0
        %3184 = vmatprep.subr.mxu0 0.0
        %3185 = vmatpush1.msra.mxu0 0.0
        %3186 = vmatprep.subr.mxu0 0.0
        %3187 = vmatpush1.msra.mxu0 0.0
        %3188 = vmatprep.subr.mxu0 0.0
        %3189 = vmatpush1.msra.mxu0 0.0
        %3190 = vmatprep.subr.mxu0 0.0
        %3191 = vmatpush1.msra.mxu0 0.0
        %3192 = vmatprep.subr.mxu0 0.0
        %3193 = vmatpush1.msra.mxu0 0.0
        %3194 = vmatprep.subr.mxu0 0.0
        %3195 = vmatpush1.msra.mxu0 0.0
        %3196 = vmatprep.subr.mxu0 0.0
        %3197 = vmatpush1.msra.mxu0 0.0
        %3198 = vmatprep.subr.mxu0 0.0
        %3199 = vmatpush1.msra.mxu0 0.0
        %3200 = vmatprep.subr.mxu0 0.0
        %3201 = vmatpush1.msra.mxu0 0.0
        %3202 = vmatprep.subr.mxu0 0.0
        %3203 = vmatpush1.msra.mxu0 0.0
        %3204 = vmatprep.subr.mxu0 0.0
        %3205 = vmatpush1.msra.mxu0 0.0
        %3206 = vmatprep.subr.mxu0 0.0
        %3207 = vmatpush1.msra.mxu0 0.0
        %3208 = vmatprep.subr.mxu0 0.0
        %3209 = vmatpush1.msra.mxu0 0.0
        %3210 = vmatprep.subr.mxu0 0.0
        %3211 = vmatpush1.msra.mxu0 0.0
        %3212 = vmatprep.mubr.f32.mxu0 0.0
        %3213 = vmatmul.mubr.f32.gmra.mrb[0].mxu0 %v3137
        %v3214 = vpop.f32.mrb[0].mxu0
        %v3215 = vadd.f32 0.0, %v3214
        %v3216 = vpop.f32.mrb[0].mxu0
        %3217 = vmatprep.mubr.f32.mxu0 0.0
        %3218 = vmatmul.mubr.f32.gmra.mrb[0].mxu0 %v3140
        %v3219 = vpop.f32.mrb[0].mxu0
        %v3220 = vadd.f32 0.0, %v3219
        %v3221 = vpop.f32.mrb[0].mxu0
        %3222 = vmatprep.mubr.f32.mxu0 0.0
        %3223 = vmatmul.mubr.f32.gmra.mrb[0].mxu0 %v3143
        %v3224 = vpop.f32.mrb[0].mxu0
        %v3225 = vadd.f32 0.0, %v3224
        %v3226 = vpop.f32.mrb[0].mxu0
        %3227 = vmatprep.mubr.f32.mxu0 0.0
        %3228 = vmatmul.mubr.f32.gmra.mrb[0].mxu0 %v3146
        %v3229 = vpop.f32.mrb[0].mxu0
        %v3230 = vadd.f32 0.0, %v3229
        %v3231 = vpop.f32.mrb[0].mxu0
        %3232 = vdwg.mxu0
        %3233 = vadd.xlane.f32.xlu0 %v3215
        %v3234 = vpop.xlane.xlu0 %3233
        %3235 = vadd.xlane.f32.xlu0 %v3220
        %v3236 = vpop.xlane.xlu0 %3235
        %3237 = vadd.xlane.f32.xlu0 %v3225
        %v3238 = vpop.xlane.xlu0 %3237
        %3239 = vadd.xlane.f32.xlu0 %v3230
        %v3240 = vpop.xlane.xlu0 %3239
        %v3241 = vmul.f32 %v3234, %v1437
        %v3242 = vmul.f32 %v3236, %v1437
        %v3243 = vmul.f32 %v3238, %v1437
        %v3244 = vmul.f32 %v3240, %v1437
        %v3245 = vsub.f32 %v3128, %v3241
        %v3246 = vsub.f32 %v3129, %v3242
        %v3247 = vsub.f32 %v3130, %v3243
        %v3248 = vsub.f32 %v3131, %v3244
        %v3249 = vmul.f32 %v3245, %v3245
        %v3250 = vmul.f32 %v3246, %v3246
        %v3251 = vmul.f32 %v3247, %v3247
        %v3252 = vmul.f32 %v3248, %v3248
        %3253 = vmatprep.subr.mxu0 0.0
        %3254 = vmatpush1.msra.mxu0 %v3249
        %3255 = vmatprep.subr.mxu0 0.0
        %3256 = vmatpush1.msra.mxu0 %v3250
        %3257 = vmatprep.subr.mxu0 0.0
        %3258 = vmatpush1.msra.mxu0 %v3251
        %3259 = vmatprep.subr.mxu0 0.0
        %3260 = vmatpush1.msra.mxu0 %v3252
        %3261 = vmatprep.subr.mxu0 0.0
        %3262 = vmatpush1.msra.mxu0 0.0
        %3263 = vmatprep.subr.mxu0 0.0
        %3264 = vmatpush1.msra.mxu0 0.0
        %3265 = vmatprep.subr.mxu0 0.0
        %3266 = vmatpush1.msra.mxu0 0.0
        %3267 = vmatprep.subr.mxu0 0.0
        %3268 = vmatpush1.msra.mxu0 0.0
        %3269 = vmatprep.subr.mxu0 0.0
        %3270 = vmatpush1.msra.mxu0 0.0
        %3271 = vmatprep.subr.mxu0 0.0
        %3272 = vmatpush1.msra.mxu0 0.0
        %3273 = vmatprep.subr.mxu0 0.0
        %3274 = vmatpush1.msra.mxu0 0.0
        %3275 = vmatprep.subr.mxu0 0.0
        %3276 = vmatpush1.msra.mxu0 0.0
        %3277 = vmatprep.subr.mxu0 0.0
        %3278 = vmatpush1.msra.mxu0 0.0
        %3279 = vmatprep.subr.mxu0 0.0
        %3280 = vmatpush1.msra.mxu0 0.0
        %3281 = vmatprep.subr.mxu0 0.0
        %3282 = vmatpush1.msra.mxu0 0.0
        %3283 = vmatprep.subr.mxu0 0.0
        %3284 = vmatpush1.msra.mxu0 0.0
        %3285 = vmatprep.subr.mxu0 0.0
        %3286 = vmatpush1.msra.mxu0 0.0
        %3287 = vmatprep.subr.mxu0 0.0
        %3288 = vmatpush1.msra.mxu0 0.0
        %3289 = vmatprep.subr.mxu0 0.0
        %3290 = vmatpush1.msra.mxu0 0.0
        %3291 = vmatprep.subr.mxu0 0.0
        %3292 = vmatpush1.msra.mxu0 0.0
        %3293 = vmatprep.subr.mxu0 0.0
        %3294 = vmatpush1.msra.mxu0 0.0
        %3295 = vmatprep.subr.mxu0 0.0
        %3296 = vmatpush1.msra.mxu0 0.0
        %3297 = vmatprep.subr.mxu0 0.0
        %3298 = vmatpush1.msra.mxu0 0.0
        %3299 = vmatprep.subr.mxu0 0.0
        %3300 = vmatpush1.msra.mxu0 0.0
        %3301 = vmatprep.subr.mxu0 0.0
        %3302 = vmatpush1.msra.mxu0 0.0
        %3303 = vmatprep.subr.mxu0 0.0
        %3304 = vmatpush1.msra.mxu0 0.0
        %3305 = vmatprep.subr.mxu0 0.0
        %3306 = vmatpush1.msra.mxu0 0.0
        %3307 = vmatprep.subr.mxu0 0.0
        %3308 = vmatpush1.msra.mxu0 0.0
        %3309 = vmatprep.subr.mxu0 0.0
        %3310 = vmatpush1.msra.mxu0 0.0
        %3311 = vmatprep.subr.mxu0 0.0
        %3312 = vmatpush1.msra.mxu0 0.0
        %3313 = vmatprep.subr.mxu0 0.0
        %3314 = vmatpush1.msra.mxu0 0.0
        %3315 = vmatprep.subr.mxu0 0.0
        %3316 = vmatpush1.msra.mxu0 0.0
        %3317 = vmatprep.mubr.f32.mxu0 0.0
        %3318 = vmatmul.mubr.f32.gmra.mrb[0].mxu0 %v3137
        %v3319 = vpop.f32.mrb[0].mxu0
        %v3320 = vadd.f32 0.0, %v3319
        %v3321 = vpop.f32.mrb[0].mxu0
        %3322 = vmatprep.mubr.f32.mxu0 0.0
        %3323 = vmatmul.mubr.f32.gmra.mrb[0].mxu0 %v3140
        %v3324 = vpop.f32.mrb[0].mxu0
        %v3325 = vadd.f32 0.0, %v3324
        %v3326 = vpop.f32.mrb[0].mxu0
        %3327 = vmatprep.mubr.f32.mxu0 0.0
        %3328 = vmatmul.mubr.f32.gmra.mrb[0].mxu0 %v3143
        %v3329 = vpop.f32.mrb[0].mxu0
        %v3330 = vadd.f32 0.0, %v3329
        %v3331 = vpop.f32.mrb[0].mxu0
        %3332 = vmatprep.mubr.f32.mxu0 0.0
        %3333 = vmatmul.mubr.f32.gmra.mrb[0].mxu0 %v3146
        %v3334 = vpop.f32.mrb[0].mxu0
        %v3335 = vadd.f32 0.0, %v3334
        %v3336 = vpop.f32.mrb[0].mxu0
        %3337 = vdwg.mxu0
        %3338 = vadd.xlane.f32.xlu0 %v3320
        %v3339 = vpop.xlane.xlu0 %3338
        %3340 = vadd.xlane.f32.xlu0 %v3325
        %v3341 = vpop.xlane.xlu0 %3340
        %3342 = vadd.xlane.f32.xlu0 %v3330
        %v3343 = vpop.xlane.xlu0 %3342
        %3344 = vadd.xlane.f32.xlu0 %v3335
        %v3345 = vpop.xlane.xlu0 %3344
        %v3346 = vmul.f32 %v3339, %v1437
        %v3347 = vmul.f32 %v3341, %v1437
        %v3348 = vmul.f32 %v3343, %v1437
        %v3349 = vmul.f32 %v3345, %v1437
        %v3350 = vadd.f32 %v3346, 1e-05
        %v3351 = vadd.f32 %v3347, 1e-05
        %v3352 = vadd.f32 %v3348, 1e-05
        %v3353 = vadd.f32 %v3349, 1e-05
        %v3354 = vrsqrt.pop %v3350
        %v3355 = vrsqrt.pop %v3351
        %v3356 = vrsqrt.pop %v3352
        %v3357 = vrsqrt.pop %v3353
        %v3358 = vmul.f32 %v3245, %v3354
        %v3359 = vmul.f32 %v3246, %v3355
        %v3360 = vmul.f32 %v3247, %v3356
        %v3361 = vmul.f32 %v3248, %v3357
        %v3362 = vld [vmem:[#allocation34] sm:$0xff]
        %v3363 = vld [vmem:[#allocation34 + $0x8] sm:$0xff]
        %v3364 = vld [vmem:[#allocation34 + $0x10] sm:$0xff]
        %v3365 = vld [vmem:[#allocation34 + $0x18] sm:$0xff]
        %3367 = vset.pattern.permute.xlu0 0
        %3368 = vperm.xlu0 %3367, %v3362
        %v3369 = vpop.permute.xlu0 %3368
        %3372 = vset.pattern.permute.xlu0 0
        %3373 = vperm.xlu0 %3372, %v3363
        %v3374 = vpop.permute.xlu0 %3373
        %3377 = vset.pattern.permute.xlu0 0
        %3378 = vperm.xlu0 %3377, %v3364
        %v3379 = vpop.permute.xlu0 %3378
        %3382 = vset.pattern.permute.xlu0 0
        %3383 = vperm.xlu0 %3382, %v3365
        %v3384 = vpop.permute.xlu0 %3383
        %v3386 = vmul.f32 %v3358, %v3369
        %v3387 = vmul.f32 %v3359, %v3374
        %v3388 = vmul.f32 %v3360, %v3379
        %v3389 = vmul.f32 %v3361, %v3384
        %v3390 = vld [vmem:[#allocation35] sm:$0xff]
        %v3391 = vld [vmem:[#allocation35 + $0x8] sm:$0xff]
        %v3392 = vld [vmem:[#allocation35 + $0x10] sm:$0xff]
        %v3393 = vld [vmem:[#allocation35 + $0x18] sm:$0xff]
        %3395 = vset.pattern.permute.xlu0 0
        %3396 = vperm.xlu0 %3395, %v3390
        %v3397 = vpop.permute.xlu0 %3396
        %3400 = vset.pattern.permute.xlu0 0
        %3401 = vperm.xlu0 %3400, %v3391
        %v3402 = vpop.permute.xlu0 %3401
        %3405 = vset.pattern.permute.xlu0 0
        %3406 = vperm.xlu0 %3405, %v3392
        %v3407 = vpop.permute.xlu0 %3406
        %3410 = vset.pattern.permute.xlu0 0
        %3411 = vperm.xlu0 %3410, %v3393
        %v3412 = vpop.permute.xlu0 %3411
        %v3414 = vadd.f32 %v3386, %v3397
        %v3415 = vadd.f32 %v3387, %v3402
        %v3416 = vadd.f32 %v3388, %v3407
        %v3417 = vadd.f32 %v3389, %v3412
        %v3418 = vld [vmem:[#allocation37] sm:$0xff]
        %v3419 = vld [vmem:[#allocation37 + $0x8] sm:$0xff]
        %v3420 = vld [vmem:[#allocation37 + $0x10] sm:$0xff]
        %v3421 = vld [vmem:[#allocation37 + $0x18] sm:$0xff]
        %v3422 = vld [vmem:[#allocation37 + $0x20] sm:$0xff]
        %v3423 = vld [vmem:[#allocation37 + $0x28] sm:$0xff]
        %v3424 = vld [vmem:[#allocation37 + $0x30] sm:$0xff]
        %v3425 = vld [vmem:[#allocation37 + $0x38] sm:$0xff]
        %v3426 = vld [vmem:[#allocation37 + $0x40] sm:$0xff]
        %v3427 = vld [vmem:[#allocation37 + $0x48] sm:$0xff]
        %v3428 = vld [vmem:[#allocation37 + $0x50] sm:$0xff]
        %v3429 = vld [vmem:[#allocation37 + $0x58] sm:$0xff]
        %v3430 = vld [vmem:[#allocation37 + $0x60] sm:$0xff]
        %v3431 = vld [vmem:[#allocation37 + $0x68] sm:$0xff]
        %v3432 = vld [vmem:[#allocation37 + $0x70] sm:$0xff]
        %v3433 = vld [vmem:[#allocation37 + $0x78] sm:$0xff]
        %v3434 = vld [vmem:[#allocation38] sm:$0xff]
        %v3435 = vld [vmem:[#allocation38 + $0x8] sm:$0xff]
        %v3436 = vld [vmem:[#allocation38 + $0x10] sm:$0xff]
        %v3437 = vld [vmem:[#allocation38 + $0x18] sm:$0xff]
        %v3438 = vld [vmem:[#allocation38 + $0x20] sm:$0xff]
        %v3439 = vld [vmem:[#allocation38 + $0x28] sm:$0xff]
        %v3440 = vld [vmem:[#allocation38 + $0x30] sm:$0xff]
        %v3441 = vld [vmem:[#allocation38 + $0x38] sm:$0xff]
        %v3442 = vld [vmem:[#allocation38 + $0x40] sm:$0xff]
        %v3443 = vld [vmem:[#allocation38 + $0x48] sm:$0xff]
        %v3444 = vld [vmem:[#allocation38 + $0x50] sm:$0xff]
        %v3445 = vld [vmem:[#allocation38 + $0x58] sm:$0xff]
        %v3446 = vld [vmem:[#allocation38 + $0x60] sm:$0xff]
        %v3447 = vld [vmem:[#allocation38 + $0x68] sm:$0xff]
        %v3448 = vld [vmem:[#allocation38 + $0x70] sm:$0xff]
        %v3449 = vld [vmem:[#allocation38 + $0x78] sm:$0xff]
        %3451 = vset.pattern.permute.xlu0 0
        %3452 = vperm.xlu0 %3451, %v3434
        %v3453 = vpop.permute.xlu0 %3452
        %3456 = vset.pattern.permute.xlu0 0
        %3457 = vperm.xlu0 %3456, %v3435
        %v3458 = vpop.permute.xlu0 %3457
        %3461 = vset.pattern.permute.xlu0 0
        %3462 = vperm.xlu0 %3461, %v3436
        %v3463 = vpop.permute.xlu0 %3462
        %3466 = vset.pattern.permute.xlu0 0
        %3467 = vperm.xlu0 %3466, %v3437
        %v3468 = vpop.permute.xlu0 %3467
        %3471 = vset.pattern.permute.xlu0 0
        %3472 = vperm.xlu0 %3471, %v3438
        %v3473 = vpop.permute.xlu0 %3472
        %3476 = vset.pattern.permute.xlu0 0
        %3477 = vperm.xlu0 %3476, %v3439
        %v3478 = vpop.permute.xlu0 %3477
        %3481 = vset.pattern.permute.xlu0 0
        %3482 = vperm.xlu0 %3481, %v3440
        %v3483 = vpop.permute.xlu0 %3482
        %3486 = vset.pattern.permute.xlu0 0
        %3487 = vperm.xlu0 %3486, %v3441
        %v3488 = vpop.permute.xlu0 %3487
        %3491 = vset.pattern.permute.xlu0 0
        %3492 = vperm.xlu0 %3491, %v3442
        %v3493 = vpop.permute.xlu0 %3492
        %3496 = vset.pattern.permute.xlu0 0
        %3497 = vperm.xlu0 %3496, %v3443
        %v3498 = vpop.permute.xlu0 %3497
        %3501 = vset.pattern.permute.xlu0 0
        %3502 = vperm.xlu0 %3501, %v3444
        %v3503 = vpop.permute.xlu0 %3502
        %3506 = vset.pattern.permute.xlu0 0
        %3507 = vperm.xlu0 %3506, %v3445
        %v3508 = vpop.permute.xlu0 %3507
        %3511 = vset.pattern.permute.xlu0 0
        %3512 = vperm.xlu0 %3511, %v3446
        %v3513 = vpop.permute.xlu0 %3512
        %3516 = vset.pattern.permute.xlu0 0
        %3517 = vperm.xlu0 %3516, %v3447
        %v3518 = vpop.permute.xlu0 %3517
        %3521 = vset.pattern.permute.xlu0 0
        %3522 = vperm.xlu0 %3521, %v3448
        %v3523 = vpop.permute.xlu0 %3522
        %3526 = vset.pattern.permute.xlu0 0
        %3527 = vperm.xlu0 %3526, %v3449
        %v3528 = vpop.permute.xlu0 %3527
        %v3531 = vsel %vm1570, %v3418, 0
        %v3534 = vsel %vm1570, %v3419, 0
        %v3537 = vsel %vm1570, %v3420, 0
        %v3540 = vsel %vm1570, %v3421, 0
        %v3543 = vsel %vm1570, %v3422, 0
        %v3546 = vsel %vm1570, %v3423, 0
        %v3549 = vsel %vm1570, %v3424, 0
        %v3552 = vsel %vm1570, %v3425, 0
        %v3555 = vsel %vm1570, %v3426, 0
        %v3558 = vsel %vm1570, %v3427, 0
        %v3561 = vsel %vm1570, %v3428, 0
        %v3564 = vsel %vm1570, %v3429, 0
        %v3567 = vsel %vm1570, %v3430, 0
        %v3570 = vsel %vm1570, %v3431, 0
        %v3573 = vsel %vm1570, %v3432, 0
        %v3576 = vsel %vm1570, %v3433, 0
        %3578 = vmatprep.subr.mxu0 0.0
        %3579 = vmatpush1.msra.mxu0 %v3414
        %3580 = vmatprep.subr.mxu0 0.0
        %3581 = vmatpush1.msra.mxu0 %v3415
        %3582 = vmatprep.subr.mxu0 0.0
        %3583 = vmatpush1.msra.mxu0 %v3416
        %3584 = vmatprep.subr.mxu0 0.0
        %3585 = vmatpush1.msra.mxu0 %v3417
        %3586 = vmatprep.subr.mxu0 0.0
        %3587 = vmatpush1.msra.mxu0 0.0
        %3588 = vmatprep.subr.mxu0 0.0
        %3589 = vmatpush1.msra.mxu0 0.0
        %3590 = vmatprep.subr.mxu0 0.0
        %3591 = vmatpush1.msra.mxu0 0.0
        %3592 = vmatprep.subr.mxu0 0.0
        %3593 = vmatpush1.msra.mxu0 0.0
        %3594 = vmatprep.subr.mxu0 0.0
        %3595 = vmatpush1.msra.mxu0 0.0
        %3596 = vmatprep.subr.mxu0 0.0
        %3597 = vmatpush1.msra.mxu0 0.0
        %3598 = vmatprep.subr.mxu0 0.0
        %3599 = vmatpush1.msra.mxu0 0.0
        %3600 = vmatprep.subr.mxu0 0.0
        %3601 = vmatpush1.msra.mxu0 0.0
        %3602 = vmatprep.subr.mxu0 0.0
        %3603 = vmatpush1.msra.mxu0 0.0
        %3604 = vmatprep.subr.mxu0 0.0
        %3605 = vmatpush1.msra.mxu0 0.0
        %3606 = vmatprep.subr.mxu0 0.0
        %3607 = vmatpush1.msra.mxu0 0.0
        %3608 = vmatprep.subr.mxu0 0.0
        %3609 = vmatpush1.msra.mxu0 0.0
        %3610 = vmatprep.subr.mxu0 0.0
        %3611 = vmatpush1.msra.mxu0 0.0
        %3612 = vmatprep.subr.mxu0 0.0
        %3613 = vmatpush1.msra.mxu0 0.0
        %3614 = vmatprep.subr.mxu0 0.0
        %3615 = vmatpush1.msra.mxu0 0.0
        %3616 = vmatprep.subr.mxu0 0.0
        %3617 = vmatpush1.msra.mxu0 0.0
        %3618 = vmatprep.subr.mxu0 0.0
        %3619 = vmatpush1.msra.mxu0 0.0
        %3620 = vmatprep.subr.mxu0 0.0
        %3621 = vmatpush1.msra.mxu0 0.0
        %3622 = vmatprep.subr.mxu0 0.0
        %3623 = vmatpush1.msra.mxu0 0.0
        %3624 = vmatprep.subr.mxu0 0.0
        %3625 = vmatpush1.msra.mxu0 0.0
        %3626 = vmatprep.subr.mxu0 0.0
        %3627 = vmatpush1.msra.mxu0 0.0
        %3628 = vmatprep.subr.mxu0 0.0
        %3629 = vmatpush1.msra.mxu0 0.0
        %3630 = vmatprep.subr.mxu0 0.0
        %3631 = vmatpush1.msra.mxu0 0.0
        %3632 = vmatprep.subr.mxu0 0.0
        %3633 = vmatpush1.msra.mxu0 0.0
        %3634 = vmatprep.subr.mxu0 0.0
        %3635 = vmatpush1.msra.mxu0 0.0
        %3636 = vmatprep.subr.mxu0 0.0
        %3637 = vmatpush1.msra.mxu0 0.0
        %3638 = vmatprep.subr.mxu0 0.0
        %3639 = vmatpush1.msra.mxu0 0.0
        %3640 = vmatprep.subr.mxu0 0.0
        %3641 = vmatpush1.msra.mxu0 0.0
        %3642 = vmatprep.mubr.f32.mxu0 0.0
        %3643 = vmatmul.mubr.f32.gmra.mrb[0].mxu0 %v3531
        %v3644 = vpop.f32.mrb[0].mxu0
        %v3645 = vadd.f32 %v3453, %v3644
        %v3646 = vpop.f32.mrb[0].mxu0
        %3647 = vmatprep.mubr.f32.mxu0 0.0
        %3648 = vmatmul.mubr.f32.gmra.mrb[0].mxu0 %v3534
        %v3649 = vpop.f32.mrb[0].mxu0
        %v3650 = vadd.f32 %v3458, %v3649
        %v3651 = vpop.f32.mrb[0].mxu0
        %3652 = vmatprep.mubr.f32.mxu0 0.0
        %3653 = vmatmul.mubr.f32.gmra.mrb[0].mxu0 %v3537
        %v3654 = vpop.f32.mrb[0].mxu0
        %v3655 = vadd.f32 %v3463, %v3654
        %v3656 = vpop.f32.mrb[0].mxu0
        %3657 = vmatprep.mubr.f32.mxu0 0.0
        %3658 = vmatmul.mubr.f32.gmra.mrb[0].mxu0 %v3540
        %v3659 = vpop.f32.mrb[0].mxu0
        %v3660 = vadd.f32 %v3468, %v3659
        %v3661 = vpop.f32.mrb[0].mxu0
        %3662 = vmatprep.mubr.f32.mxu0 0.0
        %3663 = vmatmul.mubr.f32.gmra.mrb[0].mxu0 %v3543
        %v3664 = vpop.f32.mrb[0].mxu0
        %v3665 = vadd.f32 %v3473, %v3664
        %v3666 = vpop.f32.mrb[0].mxu0
        %3667 = vmatprep.mubr.f32.mxu0 0.0
        %3668 = vmatmul.mubr.f32.gmra.mrb[0].mxu0 %v3546
        %v3669 = vpop.f32.mrb[0].mxu0
        %v3670 = vadd.f32 %v3478, %v3669
        %v3671 = vpop.f32.mrb[0].mxu0
        %3672 = vmatprep.mubr.f32.mxu0 0.0
        %3673 = vmatmul.mubr.f32.gmra.mrb[0].mxu0 %v3549
        %v3674 = vpop.f32.mrb[0].mxu0
        %v3675 = vadd.f32 %v3483, %v3674
        %v3676 = vpop.f32.mrb[0].mxu0
        %3677 = vmatprep.mubr.f32.mxu0 0.0
        %3678 = vmatmul.mubr.f32.gmra.mrb[0].mxu0 %v3552
        %v3679 = vpop.f32.mrb[0].mxu0
        %v3680 = vadd.f32 %v3488, %v3679
        %v3681 = vpop.f32.mrb[0].mxu0
        %3682 = vmatprep.mubr.f32.mxu0 0.0
        %3683 = vmatmul.mubr.f32.gmra.mrb[0].mxu0 %v3555
        %v3684 = vpop.f32.mrb[0].mxu0
        %v3685 = vadd.f32 %v3493, %v3684
        %v3686 = vpop.f32.mrb[0].mxu0
        %3687 = vmatprep.mubr.f32.mxu0 0.0
        %3688 = vmatmul.mubr.f32.gmra.mrb[0].mxu0 %v3558
        %v3689 = vpop.f32.mrb[0].mxu0
        %v3690 = vadd.f32 %v3498, %v3689
        %v3691 = vpop.f32.mrb[0].mxu0
        %3692 = vmatprep.mubr.f32.mxu0 0.0
        %3693 = vmatmul.mubr.f32.gmra.mrb[0].mxu0 %v3561
        %v3694 = vpop.f32.mrb[0].mxu0
        %v3695 = vadd.f32 %v3503, %v3694
        %v3696 = vpop.f32.mrb[0].mxu0
        %3697 = vmatprep.mubr.f32.mxu0 0.0
        %3698 = vmatmul.mubr.f32.gmra.mrb[0].mxu0 %v3564
        %v3699 = vpop.f32.mrb[0].mxu0
        %v3700 = vadd.f32 %v3508, %v3699
        %v3701 = vpop.f32.mrb[0].mxu0
        %3702 = vmatprep.mubr.f32.mxu0 0.0
        %3703 = vmatmul.mubr.f32.gmra.mrb[0].mxu0 %v3567
        %v3704 = vpop.f32.mrb[0].mxu0
        %v3705 = vadd.f32 %v3513, %v3704
        %v3706 = vpop.f32.mrb[0].mxu0
        %3707 = vmatprep.mubr.f32.mxu0 0.0
        %3708 = vmatmul.mubr.f32.gmra.mrb[0].mxu0 %v3570
        %v3709 = vpop.f32.mrb[0].mxu0
        %v3710 = vadd.f32 %v3518, %v3709
        %v3711 = vpop.f32.mrb[0].mxu0
        %3712 = vmatprep.mubr.f32.mxu0 0.0
        %3713 = vmatmul.mubr.f32.gmra.mrb[0].mxu0 %v3573
        %v3714 = vpop.f32.mrb[0].mxu0
        %v3715 = vadd.f32 %v3523, %v3714
        %v3716 = vpop.f32.mrb[0].mxu0
        %3717 = vmatprep.mubr.f32.mxu0 0.0
        %3718 = vmatmul.mubr.f32.gmra.mrb[0].mxu0 %v3576
        %v3719 = vpop.f32.mrb[0].mxu0
        %v3720 = vadd.f32 %v3528, %v3719
        %v3721 = vpop.f32.mrb[0].mxu0
        %3722 = vdwg.mxu0
        %v3723 = vmul.f32 %v3645, %v3645
        %v3724 = vmul.f32 %v3650, %v3650
        %v3725 = vmul.f32 %v3655, %v3655
        %v3726 = vmul.f32 %v3660, %v3660
        %v3727 = vmul.f32 %v3665, %v3665
        %v3728 = vmul.f32 %v3670, %v3670
        %v3729 = vmul.f32 %v3675, %v3675
        %v3730 = vmul.f32 %v3680, %v3680
        %v3731 = vmul.f32 %v3685, %v3685
        %v3732 = vmul.f32 %v3690, %v3690
        %v3733 = vmul.f32 %v3695, %v3695
        %v3734 = vmul.f32 %v3700, %v3700
        %v3735 = vmul.f32 %v3705, %v3705
        %v3736 = vmul.f32 %v3710, %v3710
        %v3737 = vmul.f32 %v3715, %v3715
        %v3738 = vmul.f32 %v3720, %v3720
        %v3739 = vmul.f32 %v3645, %v3723
        %v3740 = vmul.f32 %v3650, %v3724
        %v3741 = vmul.f32 %v3655, %v3725
        %v3742 = vmul.f32 %v3660, %v3726
        %v3743 = vmul.f32 %v3665, %v3727
        %v3744 = vmul.f32 %v3670, %v3728
        %v3745 = vmul.f32 %v3675, %v3729
        %v3746 = vmul.f32 %v3680, %v3730
        %v3747 = vmul.f32 %v3685, %v3731
        %v3748 = vmul.f32 %v3690, %v3732
        %v3749 = vmul.f32 %v3695, %v3733
        %v3750 = vmul.f32 %v3700, %v3734
        %v3751 = vmul.f32 %v3705, %v3735
        %v3752 = vmul.f32 %v3710, %v3736
        %v3753 = vmul.f32 %v3715, %v3737
        %v3754 = vmul.f32 %v3720, %v3738
        %v3755 = vmul.f32 %v3739, 0.044715
        %v3756 = vmul.f32 %v3740, 0.044715
        %v3757 = vmul.f32 %v3741, 0.044715
        %v3758 = vmul.f32 %v3742, 0.044715
        %v3759 = vmul.f32 %v3743, 0.044715
        %v3760 = vmul.f32 %v3744, 0.044715
        %v3761 = vmul.f32 %v3745, 0.044715
        %v3762 = vmul.f32 %v3746, 0.044715
        %v3763 = vmul.f32 %v3747, 0.044715
        %v3764 = vmul.f32 %v3748, 0.044715
        %v3765 = vmul.f32 %v3749, 0.044715
        %v3766 = vmul.f32 %v3750, 0.044715
        %v3767 = vmul.f32 %v3751, 0.044715
        %v3768 = vmul.f32 %v3752, 0.044715
        %v3769 = vmul.f32 %v3753, 0.044715
        %v3770 = vmul.f32 %v3754, 0.044715
        %v3771 = vadd.f32 %v3645, %v3755
        %v3772 = vadd.f32 %v3650, %v3756
        %v3773 = vadd.f32 %v3655, %v3757
        %v3774 = vadd.f32 %v3660, %v3758
        %v3775 = vadd.f32 %v3665, %v3759
        %v3776 = vadd.f32 %v3670, %v3760
        %v3777 = vadd.f32 %v3675, %v3761
        %v3778 = vadd.f32 %v3680, %v3762
        %v3779 = vadd.f32 %v3685, %v3763
        %v3780 = vadd.f32 %v3690, %v3764
        %v3781 = vadd.f32 %v3695, %v3765
        %v3782 = vadd.f32 %v3700, %v3766
        %v3783 = vadd.f32 %v3705, %v3767
        %v3784 = vadd.f32 %v3710, %v3768
        %v3785 = vadd.f32 %v3715, %v3769
        %v3786 = vadd.f32 %v3720, %v3770
        %v3787 = vmul.f32 %v3771, 0.7978846
        %v3788 = vmul.f32 %v3772, 0.7978846
        %v3789 = vmul.f32 %v3773, 0.7978846
        %v3790 = vmul.f32 %v3774, 0.7978846
        %v3791 = vmul.f32 %v3775, 0.7978846
        %v3792 = vmul.f32 %v3776, 0.7978846
        %v3793 = vmul.f32 %v3777, 0.7978846
        %v3794 = vmul.f32 %v3778, 0.7978846
        %v3795 = vmul.f32 %v3779, 0.7978846
        %v3796 = vmul.f32 %v3780, 0.7978846
        %v3797 = vmul.f32 %v3781, 0.7978846
        %v3798 = vmul.f32 %v3782, 0.7978846
        %v3799 = vmul.f32 %v3783, 0.7978846
        %v3800 = vmul.f32 %v3784, 0.7978846
        %v3801 = vmul.f32 %v3785, 0.7978846
        %v3802 = vmul.f32 %v3786, 0.7978846
        %v3803 = vtanh.pop %v3787
        %v3804 = vtanh.pop %v3788
        %v3805 = vtanh.pop %v3789
        %v3806 = vtanh.pop %v3790
        %v3807 = vtanh.pop %v3791
        %v3808 = vtanh.pop %v3792
        %v3809 = vtanh.pop %v3793
        %v3810 = vtanh.pop %v3794
        %v3811 = vtanh.pop %v3795
        %v3812 = vtanh.pop %v3796
        %v3813 = vtanh.pop %v3797
        %v3814 = vtanh.pop %v3798
        %v3815 = vtanh.pop %v3799
        %v3816 = vtanh.pop %v3800
        %v3817 = vtanh.pop %v3801
        %v3818 = vtanh.pop %v3802
        %v3819 = vadd.f32 %v3803, 1.0
        %v3820 = vadd.f32 %v3804, 1.0
        %v3821 = vadd.f32 %v3805, 1.0
        %v3822 = vadd.f32 %v3806, 1.0
        %v3823 = vadd.f32 %v3807, 1.0
        %v3824 = vadd.f32 %v3808, 1.0
        %v3825 = vadd.f32 %v3809, 1.0
        %v3826 = vadd.f32 %v3810, 1.0
        %v3827 = vadd.f32 %v3811, 1.0
        %v3828 = vadd.f32 %v3812, 1.0
        %v3829 = vadd.f32 %v3813, 1.0
        %v3830 = vadd.f32 %v3814, 1.0
        %v3831 = vadd.f32 %v3815, 1.0
        %v3832 = vadd.f32 %v3816, 1.0
        %v3833 = vadd.f32 %v3817, 1.0
        %v3834 = vadd.f32 %v3818, 1.0
        %v3835 = vmul.f32 %v3819, 0.5
        %v3836 = vmul.f32 %v3820, 0.5
        %v3837 = vmul.f32 %v3821, 0.5
        %v3838 = vmul.f32 %v3822, 0.5
        %v3839 = vmul.f32 %v3823, 0.5
        %v3840 = vmul.f32 %v3824, 0.5
        %v3841 = vmul.f32 %v3825, 0.5
        %v3842 = vmul.f32 %v3826, 0.5
        %v3843 = vmul.f32 %v3827, 0.5
        %v3844 = vmul.f32 %v3828, 0.5
        %v3845 = vmul.f32 %v3829, 0.5
        %v3846 = vmul.f32 %v3830, 0.5
        %v3847 = vmul.f32 %v3831, 0.5
        %v3848 = vmul.f32 %v3832, 0.5
        %v3849 = vmul.f32 %v3833, 0.5
        %v3850 = vmul.f32 %v3834, 0.5
        %v3851 = vmul.f32 %v3645, %v3835
        %v3852 = vmul.f32 %v3650, %v3836
        %v3853 = vmul.f32 %v3655, %v3837
        %v3854 = vmul.f32 %v3660, %v3838
        %v3855 = vmul.f32 %v3665, %v3839
        %v3856 = vmul.f32 %v3670, %v3840
        %v3857 = vmul.f32 %v3675, %v3841
        %v3858 = vmul.f32 %v3680, %v3842
        %v3859 = vmul.f32 %v3685, %v3843
        %v3860 = vmul.f32 %v3690, %v3844
        %v3861 = vmul.f32 %v3695, %v3845
        %v3862 = vmul.f32 %v3700, %v3846
        %v3863 = vmul.f32 %v3705, %v3847
        %v3864 = vmul.f32 %v3710, %v3848
        %v3865 = vmul.f32 %v3715, %v3849
        %v3866 = vmul.f32 %v3720, %v3850
        %v3867 = vld [vmem:[#allocation40] sm:$0xff]
        %v3868 = vld [vmem:[#allocation40 + $0x8] sm:$0xff]
        %v3869 = vld [vmem:[#allocation40 + $0x10] sm:$0xff]
        %v3870 = vld [vmem:[#allocation40 + $0x18] sm:$0xff]
        %v3871 = vld [vmem:[#allocation40 + $0x20] sm:$0xff]
        %v3872 = vld [vmem:[#allocation40 + $0x28] sm:$0xff]
        %v3873 = vld [vmem:[#allocation40 + $0x30] sm:$0xff]
        %v3874 = vld [vmem:[#allocation40 + $0x38] sm:$0xff]
        %v3875 = vld [vmem:[#allocation40 + $0x40] sm:$0xff]
        %v3876 = vld [vmem:[#allocation40 + $0x48] sm:$0xff]
        %v3877 = vld [vmem:[#allocation40 + $0x50] sm:$0xff]
        %v3878 = vld [vmem:[#allocation40 + $0x58] sm:$0xff]
        %v3879 = vld [vmem:[#allocation40 + $0x60] sm:$0xff]
        %v3880 = vld [vmem:[#allocation40 + $0x68] sm:$0xff]
        %v3881 = vld [vmem:[#allocation40 + $0x70] sm:$0xff]
        %v3882 = vld [vmem:[#allocation40 + $0x78] sm:$0xff]
        %v3883 = vld [vmem:[#allocation41] sm:$0xff]
        %v3884 = vld [vmem:[#allocation41 + $0x8] sm:$0xff]
        %v3885 = vld [vmem:[#allocation41 + $0x10] sm:$0xff]
        %v3886 = vld [vmem:[#allocation41 + $0x18] sm:$0xff]
        %v3887 = vld [vmem:[#allocation41 + $0x20] sm:$0xff]
        %v3888 = vld [vmem:[#allocation41 + $0x28] sm:$0xff]
        %v3889 = vld [vmem:[#allocation41 + $0x30] sm:$0xff]
        %v3890 = vld [vmem:[#allocation41 + $0x38] sm:$0xff]
        %v3891 = vld [vmem:[#allocation41 + $0x40] sm:$0xff]
        %v3892 = vld [vmem:[#allocation41 + $0x48] sm:$0xff]
        %v3893 = vld [vmem:[#allocation41 + $0x50] sm:$0xff]
        %v3894 = vld [vmem:[#allocation41 + $0x58] sm:$0xff]
        %v3895 = vld [vmem:[#allocation41 + $0x60] sm:$0xff]
        %v3896 = vld [vmem:[#allocation41 + $0x68] sm:$0xff]
        %v3897 = vld [vmem:[#allocation41 + $0x70] sm:$0xff]
        %v3898 = vld [vmem:[#allocation41 + $0x78] sm:$0xff]
        %3899 = vrot.lane.b32.xlu0 %v3851, 2
        %v3900 = vpop.permute.xlu0 %3899
        %3901 = vrot.lane.b32.xlu0 %v3852, 2
        %v3902 = vpop.permute.xlu0 %3901
        %3903 = vrot.lane.b32.xlu0 %v3853, 2
        %v3904 = vpop.permute.xlu0 %3903
        %3905 = vrot.lane.b32.xlu0 %v3854, 2
        %v3906 = vpop.permute.xlu0 %3905
        %3907 = vrot.lane.b32.xlu0 %v3855, 2
        %v3908 = vpop.permute.xlu0 %3907
        %3909 = vrot.lane.b32.xlu0 %v3856, 2
        %v3910 = vpop.permute.xlu0 %3909
        %3911 = vrot.lane.b32.xlu0 %v3857, 2
        %v3912 = vpop.permute.xlu0 %3911
        %3913 = vrot.lane.b32.xlu0 %v3858, 2
        %v3914 = vpop.permute.xlu0 %3913
        %3915 = vrot.lane.b32.xlu0 %v3859, 2
        %v3916 = vpop.permute.xlu0 %3915
        %3917 = vrot.lane.b32.xlu0 %v3860, 2
        %v3918 = vpop.permute.xlu0 %3917
        %3919 = vrot.lane.b32.xlu0 %v3861, 2
        %v3920 = vpop.permute.xlu0 %3919
        %3921 = vrot.lane.b32.xlu0 %v3862, 2
        %v3922 = vpop.permute.xlu0 %3921
        %3923 = vrot.lane.b32.xlu0 %v3863, 2
        %v3924 = vpop.permute.xlu0 %3923
        %3925 = vrot.lane.b32.xlu0 %v3864, 2
        %v3926 = vpop.permute.xlu0 %3925
        %3927 = vrot.lane.b32.xlu0 %v3865, 2
        %v3928 = vpop.permute.xlu0 %3927
        %3929 = vrot.lane.b32.xlu0 %v3866, 2
        %v3930 = vpop.permute.xlu0 %3929
        %v3931 = vmul.f32 %v3900, %v1909
        %v3932 = vmul.f32 %v3902, %v1909
        %v3933 = vmul.f32 %v3904, %v1909
        %v3934 = vmul.f32 %v3906, %v1909
        %v3935 = vmul.f32 %v3908, %v1909
        %v3936 = vmul.f32 %v3910, %v1909
        %v3937 = vmul.f32 %v3912, %v1909
        %v3938 = vmul.f32 %v3914, %v1909
        %v3939 = vmul.f32 %v3916, %v1909
        %v3940 = vmul.f32 %v3918, %v1909
        %v3941 = vmul.f32 %v3920, %v1909
        %v3942 = vmul.f32 %v3922, %v1909
        %v3943 = vmul.f32 %v3924, %v1909
        %v3944 = vmul.f32 %v3926, %v1909
        %v3945 = vmul.f32 %v3928, %v1909
        %v3946 = vmul.f32 %v3930, %v1909
        %3948 = vset.pattern.permute.xlu0 0
        %3949 = vperm.xlu0 %3948, %v3867
        %v3950 = vpop.permute.xlu0 %3949
        %3953 = vset.pattern.permute.xlu0 0
        %3954 = vperm.xlu0 %3953, %v3868
        %v3955 = vpop.permute.xlu0 %3954
        %3958 = vset.pattern.permute.xlu0 0
        %3959 = vperm.xlu0 %3958, %v3869
        %v3960 = vpop.permute.xlu0 %3959
        %3963 = vset.pattern.permute.xlu0 0
        %3964 = vperm.xlu0 %3963, %v3870
        %v3965 = vpop.permute.xlu0 %3964
        %3968 = vset.pattern.permute.xlu0 0
        %3969 = vperm.xlu0 %3968, %v3871
        %v3970 = vpop.permute.xlu0 %3969
        %3973 = vset.pattern.permute.xlu0 0
        %3974 = vperm.xlu0 %3973, %v3872
        %v3975 = vpop.permute.xlu0 %3974
        %3978 = vset.pattern.permute.xlu0 0
        %3979 = vperm.xlu0 %3978, %v3873
        %v3980 = vpop.permute.xlu0 %3979
        %3983 = vset.pattern.permute.xlu0 0
        %3984 = vperm.xlu0 %3983, %v3874
        %v3985 = vpop.permute.xlu0 %3984
        %3988 = vset.pattern.permute.xlu0 0
        %3989 = vperm.xlu0 %3988, %v3875
        %v3990 = vpop.permute.xlu0 %3989
        %3993 = vset.pattern.permute.xlu0 0
        %3994 = vperm.xlu0 %3993, %v3876
        %v3995 = vpop.permute.xlu0 %3994
        %3998 = vset.pattern.permute.xlu0 0
        %3999 = vperm.xlu0 %3998, %v3877
        %v4000 = vpop.permute.xlu0 %3999
        %4003 = vset.pattern.permute.xlu0 0
        %4004 = vperm.xlu0 %4003, %v3878
        %v4005 = vpop.permute.xlu0 %4004
        %4008 = vset.pattern.permute.xlu0 0
        %4009 = vperm.xlu0 %4008, %v3879
        %v4010 = vpop.permute.xlu0 %4009
        %4013 = vset.pattern.permute.xlu0 0
        %4014 = vperm.xlu0 %4013, %v3880
        %v4015 = vpop.permute.xlu0 %4014
        %4018 = vset.pattern.permute.xlu0 0
        %4019 = vperm.xlu0 %4018, %v3881
        %v4020 = vpop.permute.xlu0 %4019
        %4023 = vset.pattern.permute.xlu0 0
        %4024 = vperm.xlu0 %4023, %v3882
        %v4025 = vpop.permute.xlu0 %4024
        %v4027 = vmul.f32 %v3931, %v3950
        %v4028 = vmul.f32 %v3932, %v3955
        %v4029 = vmul.f32 %v3933, %v3960
        %v4030 = vmul.f32 %v3934, %v3965
        %v4031 = vmul.f32 %v3935, %v3970
        %v4032 = vmul.f32 %v3936, %v3975
        %v4033 = vmul.f32 %v3937, %v3980
        %v4034 = vmul.f32 %v3938, %v3985
        %v4035 = vmul.f32 %v3939, %v3990
        %v4036 = vmul.f32 %v3940, %v3995
        %v4037 = vmul.f32 %v3941, %v4000
        %v4038 = vmul.f32 %v3942, %v4005
        %v4039 = vmul.f32 %v3943, %v4010
        %v4040 = vmul.f32 %v3944, %v4015
        %v4041 = vmul.f32 %v3945, %v4020
        %v4042 = vmul.f32 %v3946, %v4025
        %v4043 = vadd.f32 %v4027, 0.0
        %v4044 = vadd.f32 %v4028, 0.0
        %v4045 = vadd.f32 %v4029, 0.0
        %v4046 = vadd.f32 %v4030, 0.0
        %v4047 = vadd.f32 %v4031, 0.0
        %v4048 = vadd.f32 %v4032, 0.0
        %v4049 = vadd.f32 %v4033, 0.0
        %v4050 = vadd.f32 %v4034, 0.0
        %v4051 = vadd.f32 %v4035, 0.0
        %v4052 = vadd.f32 %v4036, 0.0
        %v4053 = vadd.f32 %v4037, 0.0
        %v4054 = vadd.f32 %v4038, 0.0
        %v4055 = vadd.f32 %v4039, 0.0
        %v4056 = vadd.f32 %v4040, 0.0
        %v4057 = vadd.f32 %v4041, 0.0
        %v4058 = vadd.f32 %v4042, 0.0
        %4059 = vrot.lane.b32.xlu0 %v3851, 1
        %v4060 = vpop.permute.xlu0 %4059
        %4061 = vrot.lane.b32.xlu0 %v3852, 1
        %v4062 = vpop.permute.xlu0 %4061
        %4063 = vrot.lane.b32.xlu0 %v3853, 1
        %v4064 = vpop.permute.xlu0 %4063
        %4065 = vrot.lane.b32.xlu0 %v3854, 1
        %v4066 = vpop.permute.xlu0 %4065
        %4067 = vrot.lane.b32.xlu0 %v3855, 1
        %v4068 = vpop.permute.xlu0 %4067
        %4069 = vrot.lane.b32.xlu0 %v3856, 1
        %v4070 = vpop.permute.xlu0 %4069
        %4071 = vrot.lane.b32.xlu0 %v3857, 1
        %v4072 = vpop.permute.xlu0 %4071
        %4073 = vrot.lane.b32.xlu0 %v3858, 1
        %v4074 = vpop.permute.xlu0 %4073
        %4075 = vrot.lane.b32.xlu0 %v3859, 1
        %v4076 = vpop.permute.xlu0 %4075
        %4077 = vrot.lane.b32.xlu0 %v3860, 1
        %v4078 = vpop.permute.xlu0 %4077
        %4079 = vrot.lane.b32.xlu0 %v3861, 1
        %v4080 = vpop.permute.xlu0 %4079
        %4081 = vrot.lane.b32.xlu0 %v3862, 1
        %v4082 = vpop.permute.xlu0 %4081
        %4083 = vrot.lane.b32.xlu0 %v3863, 1
        %v4084 = vpop.permute.xlu0 %4083
        %4085 = vrot.lane.b32.xlu0 %v3864, 1
        %v4086 = vpop.permute.xlu0 %4085
        %4087 = vrot.lane.b32.xlu0 %v3865, 1
        %v4088 = vpop.permute.xlu0 %4087
        %4089 = vrot.lane.b32.xlu0 %v3866, 1
        %v4090 = vpop.permute.xlu0 %4089
        %v4091 = vmul.f32 %v4060, %v2022
        %v4092 = vmul.f32 %v4062, %v2022
        %v4093 = vmul.f32 %v4064, %v2022
        %v4094 = vmul.f32 %v4066, %v2022
        %v4095 = vmul.f32 %v4068, %v2022
        %v4096 = vmul.f32 %v4070, %v2022
        %v4097 = vmul.f32 %v4072, %v2022
        %v4098 = vmul.f32 %v4074, %v2022
        %v4099 = vmul.f32 %v4076, %v2022
        %v4100 = vmul.f32 %v4078, %v2022
        %v4101 = vmul.f32 %v4080, %v2022
        %v4102 = vmul.f32 %v4082, %v2022
        %v4103 = vmul.f32 %v4084, %v2022
        %v4104 = vmul.f32 %v4086, %v2022
        %v4105 = vmul.f32 %v4088, %v2022
        %v4106 = vmul.f32 %v4090, %v2022
        %4107 = vset.pattern.permute.xlu0 1
        %4108 = vperm.xlu0 %4107, %v3867
        %v4109 = vpop.permute.xlu0 %4108
        %4111 = vset.pattern.permute.xlu0 1
        %4112 = vperm.xlu0 %4111, %v3868
        %v4113 = vpop.permute.xlu0 %4112
        %4115 = vset.pattern.permute.xlu0 1
        %4116 = vperm.xlu0 %4115, %v3869
        %v4117 = vpop.permute.xlu0 %4116
        %4119 = vset.pattern.permute.xlu0 1
        %4120 = vperm.xlu0 %4119, %v3870
        %v4121 = vpop.permute.xlu0 %4120
        %4123 = vset.pattern.permute.xlu0 1
        %4124 = vperm.xlu0 %4123, %v3871
        %v4125 = vpop.permute.xlu0 %4124
        %4127 = vset.pattern.permute.xlu0 1
        %4128 = vperm.xlu0 %4127, %v3872
        %v4129 = vpop.permute.xlu0 %4128
        %4131 = vset.pattern.permute.xlu0 1
        %4132 = vperm.xlu0 %4131, %v3873
        %v4133 = vpop.permute.xlu0 %4132
        %4135 = vset.pattern.permute.xlu0 1
        %4136 = vperm.xlu0 %4135, %v3874
        %v4137 = vpop.permute.xlu0 %4136
        %4139 = vset.pattern.permute.xlu0 1
        %4140 = vperm.xlu0 %4139, %v3875
        %v4141 = vpop.permute.xlu0 %4140
        %4143 = vset.pattern.permute.xlu0 1
        %4144 = vperm.xlu0 %4143, %v3876
        %v4145 = vpop.permute.xlu0 %4144
        %4147 = vset.pattern.permute.xlu0 1
        %4148 = vperm.xlu0 %4147, %v3877
        %v4149 = vpop.permute.xlu0 %4148
        %4151 = vset.pattern.permute.xlu0 1
        %4152 = vperm.xlu0 %4151, %v3878
        %v4153 = vpop.permute.xlu0 %4152
        %4155 = vset.pattern.permute.xlu0 1
        %4156 = vperm.xlu0 %4155, %v3879
        %v4157 = vpop.permute.xlu0 %4156
        %4159 = vset.pattern.permute.xlu0 1
        %4160 = vperm.xlu0 %4159, %v3880
        %v4161 = vpop.permute.xlu0 %4160
        %4163 = vset.pattern.permute.xlu0 1
        %4164 = vperm.xlu0 %4163, %v3881
        %v4165 = vpop.permute.xlu0 %4164
        %4167 = vset.pattern.permute.xlu0 1
        %4168 = vperm.xlu0 %4167, %v3882
        %v4169 = vpop.permute.xlu0 %4168
        %v4171 = vmul.f32 %v4091, %v4109
        %v4172 = vmul.f32 %v4092, %v4113
        %v4173 = vmul.f32 %v4093, %v4117
        %v4174 = vmul.f32 %v4094, %v4121
        %v4175 = vmul.f32 %v4095, %v4125
        %v4176 = vmul.f32 %v4096, %v4129
        %v4177 = vmul.f32 %v4097, %v4133
        %v4178 = vmul.f32 %v4098, %v4137
        %v4179 = vmul.f32 %v4099, %v4141
        %v4180 = vmul.f32 %v4100, %v4145
        %v4181 = vmul.f32 %v4101, %v4149
        %v4182 = vmul.f32 %v4102, %v4153
        %v4183 = vmul.f32 %v4103, %v4157
        %v4184 = vmul.f32 %v4104, %v4161
        %v4185 = vmul.f32 %v4105, %v4165
        %v4186 = vmul.f32 %v4106, %v4169
        %v4187 = vadd.f32 %v4043, %v4171
        %v4188 = vadd.f32 %v4044, %v4172
        %v4189 = vadd.f32 %v4045, %v4173
        %v4190 = vadd.f32 %v4046, %v4174
        %v4191 = vadd.f32 %v4047, %v4175
        %v4192 = vadd.f32 %v4048, %v4176
        %v4193 = vadd.f32 %v4049, %v4177
        %v4194 = vadd.f32 %v4050, %v4178
        %v4195 = vadd.f32 %v4051, %v4179
        %v4196 = vadd.f32 %v4052, %v4180
        %v4197 = vadd.f32 %v4053, %v4181
        %v4198 = vadd.f32 %v4054, %v4182
        %v4199 = vadd.f32 %v4055, %v4183
        %v4200 = vadd.f32 %v4056, %v4184
        %v4201 = vadd.f32 %v4057, %v4185
        %v4202 = vadd.f32 %v4058, %v4186
        %4203 = vset.pattern.permute.xlu0 2
        %4204 = vperm.xlu0 %4203, %v3867
        %v4205 = vpop.permute.xlu0 %4204
        %4207 = vset.pattern.permute.xlu0 2
        %4208 = vperm.xlu0 %4207, %v3868
        %v4209 = vpop.permute.xlu0 %4208
        %4211 = vset.pattern.permute.xlu0 2
        %4212 = vperm.xlu0 %4211, %v3869
        %v4213 = vpop.permute.xlu0 %4212
        %4215 = vset.pattern.permute.xlu0 2
        %4216 = vperm.xlu0 %4215, %v3870
        %v4217 = vpop.permute.xlu0 %4216
        %4219 = vset.pattern.permute.xlu0 2
        %4220 = vperm.xlu0 %4219, %v3871
        %v4221 = vpop.permute.xlu0 %4220
        %4223 = vset.pattern.permute.xlu0 2
        %4224 = vperm.xlu0 %4223, %v3872
        %v4225 = vpop.permute.xlu0 %4224
        %4227 = vset.pattern.permute.xlu0 2
        %4228 = vperm.xlu0 %4227, %v3873
        %v4229 = vpop.permute.xlu0 %4228
        %4231 = vset.pattern.permute.xlu0 2
        %4232 = vperm.xlu0 %4231, %v3874
        %v4233 = vpop.permute.xlu0 %4232
        %4235 = vset.pattern.permute.xlu0 2
        %4236 = vperm.xlu0 %4235, %v3875
        %v4237 = vpop.permute.xlu0 %4236
        %4239 = vset.pattern.permute.xlu0 2
        %4240 = vperm.xlu0 %4239, %v3876
        %v4241 = vpop.permute.xlu0 %4240
        %4243 = vset.pattern.permute.xlu0 2
        %4244 = vperm.xlu0 %4243, %v3877
        %v4245 = vpop.permute.xlu0 %4244
        %4247 = vset.pattern.permute.xlu0 2
        %4248 = vperm.xlu0 %4247, %v3878
        %v4249 = vpop.permute.xlu0 %4248
        %4251 = vset.pattern.permute.xlu0 2
        %4252 = vperm.xlu0 %4251, %v3879
        %v4253 = vpop.permute.xlu0 %4252
        %4255 = vset.pattern.permute.xlu0 2
        %4256 = vperm.xlu0 %4255, %v3880
        %v4257 = vpop.permute.xlu0 %4256
        %4259 = vset.pattern.permute.xlu0 2
        %4260 = vperm.xlu0 %4259, %v3881
        %v4261 = vpop.permute.xlu0 %4260
        %4263 = vset.pattern.permute.xlu0 2
        %4264 = vperm.xlu0 %4263, %v3882
        %v4265 = vpop.permute.xlu0 %4264
        %v4267 = vmul.f32 %v3851, %v4205
        %v4268 = vmul.f32 %v3852, %v4209
        %v4269 = vmul.f32 %v3853, %v4213
        %v4270 = vmul.f32 %v3854, %v4217
        %v4271 = vmul.f32 %v3855, %v4221
        %v4272 = vmul.f32 %v3856, %v4225
        %v4273 = vmul.f32 %v3857, %v4229
        %v4274 = vmul.f32 %v3858, %v4233
        %v4275 = vmul.f32 %v3859, %v4237
        %v4276 = vmul.f32 %v3860, %v4241
        %v4277 = vmul.f32 %v3861, %v4245
        %v4278 = vmul.f32 %v3862, %v4249
        %v4279 = vmul.f32 %v3863, %v4253
        %v4280 = vmul.f32 %v3864, %v4257
        %v4281 = vmul.f32 %v3865, %v4261
        %v4282 = vmul.f32 %v3866, %v4265
        %v4283 = vadd.f32 %v4187, %v4267
        %v4284 = vadd.f32 %v4188, %v4268
        %v4285 = vadd.f32 %v4189, %v4269
        %v4286 = vadd.f32 %v4190, %v4270
        %v4287 = vadd.f32 %v4191, %v4271
        %v4288 = vadd.f32 %v4192, %v4272
        %v4289 = vadd.f32 %v4193, %v4273
        %v4290 = vadd.f32 %v4194, %v4274
        %v4291 = vadd.f32 %v4195, %v4275
        %v4292 = vadd.f32 %v4196, %v4276
        %v4293 = vadd.f32 %v4197, %v4277
        %v4294 = vadd.f32 %v4198, %v4278
        %v4295 = vadd.f32 %v4199, %v4279
        %v4296 = vadd.f32 %v4200, %v4280
        %v4297 = vadd.f32 %v4201, %v4281
        %v4298 = vadd.f32 %v4202, %v4282
        %4299 = vrot.lane.b32.xlu0 %v3851, 127
        %v4300 = vpop.permute.xlu0 %4299
        %4301 = vrot.lane.b32.xlu0 %v3852, 127
        %v4302 = vpop.permute.xlu0 %4301
        %4303 = vrot.lane.b32.xlu0 %v3853, 127
        %v4304 = vpop.permute.xlu0 %4303
        %4305 = vrot.lane.b32.xlu0 %v3854, 127
        %v4306 = vpop.permute.xlu0 %4305
        %4307 = vrot.lane.b32.xlu0 %v3855, 127
        %v4308 = vpop.permute.xlu0 %4307
        %4309 = vrot.lane.b32.xlu0 %v3856, 127
        %v4310 = vpop.permute.xlu0 %4309
        %4311 = vrot.lane.b32.xlu0 %v3857, 127
        %v4312 = vpop.permute.xlu0 %4311
        %4313 = vrot.lane.b32.xlu0 %v3858, 127
        %v4314 = vpop.permute.xlu0 %4313
        %4315 = vrot.lane.b32.xlu0 %v3859, 127
        %v4316 = vpop.permute.xlu0 %4315
        %4317 = vrot.lane.b32.xlu0 %v3860, 127
        %v4318 = vpop.permute.xlu0 %4317
        %4319 = vrot.lane.b32.xlu0 %v3861, 127
        %v4320 = vpop.permute.xlu0 %4319
        %4321 = vrot.lane.b32.xlu0 %v3862, 127
        %v4322 = vpop.permute.xlu0 %4321
        %4323 = vrot.lane.b32.xlu0 %v3863, 127
        %v4324 = vpop.permute.xlu0 %4323
        %4325 = vrot.lane.b32.xlu0 %v3864, 127
        %v4326 = vpop.permute.xlu0 %4325
        %4327 = vrot.lane.b32.xlu0 %v3865, 127
        %v4328 = vpop.permute.xlu0 %4327
        %4329 = vrot.lane.b32.xlu0 %v3866, 127
        %v4330 = vpop.permute.xlu0 %4329
        %v4331 = vmul.f32 %v4300, %v2207
        %v4332 = vmul.f32 %v4302, %v2207
        %v4333 = vmul.f32 %v4304, %v2207
        %v4334 = vmul.f32 %v4306, %v2207
        %v4335 = vmul.f32 %v4308, %v2207
        %v4336 = vmul.f32 %v4310, %v2207
        %v4337 = vmul.f32 %v4312, %v2207
        %v4338 = vmul.f32 %v4314, %v2207
        %v4339 = vmul.f32 %v4316, %v2207
        %v4340 = vmul.f32 %v4318, %v2207
        %v4341 = vmul.f32 %v4320, %v2207
        %v4342 = vmul.f32 %v4322, %v2207
        %v4343 = vmul.f32 %v4324, %v2207
        %v4344 = vmul.f32 %v4326, %v2207
        %v4345 = vmul.f32 %v4328, %v2207
        %v4346 = vmul.f32 %v4330, %v2207
        %4347 = vset.pattern.permute.xlu0 3
        %4348 = vperm.xlu0 %4347, %v3867
        %v4349 = vpop.permute.xlu0 %4348
        %4351 = vset.pattern.permute.xlu0 3
        %4352 = vperm.xlu0 %4351, %v3868
        %v4353 = vpop.permute.xlu0 %4352
        %4355 = vset.pattern.permute.xlu0 3
        %4356 = vperm.xlu0 %4355, %v3869
        %v4357 = vpop.permute.xlu0 %4356
        %4359 = vset.pattern.permute.xlu0 3
        %4360 = vperm.xlu0 %4359, %v3870
        %v4361 = vpop.permute.xlu0 %4360
        %4363 = vset.pattern.permute.xlu0 3
        %4364 = vperm.xlu0 %4363, %v3871
        %v4365 = vpop.permute.xlu0 %4364
        %4367 = vset.pattern.permute.xlu0 3
        %4368 = vperm.xlu0 %4367, %v3872
        %v4369 = vpop.permute.xlu0 %4368
        %4371 = vset.pattern.permute.xlu0 3
        %4372 = vperm.xlu0 %4371, %v3873
        %v4373 = vpop.permute.xlu0 %4372
        %4375 = vset.pattern.permute.xlu0 3
        %4376 = vperm.xlu0 %4375, %v3874
        %v4377 = vpop.permute.xlu0 %4376
        %4379 = vset.pattern.permute.xlu0 3
        %4380 = vperm.xlu0 %4379, %v3875
        %v4381 = vpop.permute.xlu0 %4380
        %4383 = vset.pattern.permute.xlu0 3
        %4384 = vperm.xlu0 %4383, %v3876
        %v4385 = vpop.permute.xlu0 %4384
        %4387 = vset.pattern.permute.xlu0 3
        %4388 = vperm.xlu0 %4387, %v3877
        %v4389 = vpop.permute.xlu0 %4388
        %4391 = vset.pattern.permute.xlu0 3
        %4392 = vperm.xlu0 %4391, %v3878
        %v4393 = vpop.permute.xlu0 %4392
        %4395 = vset.pattern.permute.xlu0 3
        %4396 = vperm.xlu0 %4395, %v3879
        %v4397 = vpop.permute.xlu0 %4396
        %4399 = vset.pattern.permute.xlu0 3
        %4400 = vperm.xlu0 %4399, %v3880
        %v4401 = vpop.permute.xlu0 %4400
        %4403 = vset.pattern.permute.xlu0 3
        %4404 = vperm.xlu0 %4403, %v3881
        %v4405 = vpop.permute.xlu0 %4404
        %4407 = vset.pattern.permute.xlu0 3
        %4408 = vperm.xlu0 %4407, %v3882
        %v4409 = vpop.permute.xlu0 %4408
        %v4411 = vmul.f32 %v4331, %v4349
        %v4412 = vmul.f32 %v4332, %v4353
        %v4413 = vmul.f32 %v4333, %v4357
        %v4414 = vmul.f32 %v4334, %v4361
        %v4415 = vmul.f32 %v4335, %v4365
        %v4416 = vmul.f32 %v4336, %v4369
        %v4417 = vmul.f32 %v4337, %v4373
        %v4418 = vmul.f32 %v4338, %v4377
        %v4419 = vmul.f32 %v4339, %v4381
        %v4420 = vmul.f32 %v4340, %v4385
        %v4421 = vmul.f32 %v4341, %v4389
        %v4422 = vmul.f32 %v4342, %v4393
        %v4423 = vmul.f32 %v4343, %v4397
        %v4424 = vmul.f32 %v4344, %v4401
        %v4425 = vmul.f32 %v4345, %v4405
        %v4426 = vmul.f32 %v4346, %v4409
        %v4427 = vadd.f32 %v4283, %v4411
        %v4428 = vadd.f32 %v4284, %v4412
        %v4429 = vadd.f32 %v4285, %v4413
        %v4430 = vadd.f32 %v4286, %v4414
        %v4431 = vadd.f32 %v4287, %v4415
        %v4432 = vadd.f32 %v4288, %v4416
        %v4433 = vadd.f32 %v4289, %v4417
        %v4434 = vadd.f32 %v4290, %v4418
        %v4435 = vadd.f32 %v4291, %v4419
        %v4436 = vadd.f32 %v4292, %v4420
        %v4437 = vadd.f32 %v4293, %v4421
        %v4438 = vadd.f32 %v4294, %v4422
        %v4439 = vadd.f32 %v4295, %v4423
        %v4440 = vadd.f32 %v4296, %v4424
        %v4441 = vadd.f32 %v4297, %v4425
        %v4442 = vadd.f32 %v4298, %v4426
        %4443 = vrot.lane.b32.xlu0 %v3851, 126
        %v4444 = vpop.permute.xlu0 %4443
        %4445 = vrot.lane.b32.xlu0 %v3852, 126
        %v4446 = vpop.permute.xlu0 %4445
        %4447 = vrot.lane.b32.xlu0 %v3853, 126
        %v4448 = vpop.permute.xlu0 %4447
        %4449 = vrot.lane.b32.xlu0 %v3854, 126
        %v4450 = vpop.permute.xlu0 %4449
        %4451 = vrot.lane.b32.xlu0 %v3855, 126
        %v4452 = vpop.permute.xlu0 %4451
        %4453 = vrot.lane.b32.xlu0 %v3856, 126
        %v4454 = vpop.permute.xlu0 %4453
        %4455 = vrot.lane.b32.xlu0 %v3857, 126
        %v4456 = vpop.permute.xlu0 %4455
        %4457 = vrot.lane.b32.xlu0 %v3858, 126
        %v4458 = vpop.permute.xlu0 %4457
        %4459 = vrot.lane.b32.xlu0 %v3859, 126
        %v4460 = vpop.permute.xlu0 %4459
        %4461 = vrot.lane.b32.xlu0 %v3860, 126
        %v4462 = vpop.permute.xlu0 %4461
        %4463 = vrot.lane.b32.xlu0 %v3861, 126
        %v4464 = vpop.permute.xlu0 %4463
        %4465 = vrot.lane.b32.xlu0 %v3862, 126
        %v4466 = vpop.permute.xlu0 %4465
        %4467 = vrot.lane.b32.xlu0 %v3863, 126
        %v4468 = vpop.permute.xlu0 %4467
        %4469 = vrot.lane.b32.xlu0 %v3864, 126
        %v4470 = vpop.permute.xlu0 %4469
        %4471 = vrot.lane.b32.xlu0 %v3865, 126
        %v4472 = vpop.permute.xlu0 %4471
        %4473 = vrot.lane.b32.xlu0 %v3866, 126
        %v4474 = vpop.permute.xlu0 %4473
        %v4475 = vmul.f32 %v4444, %v2320
        %v4476 = vmul.f32 %v4446, %v2320
        %v4477 = vmul.f32 %v4448, %v2320
        %v4478 = vmul.f32 %v4450, %v2320
        %v4479 = vmul.f32 %v4452, %v2320
        %v4480 = vmul.f32 %v4454, %v2320
        %v4481 = vmul.f32 %v4456, %v2320
        %v4482 = vmul.f32 %v4458, %v2320
        %v4483 = vmul.f32 %v4460, %v2320
        %v4484 = vmul.f32 %v4462, %v2320
        %v4485 = vmul.f32 %v4464, %v2320
        %v4486 = vmul.f32 %v4466, %v2320
        %v4487 = vmul.f32 %v4468, %v2320
        %v4488 = vmul.f32 %v4470, %v2320
        %v4489 = vmul.f32 %v4472, %v2320
        %v4490 = vmul.f32 %v4474, %v2320
        %4491 = vset.pattern.permute.xlu0 4
        %4492 = vperm.xlu0 %4491, %v3867
        %v4493 = vpop.permute.xlu0 %4492
        %4495 = vset.pattern.permute.xlu0 4
        %4496 = vperm.xlu0 %4495, %v3868
        %v4497 = vpop.permute.xlu0 %4496
        %4499 = vset.pattern.permute.xlu0 4
        %4500 = vperm.xlu0 %4499, %v3869
        %v4501 = vpop.permute.xlu0 %4500
        %4503 = vset.pattern.permute.xlu0 4
        %4504 = vperm.xlu0 %4503, %v3870
        %v4505 = vpop.permute.xlu0 %4504
        %4507 = vset.pattern.permute.xlu0 4
        %4508 = vperm.xlu0 %4507, %v3871
        %v4509 = vpop.permute.xlu0 %4508
        %4511 = vset.pattern.permute.xlu0 4
        %4512 = vperm.xlu0 %4511, %v3872
        %v4513 = vpop.permute.xlu0 %4512
        %4515 = vset.pattern.permute.xlu0 4
        %4516 = vperm.xlu0 %4515, %v3873
        %v4517 = vpop.permute.xlu0 %4516
        %4519 = vset.pattern.permute.xlu0 4
        %4520 = vperm.xlu0 %4519, %v3874
        %v4521 = vpop.permute.xlu0 %4520
        %4523 = vset.pattern.permute.xlu0 4
        %4524 = vperm.xlu0 %4523, %v3875
        %v4525 = vpop.permute.xlu0 %4524
        %4527 = vset.pattern.permute.xlu0 4
        %4528 = vperm.xlu0 %4527, %v3876
        %v4529 = vpop.permute.xlu0 %4528
        %4531 = vset.pattern.permute.xlu0 4
        %4532 = vperm.xlu0 %4531, %v3877
        %v4533 = vpop.permute.xlu0 %4532
        %4535 = vset.pattern.permute.xlu0 4
        %4536 = vperm.xlu0 %4535, %v3878
        %v4537 = vpop.permute.xlu0 %4536
        %4539 = vset.pattern.permute.xlu0 4
        %4540 = vperm.xlu0 %4539, %v3879
        %v4541 = vpop.permute.xlu0 %4540
        %4543 = vset.pattern.permute.xlu0 4
        %4544 = vperm.xlu0 %4543, %v3880
        %v4545 = vpop.permute.xlu0 %4544
        %4547 = vset.pattern.permute.xlu0 4
        %4548 = vperm.xlu0 %4547, %v3881
        %v4549 = vpop.permute.xlu0 %4548
        %4551 = vset.pattern.permute.xlu0 4
        %4552 = vperm.xlu0 %4551, %v3882
        %v4553 = vpop.permute.xlu0 %4552
        %v4555 = vmul.f32 %v4475, %v4493
        %v4556 = vmul.f32 %v4476, %v4497
        %v4557 = vmul.f32 %v4477, %v4501
        %v4558 = vmul.f32 %v4478, %v4505
        %v4559 = vmul.f32 %v4479, %v4509
        %v4560 = vmul.f32 %v4480, %v4513
        %v4561 = vmul.f32 %v4481, %v4517
        %v4562 = vmul.f32 %v4482, %v4521
        %v4563 = vmul.f32 %v4483, %v4525
        %v4564 = vmul.f32 %v4484, %v4529
        %v4565 = vmul.f32 %v4485, %v4533
        %v4566 = vmul.f32 %v4486, %v4537
        %v4567 = vmul.f32 %v4487, %v4541
        %v4568 = vmul.f32 %v4488, %v4545
        %v4569 = vmul.f32 %v4489, %v4549
        %v4570 = vmul.f32 %v4490, %v4553
        %v4571 = vadd.f32 %v4427, %v4555
        %v4572 = vadd.f32 %v4428, %v4556
        %v4573 = vadd.f32 %v4429, %v4557
        %v4574 = vadd.f32 %v4430, %v4558
        %v4575 = vadd.f32 %v4431, %v4559
        %v4576 = vadd.f32 %v4432, %v4560
        %v4577 = vadd.f32 %v4433, %v4561
        %v4578 = vadd.f32 %v4434, %v4562
        %v4579 = vadd.f32 %v4435, %v4563
        %v4580 = vadd.f32 %v4436, %v4564
        %v4581 = vadd.f32 %v4437, %v4565
        %v4582 = vadd.f32 %v4438, %v4566
        %v4583 = vadd.f32 %v4439, %v4567
        %v4584 = vadd.f32 %v4440, %v4568
        %v4585 = vadd.f32 %v4441, %v4569
        %v4586 = vadd.f32 %v4442, %v4570
        %4588 = vset.pattern.permute.xlu0 0
        %4589 = vperm.xlu0 %4588, %v3883
        %v4590 = vpop.permute.xlu0 %4589
        %4593 = vset.pattern.permute.xlu0 0
        %4594 = vperm.xlu0 %4593, %v3884
        %v4595 = vpop.permute.xlu0 %4594
        %4598 = vset.pattern.permute.xlu0 0
        %4599 = vperm.xlu0 %4598, %v3885
        %v4600 = vpop.permute.xlu0 %4599
        %4603 = vset.pattern.permute.xlu0 0
        %4604 = vperm.xlu0 %4603, %v3886
        %v4605 = vpop.permute.xlu0 %4604
        %4608 = vset.pattern.permute.xlu0 0
        %4609 = vperm.xlu0 %4608, %v3887
        %v4610 = vpop.permute.xlu0 %4609
        %4613 = vset.pattern.permute.xlu0 0
        %4614 = vperm.xlu0 %4613, %v3888
        %v4615 = vpop.permute.xlu0 %4614
        %4618 = vset.pattern.permute.xlu0 0
        %4619 = vperm.xlu0 %4618, %v3889
        %v4620 = vpop.permute.xlu0 %4619
        %4623 = vset.pattern.permute.xlu0 0
        %4624 = vperm.xlu0 %4623, %v3890
        %v4625 = vpop.permute.xlu0 %4624
        %4628 = vset.pattern.permute.xlu0 0
        %4629 = vperm.xlu0 %4628, %v3891
        %v4630 = vpop.permute.xlu0 %4629
        %4633 = vset.pattern.permute.xlu0 0
        %4634 = vperm.xlu0 %4633, %v3892
        %v4635 = vpop.permute.xlu0 %4634
        %4638 = vset.pattern.permute.xlu0 0
        %4639 = vperm.xlu0 %4638, %v3893
        %v4640 = vpop.permute.xlu0 %4639
        %4643 = vset.pattern.permute.xlu0 0
        %4644 = vperm.xlu0 %4643, %v3894
        %v4645 = vpop.permute.xlu0 %4644
        %4648 = vset.pattern.permute.xlu0 0
        %4649 = vperm.xlu0 %4648, %v3895
        %v4650 = vpop.permute.xlu0 %4649
        %4653 = vset.pattern.permute.xlu0 0
        %4654 = vperm.xlu0 %4653, %v3896
        %v4655 = vpop.permute.xlu0 %4654
        %4658 = vset.pattern.permute.xlu0 0
        %4659 = vperm.xlu0 %4658, %v3897
        %v4660 = vpop.permute.xlu0 %4659
        %4663 = vset.pattern.permute.xlu0 0
        %4664 = vperm.xlu0 %4663, %v3898
        %v4665 = vpop.permute.xlu0 %4664
        %v4667 = vadd.f32 %v4571, %v4590
        %v4668 = vadd.f32 %v4572, %v4595
        %v4669 = vadd.f32 %v4573, %v4600
        %v4670 = vadd.f32 %v4574, %v4605
        %v4671 = vadd.f32 %v4575, %v4610
        %v4672 = vadd.f32 %v4576, %v4615
        %v4673 = vadd.f32 %v4577, %v4620
        %v4674 = vadd.f32 %v4578, %v4625
        %v4675 = vadd.f32 %v4579, %v4630
        %v4676 = vadd.f32 %v4580, %v4635
        %v4677 = vadd.f32 %v4581, %v4640
        %v4678 = vadd.f32 %v4582, %v4645
        %v4679 = vadd.f32 %v4583, %v4650
        %v4680 = vadd.f32 %v4584, %v4655
        %v4681 = vadd.f32 %v4585, %v4660
        %v4682 = vadd.f32 %v4586, %v4665
        %v4683 = vld [vmem:[#allocation43] sm:$0xff]
        %v4684 = vld [vmem:[#allocation43 + $0x8] sm:$0xff]
        %v4685 = vld [vmem:[#allocation43 + $0x10] sm:$0xff]
        %v4686 = vld [vmem:[#allocation43 + $0x18] sm:$0xff]
        %v4687 = vld [vmem:[#allocation44] sm:$0xff]
        %v4688 = vld [vmem:[#allocation44 + $0x8] sm:$0xff]
        %v4689 = vld [vmem:[#allocation44 + $0x10] sm:$0xff]
        %v4690 = vld [vmem:[#allocation44 + $0x18] sm:$0xff]
        %4692 = vset.pattern.permute.xlu0 0
        %4693 = vperm.xlu0 %4692, %v4687
        %v4694 = vpop.permute.xlu0 %4693
        %4697 = vset.pattern.permute.xlu0 0
        %4698 = vperm.xlu0 %4697, %v4688
        %v4699 = vpop.permute.xlu0 %4698
        %4702 = vset.pattern.permute.xlu0 0
        %4703 = vperm.xlu0 %4702, %v4689
        %v4704 = vpop.permute.xlu0 %4703
        %4707 = vset.pattern.permute.xlu0 0
        %4708 = vperm.xlu0 %4707, %v4690
        %v4709 = vpop.permute.xlu0 %4708
        %4711 = vmatprep.subr.mxu0 0.0
        %4712 = vmatpush1.msra.mxu0 %v4667
        %4713 = vmatprep.subr.mxu0 0.0
        %4714 = vmatpush1.msra.mxu0 %v4668
        %4715 = vmatprep.subr.mxu0 0.0
        %4716 = vmatpush1.msra.mxu0 %v4669
        %4717 = vmatprep.subr.mxu0 0.0
        %4718 = vmatpush1.msra.mxu0 %v4670
        %4719 = vmatprep.subr.mxu0 0.0
        %4720 = vmatpush1.msra.mxu0 %v4671
        %4721 = vmatprep.subr.mxu0 0.0
        %4722 = vmatpush1.msra.mxu0 %v4672
        %4723 = vmatprep.subr.mxu0 0.0
        %4724 = vmatpush1.msra.mxu0 %v4673
        %4725 = vmatprep.subr.mxu0 0.0
        %4726 = vmatpush1.msra.mxu0 %v4674
        %4727 = vmatprep.subr.mxu0 0.0
        %4728 = vmatpush1.msra.mxu0 %v4675
        %4729 = vmatprep.subr.mxu0 0.0
        %4730 = vmatpush1.msra.mxu0 %v4676
        %4731 = vmatprep.subr.mxu0 0.0
        %4732 = vmatpush1.msra.mxu0 %v4677
        %4733 = vmatprep.subr.mxu0 0.0
        %4734 = vmatpush1.msra.mxu0 %v4678
        %4735 = vmatprep.subr.mxu0 0.0
        %4736 = vmatpush1.msra.mxu0 %v4679
        %4737 = vmatprep.subr.mxu0 0.0
        %4738 = vmatpush1.msra.mxu0 %v4680
        %4739 = vmatprep.subr.mxu0 0.0
        %4740 = vmatpush1.msra.mxu0 %v4681
        %4741 = vmatprep.subr.mxu0 0.0
        %4742 = vmatpush1.msra.mxu0 %v4682
        %4743 = vmatprep.subr.mxu0 0.0
        %4744 = vmatpush1.msra.mxu0 0.0
        %4745 = vmatprep.subr.mxu0 0.0
        %4746 = vmatpush1.msra.mxu0 0.0
        %4747 = vmatprep.subr.mxu0 0.0
        %4748 = vmatpush1.msra.mxu0 0.0
        %4749 = vmatprep.subr.mxu0 0.0
        %4750 = vmatpush1.msra.mxu0 0.0
        %4751 = vmatprep.subr.mxu0 0.0
        %4752 = vmatpush1.msra.mxu0 0.0
        %4753 = vmatprep.subr.mxu0 0.0
        %4754 = vmatpush1.msra.mxu0 0.0
        %4755 = vmatprep.subr.mxu0 0.0
        %4756 = vmatpush1.msra.mxu0 0.0
        %4757 = vmatprep.subr.mxu0 0.0
        %4758 = vmatpush1.msra.mxu0 0.0
        %4759 = vmatprep.subr.mxu0 0.0
        %4760 = vmatpush1.msra.mxu0 0.0
        %4761 = vmatprep.subr.mxu0 0.0
        %4762 = vmatpush1.msra.mxu0 0.0
        %4763 = vmatprep.subr.mxu0 0.0
        %4764 = vmatpush1.msra.mxu0 0.0
        %4765 = vmatprep.subr.mxu0 0.0
        %4766 = vmatpush1.msra.mxu0 0.0
        %4767 = vmatprep.subr.mxu0 0.0
        %4768 = vmatpush1.msra.mxu0 0.0
        %4769 = vmatprep.subr.mxu0 0.0
        %4770 = vmatpush1.msra.mxu0 0.0
        %4771 = vmatprep.subr.mxu0 0.0
        %4772 = vmatpush1.msra.mxu0 0.0
        %4773 = vmatprep.subr.mxu0 0.0
        %4774 = vmatpush1.msra.mxu0 0.0
        %4775 = vmatprep.mubr.f32.mxu0 0.0
        %4776 = vmatmul.mubr.f32.gmra.mrb[0].mxu0 %v4683
        %v4777 = vpop.f32.mrb[0].mxu0
        %v4778 = vadd.f32 %v4694, %v4777
        %v4779 = vpop.f32.mrb[0].mxu0
        %4780 = vmatprep.mubr.f32.mxu0 0.0
        %4781 = vmatmul.mubr.f32.gmra.mrb[0].mxu0 %v4684
        %v4782 = vpop.f32.mrb[0].mxu0
        %v4783 = vadd.f32 %v4699, %v4782
        %v4784 = vpop.f32.mrb[0].mxu0
        %4785 = vmatprep.mubr.f32.mxu0 0.0
        %4786 = vmatmul.mubr.f32.gmra.mrb[0].mxu0 %v4685
        %v4787 = vpop.f32.mrb[0].mxu0
        %v4788 = vadd.f32 %v4704, %v4787
        %v4789 = vpop.f32.mrb[0].mxu0
        %4790 = vmatprep.mubr.f32.mxu0 0.0
        %4791 = vmatmul.mubr.f32.gmra.mrb[0].mxu0 %v4686
        %v4792 = vpop.f32.mrb[0].mxu0
        %v4793 = vadd.f32 %v4709, %v4792
        %v4794 = vpop.f32.mrb[0].mxu0
        %4795 = vdwg.mxu0
        %v4796 = vadd.f32 %v3128, %v4778
        %v4797 = vadd.f32 %v3129, %v4783
        %v4798 = vadd.f32 %v3130, %v4788
        %v4799 = vadd.f32 %v3131, %v4793
        %4800 = vst [vmem:[%s1274] sm:$0xff] %v4796
        %4801 = vst [vmem:[%s1274 + $0x8] sm:$0xff] %v4797
        %4802 = vst [vmem:[%s1274 + $0x10] sm:$0xff] %v4798
        %4803 = vst [vmem:[%s1274 + $0x18] sm:$0xff] %v4799
        %s4804 = sand.u32 %s667, 1
        %s4805 = scalar_lea.sflag [#allocation4], %s4804
        %s4806 = sand.u32 %s667, 1
        %s4807 = smul.addr %s4806, 32
        %s4808 = scalar_lea.vmem [#allocation46], %s4807
        // Predicated region
        $region245: #{tpu_custom_call.1} parent=131 // pred_check
          %p4809 = pneg %p677
        $region246: #{tpu_custom_call.1} parent=131 // pred_check_branch
          %4811 = sbr.rel (%p4809) target = $region248
        $region247: #{tpu_custom_call.1} parent=131 // pred_region
          %s4813 = ssub.s32 512, 512
          %4814 = vsyncadd %s4805, %s4813
          %s4815 = smul.addr %s61, 4
          %s4816 = smul.addr %s4815, 128
          %s4817 = scalar_lea.hbm %s28, %s4816
          %s4818 = sshll.u32 %s4808, 4
          %s4819 = int_to_ptr.vmem [resolvable:$true] %s4818
          %4824 = dma.vmem_to_hbm [thread:$0]  %s4819, 512, %s4817, %s4805, 128, 128, 8
        $region248: #{tpu_custom_call.1} parent=131 // pred_fallthru
          _
      $region132: #{tpu_custom_call.1} parent=5 // pred_fallthru
        _
      %p4825 = scmp.le.s32.totalorder 2, %s56
      // Predicated region
      $region249: #{tpu_custom_call.1} parent=5 // pred_check
        %p4826 = pneg %p4825
      $region250: #{tpu_custom_call.1} parent=5 // pred_check_branch
        %4828 = sbr.rel (%p4826) target = $region252
      $region251: #{tpu_custom_call.1} parent=5 // pred_region
        %s4829 = ssub.s32 %s56, 2
        // Predicated region
        $region253: #{tpu_custom_call.1} parent=251 // pred_check
          %p4830 = pneg %p683
        $region254: #{tpu_custom_call.1} parent=251 // pred_check_branch
          %4832 = sbr.rel (%p4830) target = $region256
        $region255: #{tpu_custom_call.1} parent=251 // pred_region
          %s4833 = sand.u32 %s668, 1
          %s4834 = scalar_lea.sflag [#allocation4], %s4833
          %s4835 = sand.u32 %s668, 1
          %s4836 = smul.addr %s4835, 32
          %s4837 = scalar_lea.vmem [#allocation46], %s4836
          %4838 = dma.done %s4834, 512
        $region256: #{tpu_custom_call.1} parent=251 // pred_fallthru
          _
      $region252: #{tpu_custom_call.1} parent=5 // pred_fallthru
        _
    $region6: #{tpu_custom_call.1} parent=1 // loop_footer
      %s60 = sadd.s32 1, %s56
    $region7: #{tpu_custom_call.1} parent=1 // loop_footer_branch
      %55 = sbr.rel target = $region3
    $region8: #{tpu_custom_call.1} parent=1 // loop_exit
      _
    %4839 = vsyncpa [#allocation3], 1
    %s4840 = scalar_lea.sflag [#allocation3], 1
    %4841 = vsyncpa %s4840, 1
    %4842 = vsyncpa [#allocation6], 1
    %s4843 = scalar_lea.sflag [#allocation6], 1
    %4844 = vsyncpa %s4843, 1
    %4845 = vsyncpa [#allocation9], 1
    %4846 = vsyncpa [#allocation12], 1
    %4847 = vsyncpa [#allocation15], 1
    %4848 = vsyncpa [#allocation18], 1
    %4849 = vsyncpa [#allocation21], 1
    %4850 = vsyncpa [#allocation24], 1
    %4851 = vsyncpa [#allocation27], 1
    %4852 = vsyncpa [#allocation30], 1
    %4853 = vsyncpa [#allocation33], 1
    %4854 = vsyncpa [#allocation36], 1
    %4855 = vsyncpa [#allocation39], 1
    %4856 = vsyncpa [#allocation42], 1
    %4857 = vsyncpa [#allocation45], 1
    %4858 = vsyncpa [#allocation4], 1
    %s4859 = scalar_lea.sflag [#allocation4], 1
    %4860 = vsyncpa %s4859, 1

</llo_original>
